<compile_context>
chip_gen: v6e
topology: v6e:2x2x1
jax: 0.10.0
libtpu: 0.0.40
codegen_flags: <defaults>
</compile_context>

<pallas_src>
import functools

import jax
import jax.numpy as jnp
from jax.experimental import pallas as pl
from jax.experimental.pallas import tpu as pltpu


def _talking_head_kernel(
    # VMEM inputs
    xq_ref,        # (1, tq, C) bf16  query-row tile of x
    xf_ref,        # (1, N,  C) bf16  full x rows (K / V source)
    wq_ref,        # (C, C)  bf16
    bq_ref,        # (1, C)  f32
    wk_ref,        # (C, C)  bf16
    bk_ref,        # (1, C)  f32
    wv_ref,        # (C, C)  bf16
    bv_ref,        # (1, C)  f32
    wpre_ref,      # (H, 1, C) f32   scale * w_pre expanded over head_dim
    wpost_ref,     # (H, 1, C) f32   w_post^T expanded over head_dim
    bpost_ref,     # (1, C)  f32     b_post expanded over head_dim
    wproj_ref,     # (C, C)  bf16
    bproj_ref,     # (1, C)  f32
    # output
    o_ref,         # (1, tq, C)
    # scratch (persist across grid steps)
    k_scr,         # (N, C)  bf16
    v_scr,         # (N, C)  bf16
    vcol_scr,      # (1, C)  f32
    acc_ref,       # (tq, C) f32
    *,
    num_heads: int,
):
    f32, bf16 = jnp.float32, jnp.bfloat16

    # ---- K/V projection: once per batch element (query-tile axis == 0) ----
    @pl.when(pl.program_id(1) == 0)
    def _():
        xf = xf_ref[0]                                               # (N, C) bf16
        k = jnp.dot(xf, wk_ref[...], preferred_element_type=f32) + bk_ref[...]
        v = jnp.dot(xf, wv_ref[...], preferred_element_type=f32) + bv_ref[...]
        k_scr[...] = k.astype(bf16)
        vcol_scr[...] = jnp.sum(v, axis=0, keepdims=True)            # f32 colsum
        v_scr[...] = v.astype(bf16)

    # ---- Q projection for this query-row tile ----
    xq = xq_ref[0]                                                   # (tq, C) bf16
    q = jnp.dot(xq, wq_ref[...], preferred_element_type=f32) + bq_ref[...]

    k_bf = k_scr[...]                                                # (N, C) bf16
    v_bf = v_scr[...]                                                # (N, C) bf16

    def head_contrib(h):
        # pre-softmax talking-head mix (and 1/sqrt(D)) folded into Q columns.
        # (b_pre dropped: a uniform shift over the softmax axis is a no-op.)
        q_h = (q * wpre_ref[h]).astype(bf16)                         # (tq, C)
        s = jax.lax.dot_general(                                     # Q @ K^T, K=C
            q_h, k_bf, (((1,), (1,)), ((), ())),
            preferred_element_type=f32)                              # (tq, N) f32
        m = jnp.max(s, axis=-1, keepdims=True)
        e = jnp.exp(s - m)                                           # in [0, 1]
        r = pl.reciprocal(jnp.sum(e, axis=-1, keepdims=True), approx=True)
        pv = jnp.dot(e.astype(bf16), v_bf, preferred_element_type=f32)  # (tq, C)
        # softmax normalization + post-mix column scale deferred to (tq, C)
        return pv * (r * wpost_ref[h])

    # head 0 initializes the accumulator (no separate zero-fill pass)
    acc_ref[...] = head_contrib(0)

    def body(h, carry):
        acc_ref[...] += head_contrib(h)
        return carry

    jax.lax.fori_loop(1, num_heads, body, None, unroll=True)

    # post-mix bias term: b_post[c // D] * colsum(v[:, c]), broadcast over rows
    ctx = acc_ref[...] + bpost_ref[...] * vcol_scr[...]              # (tq, C) f32
    # single fused output projection (K = C)
    y = jnp.dot(ctx.astype(bf16), wproj_ref[...],
                preferred_element_type=f32) + bproj_ref[...]
    o_ref[0] = y.astype(o_ref.dtype)


def talking_head_attention(x, params, *, num_heads, q_tile=None):
    B, N, C = x.shape
    H = num_heads
    D = C // H
    scale = D ** (-0.5)
    f32, bf16 = jnp.float32, jnp.bfloat16

    # ---- generation-aware VMEM limit / default query tile ----
    try:
        info = pltpu.get_tpu_info()
        vmem_cap = int(getattr(info, "vmem_capacity_bytes", 128 * 1024 * 1024))
    except Exception:  # non-TPU / unknown chip: assume 128 MiB
        vmem_cap = 128 * 1024 * 1024
    vmem_limit = min((vmem_cap * 3) // 4, 100 * 1024 * 1024)   # ~48MiB v7x, 96MiB v5e/v6e
    if q_tile is None:
        q_tile = 128 if vmem_cap <= 64 * 1024 * 1024 else 256

    # Largest query-row tile <= q_tile that divides N (fallback: whole N).
    tq = N
    for cand in sorted({512, 256, 128, 64, 32, 16, 8, q_tile}, reverse=True):
        if cand <= q_tile and cand <= N and N % cand == 0:
            tq = cand
            break
    num_qt = N // tq

    # ---- weight preprocessing (done once, outside the kernel) ----
    wqkv_t = params["wqkv_t"].astype(f32)
    bqkv = params["bqkv"].astype(f32).reshape(1, 3 * C)
    wq_t = wqkv_t[:, :C].astype(bf16)
    wk_t = wqkv_t[:, C:2 * C].astype(bf16)
    wv_t = wqkv_t[:, 2 * C:].astype(bf16)
    bq = bqkv[:, :C]
    bk = bqkv[:, C:2 * C]
    bv = bqkv[:, 2 * C:]
    wproj_t = params["wproj_t"].astype(bf16)
    bproj = params["bproj"].astype(f32).reshape(1, C)

    # Fold scale + pre-softmax head mix into per-column Q scales:
    #   w_pre_exp[g, 0, c] = scale * w_pre[g, c // D]
    w_pre_exp = (scale * jnp.repeat(params["w_pre"].astype(f32), D, axis=1)
                 )[:, None, :]                                        # (H, 1, C)
    # Fold post-softmax head mix into per-column output scales:
    #   w_post_exp[g, 0, c] = w_post[c // D, g]
    w_post_exp = jnp.repeat(params["w_post"].astype(f32).T, D,
                            axis=1)[:, None, :]                       # (H, 1, C)
    b_post_exp = jnp.repeat(params["b_post"].astype(f32), D)[None, :]  # (1, C)

    x_bf = x.astype(bf16)   # halve the K/V (and Q-tile) DMA; kernel uses bf16 MXU anyway

    kernel = functools.partial(_talking_head_kernel, num_heads=H)

    def build_call(single_buffer_consts):
        def const_spec(shape):
            zeros = (0,) * len(shape)

            def idx(b, t):
                return zeros

            if single_buffer_consts:
                # Constant blocks: second pipeline buffer is dead VMEM.
                return pl.BlockSpec(shape, idx, pipeline_mode=pl.Buffered(1))
            return pl.BlockSpec(shape, idx)

        return pl.pallas_call(
            kernel,
            out_shape=jax.ShapeDtypeStruct((B, N, C), x.dtype),
            grid=(B, num_qt),
            in_specs=[
                pl.BlockSpec((1, tq, C), lambda b, t: (b, t, 0)),    # x (Q rows, bf16)
                pl.BlockSpec((1, N, C), lambda b, t: (b, 0, 0)),     # x (K/V rows, bf16)
                const_spec((C, C)),                                  # wq_t
                const_spec((1, C)),                                  # bq
                const_spec((C, C)),                                  # wk_t
                const_spec((1, C)),                                  # bk
                const_spec((C, C)),                                  # wv_t
                const_spec((1, C)),                                  # bv
                const_spec((H, 1, C)),                               # w_pre_exp
                const_spec((H, 1, C)),                               # w_post_exp
                const_spec((1, C)),                                  # b_post_exp
                const_spec((C, C)),                                  # wproj_t
                const_spec((1, C)),                                  # bproj
            ],
            out_specs=pl.BlockSpec((1, tq, C), lambda b, t: (b, t, 0)),
            scratch_shapes=[
                pltpu.VMEM((N, C), jnp.bfloat16),    # cached K
                pltpu.VMEM((N, C), jnp.bfloat16),    # cached V
                pltpu.VMEM((1, C), jnp.float32),     # cached V column-sum
                pltpu.VMEM((tq, C), jnp.float32),    # per-tile accumulator
            ],
            compiler_params=pltpu.CompilerParams(
                # B stays "parallel" (megacore on v7x); query-tile axis must be
                # "arbitrary" because the K/V scratch is carried across it.
                dimension_semantics=("parallel", "arbitrary"),
                vmem_limit_bytes=int(vmem_limit)),
        )

    args = (x_bf, x_bf, wq_t, bq, wk_t, bk, wv_t, bv,
            w_pre_exp, w_post_exp, b_post_exp, wproj_t, bproj)
    try:
        return build_call(True)(*args)
    except Exception:
        # Fallback if this JAX build rejects single-buffered constant blocks.
        return build_call(False)(*args)


def reference(x, params, *, num_heads):
    """Pure-JAX mirror of the PyTorch forward (for validation)."""
    B, N, C = x.shape
    D = C // num_heads
    scale = D ** -0.5
    qkv = x @ params["wqkv_t"] + params["bqkv"]                  # (B, N, 3C)
    qkv = qkv.reshape(B, N, 3, num_heads, D).transpose(2, 0, 3, 1, 4)
    q, k, v = qkv[0], qkv[1], qkv[2]                             # (B, H, N, D)
    attn = jnp.einsum("bhnd,bhmd->bhnm", q * scale, k)
    attn = (jnp.einsum("bhnm,gh->bgnm", attn, params["w_pre"])
            + params["b_pre"][None, :, None, None])
    attn = jax.nn.softmax(attn, axis=-1)
    attn = (jnp.einsum("bhnm,gh->bgnm", attn, params["w_post"])
            + params["b_post"][None, :, None, None])
    out = jnp.einsum("bhnm,bhmd->bhnd", attn, v)
    out = out.transpose(0, 2, 1, 3).reshape(B, N, C)
    return out @ params["wproj_t"] + params["bproj"]


def make_params(key, channels, num_heads):
    ks = jax.random.split(key, 8)
    C, H = channels, num_heads
    f32 = jnp.float32
    return {
        # nn.Linear(C, 3C): weight (3C, C) -> store transposed (C, 3C)
        "wqkv_t": (jax.random.normal(ks[0], (C, 3 * C)) * 0.05).astype(f32),
        "bqkv":   (jax.random.normal(ks[1], (1, 3 * C)) * 0.02).astype(f32),
        # nn.Linear(C, C)
        "wproj_t": (jax.random.normal(ks[2], (C, C)) * 0.05).astype(f32),
        "bproj":   (jax.random.normal(ks[3], (1, C)) * 0.02).astype(f32),
        # nn.Linear(H, H) talking-head mixers (PyTorch layout: [out, in])
        "w_pre":  (jax.random.normal(ks[4], (H, H)) * 0.1).astype(f32),
        "b_pre":  (jax.random.normal(ks[5], (H,)) * 0.02).astype(f32),
        "w_post": (jax.random.normal(ks[6], (H, H)) * 0.1).astype(f32),
        "b_post": (jax.random.normal(ks[7], (H,)) * 0.02).astype(f32),
    }


if __name__ == "__main__":
    B, N, C = 2, 32, 64
    num_heads = 8  # head_dim = 8

    key = jax.random.PRNGKey(0)
    kx, kp = jax.random.split(key)
    x = jax.random.normal(kx, (B, N, C), dtype=jnp.float32)
    params = make_params(kp, C, num_heads)

    # q_tile=16 -> grid (B, 2): exercises both the t==0 KV-projection path and
    # the t>0 cached-KV path.
    out = talking_head_attention(x, params, num_heads=num_heads, q_tile=16)
    out = jax.block_until_ready(out)

    ref = jax.block_until_ready(reference(x, params, num_heads=num_heads))
    assert out.shape == (B, N, C)
    max_err = float(jnp.max(jnp.abs(out - ref)))
    assert bool(jnp.allclose(out, ref, atol=2e-2, rtol=2e-2)), (
        f"mismatch vs reference: max abs diff = {max_err}")

    print("KERNEL_OK")
</pallas_src>

<mosaic_0001>
module attributes {stable_mosaic.version = 11 : i64} {
  func.func @_talking_head_kernel(%arg0: i32, %arg1: i32, %arg2: memref<1x16x64xbf16, #tpu.memory_space<vmem>>, %arg3: memref<1x32x64xbf16, #tpu.memory_space<vmem>>, %arg4: memref<64x64xbf16, #tpu.memory_space<vmem>>, %arg5: memref<1x64xf32, #tpu.memory_space<vmem>>, %arg6: memref<64x64xbf16, #tpu.memory_space<vmem>>, %arg7: memref<1x64xf32, #tpu.memory_space<vmem>>, %arg8: memref<64x64xbf16, #tpu.memory_space<vmem>>, %arg9: memref<1x64xf32, #tpu.memory_space<vmem>>, %arg10: memref<8x1x64xf32, #tpu.memory_space<vmem>>, %arg11: memref<8x1x64xf32, #tpu.memory_space<vmem>>, %arg12: memref<1x64xf32, #tpu.memory_space<vmem>>, %arg13: memref<64x64xbf16, #tpu.memory_space<vmem>>, %arg14: memref<1x64xf32, #tpu.memory_space<vmem>>, %arg15: memref<1x16x64xf32, #tpu.memory_space<vmem>>, %arg16: memref<32x64xbf16, #tpu.memory_space<vmem>>, %arg17: memref<32x64xbf16, #tpu.memory_space<vmem>>, %arg18: memref<1x64xf32, #tpu.memory_space<vmem>>, %arg19: memref<16x64xf32, #tpu.memory_space<vmem>>) attributes {dimension_semantics = [#tpu.dimension_semantics<parallel>, #tpu.dimension_semantics<arbitrary>], iteration_bounds = array<i64: 2, 2>, scalar_prefetch = 0 : i64, scratch_operands = 4 : i64, tpu.core_type = #tpu.core_type<tc>, window_params = [{transform_indices = @transform_0, window_bounds = array<i64: 1, 16, 64>}, {transform_indices = @transform_1, window_bounds = array<i64: 1, 32, 64>}, {pipeline_mode = #tpu.pipeline_mode<synchronous>, transform_indices = @transform_2, window_bounds = array<i64: 64, 64>}, {pipeline_mode = #tpu.pipeline_mode<synchronous>, transform_indices = @transform_3, window_bounds = array<i64: 1, 64>}, {pipeline_mode = #tpu.pipeline_mode<synchronous>, transform_indices = @transform_4, window_bounds = array<i64: 64, 64>}, {pipeline_mode = #tpu.pipeline_mode<synchronous>, transform_indices = @transform_5, window_bounds = array<i64: 1, 64>}, {pipeline_mode = #tpu.pipeline_mode<synchronous>, transform_indices = @transform_6, window_bounds = array<i64: 64, 64>}, {pipeline_mode = #tpu.pipeline_mode<synchronous>, transform_indices = @transform_7, window_bounds = array<i64: 1, 64>}, {pipeline_mode = #tpu.pipeline_mode<synchronous>, transform_indices = @transform_8, window_bounds = array<i64: 8, 1, 64>}, {pipeline_mode = #tpu.pipeline_mode<synchronous>, transform_indices = @transform_9, window_bounds = array<i64: 8, 1, 64>}, {pipeline_mode = #tpu.pipeline_mode<synchronous>, transform_indices = @transform_10, window_bounds = array<i64: 1, 64>}, {pipeline_mode = #tpu.pipeline_mode<synchronous>, transform_indices = @transform_11, window_bounds = array<i64: 64, 64>}, {pipeline_mode = #tpu.pipeline_mode<synchronous>, transform_indices = @transform_12, window_bounds = array<i64: 1, 64>}, {transform_indices = @transform_13, window_bounds = array<i64: 1, 16, 64>}]} {
    %c0_i32 = arith.constant 0 : i32
    %0 = arith.cmpi eq, %arg1, %c0_i32 : i32
    %1 = arith.extui %0 : i1 to i32
    %c0_i32_0 = arith.constant 0 : i32
    %2 = arith.cmpi ne, %1, %c0_i32_0 : i32
    scf.if %2 {
      %c0_122 = arith.constant 0 : index
      %c0_123 = arith.constant 0 : index
      %c0_124 = arith.constant 0 : index
      %239 = vector.load %arg3[%c0_122, %c0_123, %c0_124] : memref<1x32x64xbf16, #tpu.memory_space<vmem>>, vector<1x32x64xbf16>
      %240 = vector.shape_cast %239 : vector<1x32x64xbf16> to vector<32x64xbf16>
      %c0_125 = arith.constant 0 : index
      %c0_126 = arith.constant 0 : index
      %241 = vector.load %arg6[%c0_125, %c0_126] : memref<64x64xbf16, #tpu.memory_space<vmem>>, vector<64x64xbf16>
      %cst_127 = arith.constant dense<0.000000e+00> : vector<32x64xf32>
      %242 = tpu.matmul %240, %241, %cst_127 {dimension_numbers = #tpu.dot_dimension_numbers<[1], [0], [0], [1], [0, 0, 1, 1], [], []>} : vector<32x64xbf16>, vector<64x64xbf16>, vector<32x64xf32> -> vector<32x64xf32>
      %c0_128 = arith.constant 0 : index
      %c0_129 = arith.constant 0 : index
      %243 = vector.load %arg7[%c0_128, %c0_129] : memref<1x64xf32, #tpu.memory_space<vmem>>, vector<1x64xf32>
      %244 = vector.broadcast %243 : vector<1x64xf32> to vector<32x64xf32>
      %245 = arith.addf %242, %244 : vector<32x64xf32>
      %c0_130 = arith.constant 0 : index
      %c0_131 = arith.constant 0 : index
      %246 = vector.load %arg8[%c0_130, %c0_131] : memref<64x64xbf16, #tpu.memory_space<vmem>>, vector<64x64xbf16>
      %cst_132 = arith.constant dense<0.000000e+00> : vector<32x64xf32>
      %247 = tpu.matmul %240, %246, %cst_132 {dimension_numbers = #tpu.dot_dimension_numbers<[1], [0], [0], [1], [0, 0, 1, 1], [], []>} : vector<32x64xbf16>, vector<64x64xbf16>, vector<32x64xf32> -> vector<32x64xf32>
      %c0_133 = arith.constant 0 : index
      %c0_134 = arith.constant 0 : index
      %248 = vector.load %arg9[%c0_133, %c0_134] : memref<1x64xf32, #tpu.memory_space<vmem>>, vector<1x64xf32>
      %249 = vector.broadcast %248 : vector<1x64xf32> to vector<32x64xf32>
      %250 = arith.addf %247, %249 : vector<32x64xf32>
      %251 = arith.truncf %245 : vector<32x64xf32> to vector<32x64xbf16>
      %c0_135 = arith.constant 0 : index
      %c0_136 = arith.constant 0 : index
      %252 = vector.load %arg16[%c0_135, %c0_136] : memref<32x64xbf16, #tpu.memory_space<vmem>>, vector<32x64xbf16>
      tpu.vector_store %arg16[%c0_135, %c0_136], %251 {strides = array<i32>} : memref<32x64xbf16, #tpu.memory_space<vmem>>, vector<32x64xbf16>,
      %cst_137 = arith.constant dense<0.000000e+00> : vector<64xf32>
      %253 = vector.multi_reduction <add>, %250, %cst_137 [0] : vector<32x64xf32> to vector<64xf32>
      %254 = vector.shape_cast %253 : vector<64xf32> to vector<1x64xf32>
      %c0_138 = arith.constant 0 : index
      %c0_139 = arith.constant 0 : index
      %255 = vector.load %arg18[%c0_138, %c0_139] : memref<1x64xf32, #tpu.memory_space<vmem>>, vector<1x64xf32>
      tpu.vector_store %arg18[%c0_138, %c0_139], %254 {strides = array<i32>} : memref<1x64xf32, #tpu.memory_space<vmem>>, vector<1x64xf32>,
      %256 = arith.truncf %250 : vector<32x64xf32> to vector<32x64xbf16>
      %c0_140 = arith.constant 0 : index
      %c0_141 = arith.constant 0 : index
      %257 = vector.load %arg17[%c0_140, %c0_141] : memref<32x64xbf16, #tpu.memory_space<vmem>>, vector<32x64xbf16>
      tpu.vector_store %arg17[%c0_140, %c0_141], %256 {strides = array<i32>} : memref<32x64xbf16, #tpu.memory_space<vmem>>, vector<32x64xbf16>,
    } else {
    }
    %c0 = arith.constant 0 : index
    %c0_1 = arith.constant 0 : index
    %c0_2 = arith.constant 0 : index
    %3 = vector.load %arg2[%c0, %c0_1, %c0_2] : memref<1x16x64xbf16, #tpu.memory_space<vmem>>, vector<1x16x64xbf16>
    %4 = vector.shape_cast %3 : vector<1x16x64xbf16> to vector<16x64xbf16>
    %c0_3 = arith.constant 0 : index
    %c0_4 = arith.constant 0 : index
    %5 = vector.load %arg4[%c0_3, %c0_4] : memref<64x64xbf16, #tpu.memory_space<vmem>>, vector<64x64xbf16>
    %cst = arith.constant dense<0.000000e+00> : vector<16x64xf32>
    %6 = tpu.matmul %4, %5, %cst {dimension_numbers = #tpu.dot_dimension_numbers<[1], [0], [0], [1], [0, 0, 1, 1], [], []>} : vector<16x64xbf16>, vector<64x64xbf16>, vector<16x64xf32> -> vector<16x64xf32>
    %c0_5 = arith.constant 0 : index
    %c0_6 = arith.constant 0 : index
    %7 = vector.load %arg5[%c0_5, %c0_6] : memref<1x64xf32, #tpu.memory_space<vmem>>, vector<1x64xf32>
    %8 = vector.broadcast %7 : vector<1x64xf32> to vector<16x64xf32>
    %9 = arith.addf %6, %8 : vector<16x64xf32>
    %c0_7 = arith.constant 0 : index
    %c0_8 = arith.constant 0 : index
    %10 = vector.load %arg16[%c0_7, %c0_8] : memref<32x64xbf16, #tpu.memory_space<vmem>>, vector<32x64xbf16>
    %c0_9 = arith.constant 0 : index
    %c0_10 = arith.constant 0 : index
    %11 = vector.load %arg17[%c0_9, %c0_10] : memref<32x64xbf16, #tpu.memory_space<vmem>>, vector<32x64xbf16>
    %c0_11 = arith.constant 0 : index
    %c0_12 = arith.constant 0 : index
    %c0_13 = arith.constant 0 : index
    %12 = vector.load %arg10[%c0_11, %c0_12, %c0_13] : memref<8x1x64xf32, #tpu.memory_space<vmem>>, vector<1x1x64xf32>
    %13 = vector.shape_cast %12 : vector<1x1x64xf32> to vector<1x64xf32>
    %14 = vector.broadcast %13 : vector<1x64xf32> to vector<16x64xf32>
    %15 = arith.mulf %9, %14 : vector<16x64xf32>
    %16 = arith.truncf %15 : vector<16x64xf32> to vector<16x64xbf16>
    %cst_14 = arith.constant dense<0.000000e+00> : vector<16x32xf32>
    %17 = tpu.matmul %16, %10, %cst_14 {dimension_numbers = #tpu.dot_dimension_numbers<[1], [1], [0], [0], [0, 0, 1, 0], [], []>} : vector<16x64xbf16>, vector<32x64xbf16>, vector<16x32xf32> -> vector<16x32xf32>
    %cst_15 = arith.constant dense<0xFF800000> : vector<16xf32>
    %18 = vector.multi_reduction <maximumf>, %17, %cst_15 [1] : vector<16x32xf32> to vector<16xf32>
    %19 = vector.shape_cast %18 : vector<16xf32> to vector<16x1xf32>
    %20 = vector.broadcast %19 : vector<16x1xf32> to vector<16x32xf32>
    %21 = arith.subf %17, %20 : vector<16x32xf32>
    %22 = math.exp %21 : vector<16x32xf32>
    %cst_16 = arith.constant dense<0.000000e+00> : vector<16xf32>
    %23 = vector.multi_reduction <add>, %22, %cst_16 [1] : vector<16x32xf32> to vector<16xf32>
    %24 = vector.shape_cast %23 : vector<16xf32> to vector<16x1xf32>
    %25 = tpu.reciprocal %24 {approx = true} : vector<16x1xf32> -> vector<16x1xf32>
    %26 = arith.truncf %22 : vector<16x32xf32> to vector<16x32xbf16>
    %cst_17 = arith.constant dense<0.000000e+00> : vector<16x64xf32>
    %27 = tpu.matmul %26, %11, %cst_17 {dimension_numbers = #tpu.dot_dimension_numbers<[1], [0], [0], [1], [0, 0, 1, 1], [], []>} : vector<16x32xbf16>, vector<32x64xbf16>, vector<16x64xf32> -> vector<16x64xf32>
    %c0_18 = arith.constant 0 : index
    %c0_19 = arith.constant 0 : index
    %c0_20 = arith.constant 0 : index
    %28 = vector.load %arg11[%c0_18, %c0_19, %c0_20] : memref<8x1x64xf32, #tpu.memory_space<vmem>>, vector<1x1x64xf32>
    %29 = vector.shape_cast %28 : vector<1x1x64xf32> to vector<1x64xf32>
    %30 = vector.broadcast %25 : vector<16x1xf32> to vector<16x64xf32>
    %31 = vector.broadcast %29 : vector<1x64xf32> to vector<16x64xf32>
    %32 = arith.mulf %30, %31 : vector<16x64xf32>
    %33 = arith.mulf %27, %32 : vector<16x64xf32>
    %c0_21 = arith.constant 0 : index
    %c0_22 = arith.constant 0 : index
    %34 = vector.load %arg19[%c0_21, %c0_22] : memref<16x64xf32, #tpu.memory_space<vmem>>, vector<16x64xf32>
    tpu.vector_store %arg19[%c0_21, %c0_22], %33 {strides = array<i32>} : memref<16x64xf32, #tpu.memory_space<vmem>>, vector<16x64xf32>,
    %c1_i32 = arith.constant 1 : i32
    %c0_23 = arith.constant 0 : index
    %c0_24 = arith.constant 0 : index
    %35 = vector.load %arg19[%c0_23, %c0_24] : memref<16x64xf32, #tpu.memory_space<vmem>>, vector<16x64xf32>
    %36 = arith.index_cast %c1_i32 : i32 to index
    %c0_25 = arith.constant 0 : index
    %c0_26 = arith.constant 0 : index
    %37 = vector.load %arg10[%36, %c0_25, %c0_26] : memref<8x1x64xf32, #tpu.memory_space<vmem>>, vector<1x1x64xf32>
    %38 = vector.shape_cast %37 : vector<1x1x64xf32> to vector<1x64xf32>
    %39 = vector.broadcast %38 : vector<1x64xf32> to vector<16x64xf32>
    %40 = arith.mulf %9, %39 : vector<16x64xf32>
    %41 = arith.truncf %40 : vector<16x64xf32> to vector<16x64xbf16>
    %cst_27 = arith.constant dense<0.000000e+00> : vector<16x32xf32>
    %42 = tpu.matmul %41, %10, %cst_27 {dimension_numbers = #tpu.dot_dimension_numbers<[1], [1], [0], [0], [0, 0, 1, 0], [], []>} : vector<16x64xbf16>, vector<32x64xbf16>, vector<16x32xf32> -> vector<16x32xf32>
    %cst_28 = arith.constant dense<0xFF800000> : vector<16xf32>
    %43 = vector.multi_reduction <maximumf>, %42, %cst_28 [1] : vector<16x32xf32> to vector<16xf32>
    %44 = vector.shape_cast %43 : vector<16xf32> to vector<16x1xf32>
    %45 = vector.broadcast %44 : vector<16x1xf32> to vector<16x32xf32>
    %46 = arith.subf %42, %45 : vector<16x32xf32>
    %47 = math.exp %46 : vector<16x32xf32>
    %cst_29 = arith.constant dense<0.000000e+00> : vector<16xf32>
    %48 = vector.multi_reduction <add>, %47, %cst_29 [1] : vector<16x32xf32> to vector<16xf32>
    %49 = vector.shape_cast %48 : vector<16xf32> to vector<16x1xf32>
    %50 = tpu.reciprocal %49 {approx = true} : vector<16x1xf32> -> vector<16x1xf32>
    %51 = arith.truncf %47 : vector<16x32xf32> to vector<16x32xbf16>
    %cst_30 = arith.constant dense<0.000000e+00> : vector<16x64xf32>
    %52 = tpu.matmul %51, %11, %cst_30 {dimension_numbers = #tpu.dot_dimension_numbers<[1], [0], [0], [1], [0, 0, 1, 1], [], []>} : vector<16x32xbf16>, vector<32x64xbf16>, vector<16x64xf32> -> vector<16x64xf32>
    %53 = arith.index_cast %c1_i32 : i32 to index
    %c0_31 = arith.constant 0 : index
    %c0_32 = arith.constant 0 : index
    %54 = vector.load %arg11[%53, %c0_31, %c0_32] : memref<8x1x64xf32, #tpu.memory_space<vmem>>, vector<1x1x64xf32>
    %55 = vector.shape_cast %54 : vector<1x1x64xf32> to vector<1x64xf32>
    %56 = vector.broadcast %50 : vector<16x1xf32> to vector<16x64xf32>
    %57 = vector.broadcast %55 : vector<1x64xf32> to vector<16x64xf32>
    %58 = arith.mulf %56, %57 : vector<16x64xf32>
    %59 = arith.mulf %52, %58 : vector<16x64xf32>
    %60 = arith.addf %35, %59 : vector<16x64xf32>
    %c0_33 = arith.constant 0 : index
    %c0_34 = arith.constant 0 : index
    %61 = vector.load %arg19[%c0_33, %c0_34] : memref<16x64xf32, #tpu.memory_space<vmem>>, vector<16x64xf32>
    tpu.vector_store %arg19[%c0_33, %c0_34], %60 {strides = array<i32>} : memref<16x64xf32, #tpu.memory_space<vmem>>, vector<16x64xf32>,
    %c2_i32 = arith.constant 2 : i32
    %c0_35 = arith.constant 0 : index
    %c0_36 = arith.constant 0 : index
    %62 = vector.load %arg19[%c0_35, %c0_36] : memref<16x64xf32, #tpu.memory_space<vmem>>, vector<16x64xf32>
    %63 = arith.index_cast %c2_i32 : i32 to index
    %c0_37 = arith.constant 0 : index
    %c0_38 = arith.constant 0 : index
    %64 = vector.load %arg10[%63, %c0_37, %c0_38] : memref<8x1x64xf32, #tpu.memory_space<vmem>>, vector<1x1x64xf32>
    %65 = vector.shape_cast %64 : vector<1x1x64xf32> to vector<1x64xf32>
    %66 = vector.broadcast %65 : vector<1x64xf32> to vector<16x64xf32>
    %67 = arith.mulf %9, %66 : vector<16x64xf32>
    %68 = arith.truncf %67 : vector<16x64xf32> to vector<16x64xbf16>
    %cst_39 = arith.constant dense<0.000000e+00> : vector<16x32xf32>
    %69 = tpu.matmul %68, %10, %cst_39 {dimension_numbers = #tpu.dot_dimension_numbers<[1], [1], [0], [0], [0, 0, 1, 0], [], []>} : vector<16x64xbf16>, vector<32x64xbf16>, vector<16x32xf32> -> vector<16x32xf32>
    %cst_40 = arith.constant dense<0xFF800000> : vector<16xf32>
    %70 = vector.multi_reduction <maximumf>, %69, %cst_40 [1] : vector<16x32xf32> to vector<16xf32>
    %71 = vector.shape_cast %70 : vector<16xf32> to vector<16x1xf32>
    %72 = vector.broadcast %71 : vector<16x1xf32> to vector<16x32xf32>
    %73 = arith.subf %69, %72 : vector<16x32xf32>
    %74 = math.exp %73 : vector<16x32xf32>
    %cst_41 = arith.constant dense<0.000000e+00> : vector<16xf32>
    %75 = vector.multi_reduction <add>, %74, %cst_41 [1] : vector<16x32xf32> to vector<16xf32>
    %76 = vector.shape_cast %75 : vector<16xf32> to vector<16x1xf32>
    %77 = tpu.reciprocal %76 {approx = true} : vector<16x1xf32> -> vector<16x1xf32>
    %78 = arith.truncf %74 : vector<16x32xf32> to vector<16x32xbf16>
    %cst_42 = arith.constant dense<0.000000e+00> : vector<16x64xf32>
    %79 = tpu.matmul %78, %11, %cst_42 {dimension_numbers = #tpu.dot_dimension_numbers<[1], [0], [0], [1], [0, 0, 1, 1], [], []>} : vector<16x32xbf16>, vector<32x64xbf16>, vector<16x64xf32> -> vector<16x64xf32>
    %80 = arith.index_cast %c2_i32 : i32 to index
    %c0_43 = arith.constant 0 : index
    %c0_44 = arith.constant 0 : index
    %81 = vector.load %arg11[%80, %c0_43, %c0_44] : memref<8x1x64xf32, #tpu.memory_space<vmem>>, vector<1x1x64xf32>
    %82 = vector.shape_cast %81 : vector<1x1x64xf32> to vector<1x64xf32>
    %83 = vector.broadcast %77 : vector<16x1xf32> to vector<16x64xf32>
    %84 = vector.broadcast %82 : vector<1x64xf32> to vector<16x64xf32>
    %85 = arith.mulf %83, %84 : vector<16x64xf32>
    %86 = arith.mulf %79, %85 : vector<16x64xf32>
    %87 = arith.addf %62, %86 : vector<16x64xf32>
    %c0_45 = arith.constant 0 : index
    %c0_46 = arith.constant 0 : index
    %88 = vector.load %arg19[%c0_45, %c0_46] : memref<16x64xf32, #tpu.memory_space<vmem>>, vector<16x64xf32>
    tpu.vector_store %arg19[%c0_45, %c0_46], %87 {strides = array<i32>} : memref<16x64xf32, #tpu.memory_space<vmem>>, vector<16x64xf32>,
    %c3_i32 = arith.constant 3 : i32
    %c0_47 = arith.constant 0 : index
    %c0_48 = arith.constant 0 : index
    %89 = vector.load %arg19[%c0_47, %c0_48] : memref<16x64xf32, #tpu.memory_space<vmem>>, vector<16x64xf32>
    %90 = arith.index_cast %c3_i32 : i32 to index
    %c0_49 = arith.constant 0 : index
    %c0_50 = arith.constant 0 : index
    %91 = vector.load %arg10[%90, %c0_49, %c0_50] : memref<8x1x64xf32, #tpu.memory_space<vmem>>, vector<1x1x64xf32>
    %92 = vector.shape_cast %91 : vector<1x1x64xf32> to vector<1x64xf32>
    %93 = vector.broadcast %92 : vector<1x64xf32> to vector<16x64xf32>
    %94 = arith.mulf %9, %93 : vector<16x64xf32>
    %95 = arith.truncf %94 : vector<16x64xf32> to vector<16x64xbf16>
    %cst_51 = arith.constant dense<0.000000e+00> : vector<16x32xf32>
    %96 = tpu.matmul %95, %10, %cst_51 {dimension_numbers = #tpu.dot_dimension_numbers<[1], [1], [0], [0], [0, 0, 1, 0], [], []>} : vector<16x64xbf16>, vector<32x64xbf16>, vector<16x32xf32> -> vector<16x32xf32>
    %cst_52 = arith.constant dense<0xFF800000> : vector<16xf32>
    %97 = vector.multi_reduction <maximumf>, %96, %cst_52 [1] : vector<16x32xf32> to vector<16xf32>
    %98 = vector.shape_cast %97 : vector<16xf32> to vector<16x1xf32>
    %99 = vector.broadcast %98 : vector<16x1xf32> to vector<16x32xf32>
    %100 = arith.subf %96, %99 : vector<16x32xf32>
    %101 = math.exp %100 : vector<16x32xf32>
    %cst_53 = arith.constant dense<0.000000e+00> : vector<16xf32>
    %102 = vector.multi_reduction <add>, %101, %cst_53 [1] : vector<16x32xf32> to vector<16xf32>
    %103 = vector.shape_cast %102 : vector<16xf32> to vector<16x1xf32>
    %104 = tpu.reciprocal %103 {approx = true} : vector<16x1xf32> -> vector<16x1xf32>
    %105 = arith.truncf %101 : vector<16x32xf32> to vector<16x32xbf16>
    %cst_54 = arith.constant dense<0.000000e+00> : vector<16x64xf32>
    %106 = tpu.matmul %105, %11, %cst_54 {dimension_numbers = #tpu.dot_dimension_numbers<[1], [0], [0], [1], [0, 0, 1, 1], [], []>} : vector<16x32xbf16>, vector<32x64xbf16>, vector<16x64xf32> -> vector<16x64xf32>
    %107 = arith.index_cast %c3_i32 : i32 to index
    %c0_55 = arith.constant 0 : index
    %c0_56 = arith.constant 0 : index
    %108 = vector.load %arg11[%107, %c0_55, %c0_56] : memref<8x1x64xf32, #tpu.memory_space<vmem>>, vector<1x1x64xf32>
    %109 = vector.shape_cast %108 : vector<1x1x64xf32> to vector<1x64xf32>
    %110 = vector.broadcast %104 : vector<16x1xf32> to vector<16x64xf32>
    %111 = vector.broadcast %109 : vector<1x64xf32> to vector<16x64xf32>
    %112 = arith.mulf %110, %111 : vector<16x64xf32>
    %113 = arith.mulf %106, %112 : vector<16x64xf32>
    %114 = arith.addf %89, %113 : vector<16x64xf32>
    %c0_57 = arith.constant 0 : index
    %c0_58 = arith.constant 0 : index
    %115 = vector.load %arg19[%c0_57, %c0_58] : memref<16x64xf32, #tpu.memory_space<vmem>>, vector<16x64xf32>
    tpu.vector_store %arg19[%c0_57, %c0_58], %114 {strides = array<i32>} : memref<16x64xf32, #tpu.memory_space<vmem>>, vector<16x64xf32>,
    %c4_i32 = arith.constant 4 : i32
    %c0_59 = arith.constant 0 : index
    %c0_60 = arith.constant 0 : index
    %116 = vector.load %arg19[%c0_59, %c0_60] : memref<16x64xf32, #tpu.memory_space<vmem>>, vector<16x64xf32>
    %117 = arith.index_cast %c4_i32 : i32 to index
    %c0_61 = arith.constant 0 : index
    %c0_62 = arith.constant 0 : index
    %118 = vector.load %arg10[%117, %c0_61, %c0_62] : memref<8x1x64xf32, #tpu.memory_space<vmem>>, vector<1x1x64xf32>
    %119 = vector.shape_cast %118 : vector<1x1x64xf32> to vector<1x64xf32>
    %120 = vector.broadcast %119 : vector<1x64xf32> to vector<16x64xf32>
    %121 = arith.mulf %9, %120 : vector<16x64xf32>
    %122 = arith.truncf %121 : vector<16x64xf32> to vector<16x64xbf16>
    %cst_63 = arith.constant dense<0.000000e+00> : vector<16x32xf32>
    %123 = tpu.matmul %122, %10, %cst_63 {dimension_numbers = #tpu.dot_dimension_numbers<[1], [1], [0], [0], [0, 0, 1, 0], [], []>} : vector<16x64xbf16>, vector<32x64xbf16>, vector<16x32xf32> -> vector<16x32xf32>
    %cst_64 = arith.constant dense<0xFF800000> : vector<16xf32>
    %124 = vector.multi_reduction <maximumf>, %123, %cst_64 [1] : vector<16x32xf32> to vector<16xf32>
    %125 = vector.shape_cast %124 : vector<16xf32> to vector<16x1xf32>
    %126 = vector.broadcast %125 : vector<16x1xf32> to vector<16x32xf32>
    %127 = arith.subf %123, %126 : vector<16x32xf32>
    %128 = math.exp %127 : vector<16x32xf32>
    %cst_65 = arith.constant dense<0.000000e+00> : vector<16xf32>
    %129 = vector.multi_reduction <add>, %128, %cst_65 [1] : vector<16x32xf32> to vector<16xf32>
    %130 = vector.shape_cast %129 : vector<16xf32> to vector<16x1xf32>
    %131 = tpu.reciprocal %130 {approx = true} : vector<16x1xf32> -> vector<16x1xf32>
    %132 = arith.truncf %128 : vector<16x32xf32> to vector<16x32xbf16>
    %cst_66 = arith.constant dense<0.000000e+00> : vector<16x64xf32>
    %133 = tpu.matmul %132, %11, %cst_66 {dimension_numbers = #tpu.dot_dimension_numbers<[1], [0], [0], [1], [0, 0, 1, 1], [], []>} : vector<16x32xbf16>, vector<32x64xbf16>, vector<16x64xf32> -> vector<16x64xf32>
    %134 = arith.index_cast %c4_i32 : i32 to index
    %c0_67 = arith.constant 0 : index
    %c0_68 = arith.constant 0 : index
    %135 = vector.load %arg11[%134, %c0_67, %c0_68] : memref<8x1x64xf32, #tpu.memory_space<vmem>>, vector<1x1x64xf32>
    %136 = vector.shape_cast %135 : vector<1x1x64xf32> to vector<1x64xf32>
    %137 = vector.broadcast %131 : vector<16x1xf32> to vector<16x64xf32>
    %138 = vector.broadcast %136 : vector<1x64xf32> to vector<16x64xf32>
    %139 = arith.mulf %137, %138 : vector<16x64xf32>
    %140 = arith.mulf %133, %139 : vector<16x64xf32>
    %141 = arith.addf %116, %140 : vector<16x64xf32>
    %c0_69 = arith.constant 0 : index
    %c0_70 = arith.constant 0 : index
    %142 = vector.load %arg19[%c0_69, %c0_70] : memref<16x64xf32, #tpu.memory_space<vmem>>, vector<16x64xf32>
    tpu.vector_store %arg19[%c0_69, %c0_70], %141 {strides = array<i32>} : memref<16x64xf32, #tpu.memory_space<vmem>>, vector<16x64xf32>,
    %c5_i32 = arith.constant 5 : i32
    %c0_71 = arith.constant 0 : index
    %c0_72 = arith.constant 0 : index
    %143 = vector.load %arg19[%c0_71, %c0_72] : memref<16x64xf32, #tpu.memory_space<vmem>>, vector<16x64xf32>
    %144 = arith.index_cast %c5_i32 : i32 to index
    %c0_73 = arith.constant 0 : index
    %c0_74 = arith.constant 0 : index
    %145 = vector.load %arg10[%144, %c0_73, %c0_74] : memref<8x1x64xf32, #tpu.memory_space<vmem>>, vector<1x1x64xf32>
    %146 = vector.shape_cast %145 : vector<1x1x64xf32> to vector<1x64xf32>
    %147 = vector.broadcast %146 : vector<1x64xf32> to vector<16x64xf32>
    %148 = arith.mulf %9, %147 : vector<16x64xf32>
    %149 = arith.truncf %148 : vector<16x64xf32> to vector<16x64xbf16>
    %cst_75 = arith.constant dense<0.000000e+00> : vector<16x32xf32>
    %150 = tpu.matmul %149, %10, %cst_75 {dimension_numbers = #tpu.dot_dimension_numbers<[1], [1], [0], [0], [0, 0, 1, 0], [], []>} : vector<16x64xbf16>, vector<32x64xbf16>, vector<16x32xf32> -> vector<16x32xf32>
    %cst_76 = arith.constant dense<0xFF800000> : vector<16xf32>
    %151 = vector.multi_reduction <maximumf>, %150, %cst_76 [1] : vector<16x32xf32> to vector<16xf32>
    %152 = vector.shape_cast %151 : vector<16xf32> to vector<16x1xf32>
    %153 = vector.broadcast %152 : vector<16x1xf32> to vector<16x32xf32>
    %154 = arith.subf %150, %153 : vector<16x32xf32>
    %155 = math.exp %154 : vector<16x32xf32>
    %cst_77 = arith.constant dense<0.000000e+00> : vector<16xf32>
    %156 = vector.multi_reduction <add>, %155, %cst_77 [1] : vector<16x32xf32> to vector<16xf32>
    %157 = vector.shape_cast %156 : vector<16xf32> to vector<16x1xf32>
    %158 = tpu.reciprocal %157 {approx = true} : vector<16x1xf32> -> vector<16x1xf32>
    %159 = arith.truncf %155 : vector<16x32xf32> to vector<16x32xbf16>
    %cst_78 = arith.constant dense<0.000000e+00> : vector<16x64xf32>
    %160 = tpu.matmul %159, %11, %cst_78 {dimension_numbers = #tpu.dot_dimension_numbers<[1], [0], [0], [1], [0, 0, 1, 1], [], []>} : vector<16x32xbf16>, vector<32x64xbf16>, vector<16x64xf32> -> vector<16x64xf32>
    %161 = arith.index_cast %c5_i32 : i32 to index
    %c0_79 = arith.constant 0 : index
    %c0_80 = arith.constant 0 : index
    %162 = vector.load %arg11[%161, %c0_79, %c0_80] : memref<8x1x64xf32, #tpu.memory_space<vmem>>, vector<1x1x64xf32>
    %163 = vector.shape_cast %162 : vector<1x1x64xf32> to vector<1x64xf32>
    %164 = vector.broadcast %158 : vector<16x1xf32> to vector<16x64xf32>
    %165 = vector.broadcast %163 : vector<1x64xf32> to vector<16x64xf32>
    %166 = arith.mulf %164, %165 : vector<16x64xf32>
    %167 = arith.mulf %160, %166 : vector<16x64xf32>
    %168 = arith.addf %143, %167 : vector<16x64xf32>
    %c0_81 = arith.constant 0 : index
    %c0_82 = arith.constant 0 : index
    %169 = vector.load %arg19[%c0_81, %c0_82] : memref<16x64xf32, #tpu.memory_space<vmem>>, vector<16x64xf32>
    tpu.vector_store %arg19[%c0_81, %c0_82], %168 {strides = array<i32>} : memref<16x64xf32, #tpu.memory_space<vmem>>, vector<16x64xf32>,
    %c6_i32 = arith.constant 6 : i32
    %c0_83 = arith.constant 0 : index
    %c0_84 = arith.constant 0 : index
    %170 = vector.load %arg19[%c0_83, %c0_84] : memref<16x64xf32, #tpu.memory_space<vmem>>, vector<16x64xf32>
    %171 = arith.index_cast %c6_i32 : i32 to index
    %c0_85 = arith.constant 0 : index
    %c0_86 = arith.constant 0 : index
    %172 = vector.load %arg10[%171, %c0_85, %c0_86] : memref<8x1x64xf32, #tpu.memory_space<vmem>>, vector<1x1x64xf32>
    %173 = vector.shape_cast %172 : vector<1x1x64xf32> to vector<1x64xf32>
    %174 = vector.broadcast %173 : vector<1x64xf32> to vector<16x64xf32>
    %175 = arith.mulf %9, %174 : vector<16x64xf32>
    %176 = arith.truncf %175 : vector<16x64xf32> to vector<16x64xbf16>
    %cst_87 = arith.constant dense<0.000000e+00> : vector<16x32xf32>
    %177 = tpu.matmul %176, %10, %cst_87 {dimension_numbers = #tpu.dot_dimension_numbers<[1], [1], [0], [0], [0, 0, 1, 0], [], []>} : vector<16x64xbf16>, vector<32x64xbf16>, vector<16x32xf32> -> vector<16x32xf32>
    %cst_88 = arith.constant dense<0xFF800000> : vector<16xf32>
    %178 = vector.multi_reduction <maximumf>, %177, %cst_88 [1] : vector<16x32xf32> to vector<16xf32>
    %179 = vector.shape_cast %178 : vector<16xf32> to vector<16x1xf32>
    %180 = vector.broadcast %179 : vector<16x1xf32> to vector<16x32xf32>
    %181 = arith.subf %177, %180 : vector<16x32xf32>
    %182 = math.exp %181 : vector<16x32xf32>
    %cst_89 = arith.constant dense<0.000000e+00> : vector<16xf32>
    %183 = vector.multi_reduction <add>, %182, %cst_89 [1] : vector<16x32xf32> to vector<16xf32>
    %184 = vector.shape_cast %183 : vector<16xf32> to vector<16x1xf32>
    %185 = tpu.reciprocal %184 {approx = true} : vector<16x1xf32> -> vector<16x1xf32>
    %186 = arith.truncf %182 : vector<16x32xf32> to vector<16x32xbf16>
    %cst_90 = arith.constant dense<0.000000e+00> : vector<16x64xf32>
    %187 = tpu.matmul %186, %11, %cst_90 {dimension_numbers = #tpu.dot_dimension_numbers<[1], [0], [0], [1], [0, 0, 1, 1], [], []>} : vector<16x32xbf16>, vector<32x64xbf16>, vector<16x64xf32> -> vector<16x64xf32>
    %188 = arith.index_cast %c6_i32 : i32 to index
    %c0_91 = arith.constant 0 : index
    %c0_92 = arith.constant 0 : index
    %189 = vector.load %arg11[%188, %c0_91, %c0_92] : memref<8x1x64xf32, #tpu.memory_space<vmem>>, vector<1x1x64xf32>
    %190 = vector.shape_cast %189 : vector<1x1x64xf32> to vector<1x64xf32>
    %191 = vector.broadcast %185 : vector<16x1xf32> to vector<16x64xf32>
    %192 = vector.broadcast %190 : vector<1x64xf32> to vector<16x64xf32>
    %193 = arith.mulf %191, %192 : vector<16x64xf32>
    %194 = arith.mulf %187, %193 : vector<16x64xf32>
    %195 = arith.addf %170, %194 : vector<16x64xf32>
    %c0_93 = arith.constant 0 : index
    %c0_94 = arith.constant 0 : index
    %196 = vector.load %arg19[%c0_93, %c0_94] : memref<16x64xf32, #tpu.memory_space<vmem>>, vector<16x64xf32>
    tpu.vector_store %arg19[%c0_93, %c0_94], %195 {strides = array<i32>} : memref<16x64xf32, #tpu.memory_space<vmem>>, vector<16x64xf32>,
    %c7_i32 = arith.constant 7 : i32
    %c0_95 = arith.constant 0 : index
    %c0_96 = arith.constant 0 : index
    %197 = vector.load %arg19[%c0_95, %c0_96] : memref<16x64xf32, #tpu.memory_space<vmem>>, vector<16x64xf32>
    %198 = arith.index_cast %c7_i32 : i32 to index
    %c0_97 = arith.constant 0 : index
    %c0_98 = arith.constant 0 : index
    %199 = vector.load %arg10[%198, %c0_97, %c0_98] : memref<8x1x64xf32, #tpu.memory_space<vmem>>, vector<1x1x64xf32>
    %200 = vector.shape_cast %199 : vector<1x1x64xf32> to vector<1x64xf32>
    %201 = vector.broadcast %200 : vector<1x64xf32> to vector<16x64xf32>
    %202 = arith.mulf %9, %201 : vector<16x64xf32>
    %203 = arith.truncf %202 : vector<16x64xf32> to vector<16x64xbf16>
    %cst_99 = arith.constant dense<0.000000e+00> : vector<16x32xf32>
    %204 = tpu.matmul %203, %10, %cst_99 {dimension_numbers = #tpu.dot_dimension_numbers<[1], [1], [0], [0], [0, 0, 1, 0], [], []>} : vector<16x64xbf16>, vector<32x64xbf16>, vector<16x32xf32> -> vector<16x32xf32>
    %cst_100 = arith.constant dense<0xFF800000> : vector<16xf32>
    %205 = vector.multi_reduction <maximumf>, %204, %cst_100 [1] : vector<16x32xf32> to vector<16xf32>
    %206 = vector.shape_cast %205 : vector<16xf32> to vector<16x1xf32>
    %207 = vector.broadcast %206 : vector<16x1xf32> to vector<16x32xf32>
    %208 = arith.subf %204, %207 : vector<16x32xf32>
    %209 = math.exp %208 : vector<16x32xf32>
    %cst_101 = arith.constant dense<0.000000e+00> : vector<16xf32>
    %210 = vector.multi_reduction <add>, %209, %cst_101 [1] : vector<16x32xf32> to vector<16xf32>
    %211 = vector.shape_cast %210 : vector<16xf32> to vector<16x1xf32>
    %212 = tpu.reciprocal %211 {approx = true} : vector<16x1xf32> -> vector<16x1xf32>
    %213 = arith.truncf %209 : vector<16x32xf32> to vector<16x32xbf16>
    %cst_102 = arith.constant dense<0.000000e+00> : vector<16x64xf32>
    %214 = tpu.matmul %213, %11, %cst_102 {dimension_numbers = #tpu.dot_dimension_numbers<[1], [0], [0], [1], [0, 0, 1, 1], [], []>} : vector<16x32xbf16>, vector<32x64xbf16>, vector<16x64xf32> -> vector<16x64xf32>
    %215 = arith.index_cast %c7_i32 : i32 to index
    %c0_103 = arith.constant 0 : index
    %c0_104 = arith.constant 0 : index
    %216 = vector.load %arg11[%215, %c0_103, %c0_104] : memref<8x1x64xf32, #tpu.memory_space<vmem>>, vector<1x1x64xf32>
    %217 = vector.shape_cast %216 : vector<1x1x64xf32> to vector<1x64xf32>
    %218 = vector.broadcast %212 : vector<16x1xf32> to vector<16x64xf32>
    %219 = vector.broadcast %217 : vector<1x64xf32> to vector<16x64xf32>
    %220 = arith.mulf %218, %219 : vector<16x64xf32>
    %221 = arith.mulf %214, %220 : vector<16x64xf32>
    %222 = arith.addf %197, %221 : vector<16x64xf32>
    %c0_105 = arith.constant 0 : index
    %c0_106 = arith.constant 0 : index
    %223 = vector.load %arg19[%c0_105, %c0_106] : memref<16x64xf32, #tpu.memory_space<vmem>>, vector<16x64xf32>
    tpu.vector_store %arg19[%c0_105, %c0_106], %222 {strides = array<i32>} : memref<16x64xf32, #tpu.memory_space<vmem>>, vector<16x64xf32>,
    %c7_i32_107 = arith.constant 7 : i32
    %c0_108 = arith.constant 0 : index
    %c0_109 = arith.constant 0 : index
    %224 = vector.load %arg19[%c0_108, %c0_109] : memref<16x64xf32, #tpu.memory_space<vmem>>, vector<16x64xf32>
    %c0_110 = arith.constant 0 : index
    %c0_111 = arith.constant 0 : index
    %225 = vector.load %arg12[%c0_110, %c0_111] : memref<1x64xf32, #tpu.memory_space<vmem>>, vector<1x64xf32>
    %c0_112 = arith.constant 0 : index
    %c0_113 = arith.constant 0 : index
    %226 = vector.load %arg18[%c0_112, %c0_113] : memref<1x64xf32, #tpu.memory_space<vmem>>, vector<1x64xf32>
    %227 = arith.mulf %225, %226 : vector<1x64xf32>
    %228 = vector.broadcast %227 : vector<1x64xf32> to vector<16x64xf32>
    %229 = arith.addf %224, %228 : vector<16x64xf32>
    %230 = arith.truncf %229 : vector<16x64xf32> to vector<16x64xbf16>
    %c0_114 = arith.constant 0 : index
    %c0_115 = arith.constant 0 : index
    %231 = vector.load %arg13[%c0_114, %c0_115] : memref<64x64xbf16, #tpu.memory_space<vmem>>, vector<64x64xbf16>
    %cst_116 = arith.constant dense<0.000000e+00> : vector<16x64xf32>
    %232 = tpu.matmul %230, %231, %cst_116 {dimension_numbers = #tpu.dot_dimension_numbers<[1], [0], [0], [1], [0, 0, 1, 1], [], []>} : vector<16x64xbf16>, vector<64x64xbf16>, vector<16x64xf32> -> vector<16x64xf32>
    %c0_117 = arith.constant 0 : index
    %c0_118 = arith.constant 0 : index
    %233 = vector.load %arg14[%c0_117, %c0_118] : memref<1x64xf32, #tpu.memory_space<vmem>>, vector<1x64xf32>
    %234 = vector.broadcast %233 : vector<1x64xf32> to vector<16x64xf32>
    %235 = arith.addf %232, %234 : vector<16x64xf32>
    %c0_119 = arith.constant 0 : index
    %c0_120 = arith.constant 0 : index
    %c0_121 = arith.constant 0 : index
    %236 = vector.load %arg15[%c0_119, %c0_120, %c0_121] : memref<1x16x64xf32, #tpu.memory_space<vmem>>, vector<1x16x64xf32>
    %237 = vector.shape_cast %236 : vector<1x16x64xf32> to vector<16x64xf32>
    %238 = vector.shape_cast %235 : vector<16x64xf32> to vector<1x16x64xf32>
    tpu.vector_store %arg15[%c0_119, %c0_120, %c0_121], %238 {strides = array<i32>} : memref<1x16x64xf32, #tpu.memory_space<vmem>>, vector<1x16x64xf32>,
    return
  }
  func.func @transform_0(%arg0: i32, %arg1: i32) -> (i32, i32, i32) {
    %c0_i32 = arith.constant 0 : i32
    %c0_i32_0 = arith.constant 0 : i32
    return %arg0, %arg1, %c0_i32 : i32, i32, i32
  }
  func.func @transform_1(%arg0: i32, %arg1: i32) -> (i32, i32, i32) {
    %c0_i32 = arith.constant 0 : i32
    %c0_i32_0 = arith.constant 0 : i32
    %c0_i32_1 = arith.constant 0 : i32
    return %arg0, %c0_i32, %c0_i32_0 : i32, i32, i32
  }
  func.func @transform_2(%arg0: i32, %arg1: i32) -> (i32, i32) {
    %c0_i32 = arith.constant 0 : i32
    %c0_i32_0 = arith.constant 0 : i32
    %c0_i32_1 = arith.constant 0 : i32
    return %c0_i32, %c0_i32_0 : i32, i32
  }
  func.func @transform_3(%arg0: i32, %arg1: i32) -> (i32, i32) {
    %c0_i32 = arith.constant 0 : i32
    %c0_i32_0 = arith.constant 0 : i32
    %c0_i32_1 = arith.constant 0 : i32
    return %c0_i32, %c0_i32_0 : i32, i32
  }
  func.func @transform_4(%arg0: i32, %arg1: i32) -> (i32, i32) {
    %c0_i32 = arith.constant 0 : i32
    %c0_i32_0 = arith.constant 0 : i32
    %c0_i32_1 = arith.constant 0 : i32
    return %c0_i32, %c0_i32_0 : i32, i32
  }
  func.func @transform_5(%arg0: i32, %arg1: i32) -> (i32, i32) {
    %c0_i32 = arith.constant 0 : i32
    %c0_i32_0 = arith.constant 0 : i32
    %c0_i32_1 = arith.constant 0 : i32
    return %c0_i32, %c0_i32_0 : i32, i32
  }
  func.func @transform_6(%arg0: i32, %arg1: i32) -> (i32, i32) {
    %c0_i32 = arith.constant 0 : i32
    %c0_i32_0 = arith.constant 0 : i32
    %c0_i32_1 = arith.constant 0 : i32
    return %c0_i32, %c0_i32_0 : i32, i32
  }
  func.func @transform_7(%arg0: i32, %arg1: i32) -> (i32, i32) {
    %c0_i32 = arith.constant 0 : i32
    %c0_i32_0 = arith.constant 0 : i32
    %c0_i32_1 = arith.constant 0 : i32
    return %c0_i32, %c0_i32_0 : i32, i32
  }
  func.func @transform_8(%arg0: i32, %arg1: i32) -> (i32, i32, i32) {
    %c0_i32 = arith.constant 0 : i32
    %c0_i32_0 = arith.constant 0 : i32
    %c0_i32_1 = arith.constant 0 : i32
    %c0_i32_2 = arith.constant 0 : i32
    return %c0_i32, %c0_i32_0, %c0_i32_1 : i32, i32, i32
  }
  func.func @transform_9(%arg0: i32, %arg1: i32) -> (i32, i32, i32) {
    %c0_i32 = arith.constant 0 : i32
    %c0_i32_0 = arith.constant 0 : i32
    %c0_i32_1 = arith.constant 0 : i32
    %c0_i32_2 = arith.constant 0 : i32
    return %c0_i32, %c0_i32_0, %c0_i32_1 : i32, i32, i32
  }
  func.func @transform_10(%arg0: i32, %arg1: i32) -> (i32, i32) {
    %c0_i32 = arith.constant 0 : i32
    %c0_i32_0 = arith.constant 0 : i32
    %c0_i32_1 = arith.constant 0 : i32
    return %c0_i32, %c0_i32_0 : i32, i32
  }
  func.func @transform_11(%arg0: i32, %arg1: i32) -> (i32, i32) {
    %c0_i32 = arith.constant 0 : i32
    %c0_i32_0 = arith.constant 0 : i32
    %c0_i32_1 = arith.constant 0 : i32
    return %c0_i32, %c0_i32_0 : i32, i32
  }
  func.func @transform_12(%arg0: i32, %arg1: i32) -> (i32, i32) {
    %c0_i32 = arith.constant 0 : i32
    %c0_i32_0 = arith.constant 0 : i32
    %c0_i32_1 = arith.constant 0 : i32
    return %c0_i32, %c0_i32_0 : i32, i32
  }
  func.func @transform_13(%arg0: i32, %arg1: i32) -> (i32, i32, i32) {
    %c0_i32 = arith.constant 0 : i32
    %c0_i32_0 = arith.constant 0 : i32
    return %arg0, %arg1, %c0_i32 : i32, i32, i32
  }
}

module attributes {stable_mosaic.version = 11 : i64} {
  func.func @_talking_head_kernel(%arg0: i32, %arg1: i32, %arg2: memref<1x16x64xbf16, #tpu.memory_space<vmem>>, %arg3: memref<1x32x64xbf16, #tpu.memory_space<vmem>>, %arg4: memref<64x64xbf16, #tpu.memory_space<vmem>>, %arg5: memref<1x64xf32, #tpu.memory_space<vmem>>, %arg6: memref<64x64xbf16, #tpu.memory_space<vmem>>, %arg7: memref<1x64xf32, #tpu.memory_space<vmem>>, %arg8: memref<64x64xbf16, #tpu.memory_space<vmem>>, %arg9: memref<1x64xf32, #tpu.memory_space<vmem>>, %arg10: memref<8x1x64xf32, #tpu.memory_space<vmem>>, %arg11: memref<8x1x64xf32, #tpu.memory_space<vmem>>, %arg12: memref<1x64xf32, #tpu.memory_space<vmem>>, %arg13: memref<64x64xbf16, #tpu.memory_space<vmem>>, %arg14: memref<1x64xf32, #tpu.memory_space<vmem>>, %arg15: memref<1x16x64xf32, #tpu.memory_space<vmem>>, %arg16: memref<32x64xbf16, #tpu.memory_space<vmem>>, %arg17: memref<32x64xbf16, #tpu.memory_space<vmem>>, %arg18: memref<1x64xf32, #tpu.memory_space<vmem>>, %arg19: memref<16x64xf32, #tpu.memory_space<vmem>>) attributes {dimension_semantics = [#tpu.dimension_semantics<parallel>, #tpu.dimension_semantics<arbitrary>], iteration_bounds = array<i64: 2, 2>, scalar_prefetch = 0 : i64, scratch_operands = 4 : i64, tpu.core_type = #tpu.core_type<tc>, window_params = [{transform_indices = @transform_0, window_bounds = array<i64: 1, 16, 64>}, {transform_indices = @transform_1, window_bounds = array<i64: 1, 32, 64>}, {pipeline_mode = #tpu.pipeline_mode<synchronous>, transform_indices = @transform_2, window_bounds = array<i64: 64, 64>}, {pipeline_mode = #tpu.pipeline_mode<synchronous>, transform_indices = @transform_3, window_bounds = array<i64: 1, 64>}, {pipeline_mode = #tpu.pipeline_mode<synchronous>, transform_indices = @transform_4, window_bounds = array<i64: 64, 64>}, {pipeline_mode = #tpu.pipeline_mode<synchronous>, transform_indices = @transform_5, window_bounds = array<i64: 1, 64>}, {pipeline_mode = #tpu.pipeline_mode<synchronous>, transform_indices = @transform_6, window_bounds = array<i64: 64, 64>}, {pipeline_mode = #tpu.pipeline_mode<synchronous>, transform_indices = @transform_7, window_bounds = array<i64: 1, 64>}, {pipeline_mode = #tpu.pipeline_mode<synchronous>, transform_indices = @transform_8, window_bounds = array<i64: 8, 1, 64>}, {pipeline_mode = #tpu.pipeline_mode<synchronous>, transform_indices = @transform_9, window_bounds = array<i64: 8, 1, 64>}, {pipeline_mode = #tpu.pipeline_mode<synchronous>, transform_indices = @transform_10, window_bounds = array<i64: 1, 64>}, {pipeline_mode = #tpu.pipeline_mode<synchronous>, transform_indices = @transform_11, window_bounds = array<i64: 64, 64>}, {pipeline_mode = #tpu.pipeline_mode<synchronous>, transform_indices = @transform_12, window_bounds = array<i64: 1, 64>}, {transform_indices = @transform_13, window_bounds = array<i64: 1, 16, 64>}]} {
    %c0_i32 = arith.constant 0 : i32
    %0 = arith.cmpi eq, %arg1, %c0_i32 : i32
    %1 = arith.extui %0 : i1 to i32
    %c0_i32_0 = arith.constant 0 : i32
    %2 = arith.cmpi ne, %1, %c0_i32_0 : i32
    scf.if %2 {
      %c0_122 = arith.constant 0 : index
      %c0_123 = arith.constant 0 : index
      %c0_124 = arith.constant 0 : index
      %239 = vector.load %arg3[%c0_122, %c0_123, %c0_124] : memref<1x32x64xbf16, #tpu.memory_space<vmem>>, vector<1x32x64xbf16>
      %240 = vector.shape_cast %239 : vector<1x32x64xbf16> to vector<32x64xbf16>
      %c0_125 = arith.constant 0 : index
      %c0_126 = arith.constant 0 : index
      %241 = vector.load %arg6[%c0_125, %c0_126] : memref<64x64xbf16, #tpu.memory_space<vmem>>, vector<64x64xbf16>
      %cst_127 = arith.constant dense<0.000000e+00> : vector<32x64xf32>
      %242 = tpu.matmul %240, %241, %cst_127 {dimension_numbers = #tpu.dot_dimension_numbers<[1], [0], [0], [1], [0, 0, 1, 1], [], []>} : vector<32x64xbf16>, vector<64x64xbf16>, vector<32x64xf32> -> vector<32x64xf32>
      %c0_128 = arith.constant 0 : index
      %c0_129 = arith.constant 0 : index
      %243 = vector.load %arg7[%c0_128, %c0_129] : memref<1x64xf32, #tpu.memory_space<vmem>>, vector<1x64xf32>
      %244 = vector.broadcast %243 : vector<1x64xf32> to vector<32x64xf32>
      %245 = arith.addf %242, %244 : vector<32x64xf32>
      %c0_130 = arith.constant 0 : index
      %c0_131 = arith.constant 0 : index
      %246 = vector.load %arg8[%c0_130, %c0_131] : memref<64x64xbf16, #tpu.memory_space<vmem>>, vector<64x64xbf16>
      %cst_132 = arith.constant dense<0.000000e+00> : vector<32x64xf32>
      %247 = tpu.matmul %240, %246, %cst_132 {dimension_numbers = #tpu.dot_dimension_numbers<[1], [0], [0], [1], [0, 0, 1, 1], [], []>} : vector<32x64xbf16>, vector<64x64xbf16>, vector<32x64xf32> -> vector<32x64xf32>
      %c0_133 = arith.constant 0 : index
      %c0_134 = arith.constant 0 : index
      %248 = vector.load %arg9[%c0_133, %c0_134] : memref<1x64xf32, #tpu.memory_space<vmem>>, vector<1x64xf32>
      %249 = vector.broadcast %248 : vector<1x64xf32> to vector<32x64xf32>
      %250 = arith.addf %247, %249 : vector<32x64xf32>
      %251 = arith.truncf %245 : vector<32x64xf32> to vector<32x64xbf16>
      %c0_135 = arith.constant 0 : index
      %c0_136 = arith.constant 0 : index
      %252 = vector.load %arg16[%c0_135, %c0_136] : memref<32x64xbf16, #tpu.memory_space<vmem>>, vector<32x64xbf16>
      tpu.vector_store %arg16[%c0_135, %c0_136], %251 {strides = array<i32>} : memref<32x64xbf16, #tpu.memory_space<vmem>>, vector<32x64xbf16>,
      %cst_137 = arith.constant dense<0.000000e+00> : vector<64xf32>
      %253 = vector.multi_reduction <add>, %250, %cst_137 [0] : vector<32x64xf32> to vector<64xf32>
      %254 = vector.shape_cast %253 : vector<64xf32> to vector<1x64xf32>
      %c0_138 = arith.constant 0 : index
      %c0_139 = arith.constant 0 : index
      %255 = vector.load %arg18[%c0_138, %c0_139] : memref<1x64xf32, #tpu.memory_space<vmem>>, vector<1x64xf32>
      tpu.vector_store %arg18[%c0_138, %c0_139], %254 {strides = array<i32>} : memref<1x64xf32, #tpu.memory_space<vmem>>, vector<1x64xf32>,
      %256 = arith.truncf %250 : vector<32x64xf32> to vector<32x64xbf16>
      %c0_140 = arith.constant 0 : index
      %c0_141 = arith.constant 0 : index
      %257 = vector.load %arg17[%c0_140, %c0_141] : memref<32x64xbf16, #tpu.memory_space<vmem>>, vector<32x64xbf16>
      tpu.vector_store %arg17[%c0_140, %c0_141], %256 {strides = array<i32>} : memref<32x64xbf16, #tpu.memory_space<vmem>>, vector<32x64xbf16>,
    } else {
    }
    %c0 = arith.constant 0 : index
    %c0_1 = arith.constant 0 : index
    %c0_2 = arith.constant 0 : index
    %3 = vector.load %arg2[%c0, %c0_1, %c0_2] : memref<1x16x64xbf16, #tpu.memory_space<vmem>>, vector<1x16x64xbf16>
    %4 = vector.shape_cast %3 : vector<1x16x64xbf16> to vector<16x64xbf16>
    %c0_3 = arith.constant 0 : index
    %c0_4 = arith.constant 0 : index
    %5 = vector.load %arg4[%c0_3, %c0_4] : memref<64x64xbf16, #tpu.memory_space<vmem>>, vector<64x64xbf16>
    %cst = arith.constant dense<0.000000e+00> : vector<16x64xf32>
    %6 = tpu.matmul %4, %5, %cst {dimension_numbers = #tpu.dot_dimension_numbers<[1], [0], [0], [1], [0, 0, 1, 1], [], []>} : vector<16x64xbf16>, vector<64x64xbf16>, vector<16x64xf32> -> vector<16x64xf32>
    %c0_5 = arith.constant 0 : index
    %c0_6 = arith.constant 0 : index
    %7 = vector.load %arg5[%c0_5, %c0_6] : memref<1x64xf32, #tpu.memory_space<vmem>>, vector<1x64xf32>
    %8 = vector.broadcast %7 : vector<1x64xf32> to vector<16x64xf32>
    %9 = arith.addf %6, %8 : vector<16x64xf32>
    %c0_7 = arith.constant 0 : index
    %c0_8 = arith.constant 0 : index
    %10 = vector.load %arg16[%c0_7, %c0_8] : memref<32x64xbf16, #tpu.memory_space<vmem>>, vector<32x64xbf16>
    %c0_9 = arith.constant 0 : index
    %c0_10 = arith.constant 0 : index
    %11 = vector.load %arg17[%c0_9, %c0_10] : memref<32x64xbf16, #tpu.memory_space<vmem>>, vector<32x64xbf16>
    %c0_11 = arith.constant 0 : index
    %c0_12 = arith.constant 0 : index
    %c0_13 = arith.constant 0 : index
    %12 = vector.load %arg10[%c0_11, %c0_12, %c0_13] : memref<8x1x64xf32, #tpu.memory_space<vmem>>, vector<1x1x64xf32>
    %13 = vector.shape_cast %12 : vector<1x1x64xf32> to vector<1x64xf32>
    %14 = vector.broadcast %13 : vector<1x64xf32> to vector<16x64xf32>
    %15 = arith.mulf %9, %14 : vector<16x64xf32>
    %16 = arith.truncf %15 : vector<16x64xf32> to vector<16x64xbf16>
    %cst_14 = arith.constant dense<0.000000e+00> : vector<16x32xf32>
    %17 = tpu.matmul %16, %10, %cst_14 {dimension_numbers = #tpu.dot_dimension_numbers<[1], [1], [0], [0], [0, 0, 1, 0], [], []>} : vector<16x64xbf16>, vector<32x64xbf16>, vector<16x32xf32> -> vector<16x32xf32>
    %cst_15 = arith.constant dense<0xFF800000> : vector<16xf32>
    %18 = vector.multi_reduction <maximumf>, %17, %cst_15 [1] : vector<16x32xf32> to vector<16xf32>
    %19 = vector.shape_cast %18 : vector<16xf32> to vector<16x1xf32>
    %20 = vector.broadcast %19 : vector<16x1xf32> to vector<16x32xf32>
    %21 = arith.subf %17, %20 : vector<16x32xf32>
    %22 = math.exp %21 : vector<16x32xf32>
    %cst_16 = arith.constant dense<0.000000e+00> : vector<16xf32>
    %23 = vector.multi_reduction <add>, %22, %cst_16 [1] : vector<16x32xf32> to vector<16xf32>
    %24 = vector.shape_cast %23 : vector<16xf32> to vector<16x1xf32>
    %25 = tpu.reciprocal %24 {approx = true} : vector<16x1xf32> -> vector<16x1xf32>
    %26 = arith.truncf %22 : vector<16x32xf32> to vector<16x32xbf16>
    %cst_17 = arith.constant dense<0.000000e+00> : vector<16x64xf32>
    %27 = tpu.matmul %26, %11, %cst_17 {dimension_numbers = #tpu.dot_dimension_numbers<[1], [0], [0], [1], [0, 0, 1, 1], [], []>} : vector<16x32xbf16>, vector<32x64xbf16>, vector<16x64xf32> -> vector<16x64xf32>
    %c0_18 = arith.constant 0 : index
    %c0_19 = arith.constant 0 : index
    %c0_20 = arith.constant 0 : index
    %28 = vector.load %arg11[%c0_18, %c0_19, %c0_20] : memref<8x1x64xf32, #tpu.memory_space<vmem>>, vector<1x1x64xf32>
    %29 = vector.shape_cast %28 : vector<1x1x64xf32> to vector<1x64xf32>
    %30 = vector.broadcast %25 : vector<16x1xf32> to vector<16x64xf32>
    %31 = vector.broadcast %29 : vector<1x64xf32> to vector<16x64xf32>
    %32 = arith.mulf %30, %31 : vector<16x64xf32>
    %33 = arith.mulf %27, %32 : vector<16x64xf32>
    %c0_21 = arith.constant 0 : index
    %c0_22 = arith.constant 0 : index
    %34 = vector.load %arg19[%c0_21, %c0_22] : memref<16x64xf32, #tpu.memory_space<vmem>>, vector<16x64xf32>
    tpu.vector_store %arg19[%c0_21, %c0_22], %33 {strides = array<i32>} : memref<16x64xf32, #tpu.memory_space<vmem>>, vector<16x64xf32>,
    %c1_i32 = arith.constant 1 : i32
    %c0_23 = arith.constant 0 : index
    %c0_24 = arith.constant 0 : index
    %35 = vector.load %arg19[%c0_23, %c0_24] : memref<16x64xf32, #tpu.memory_space<vmem>>, vector<16x64xf32>
    %36 = arith.index_cast %c1_i32 : i32 to index
    %c0_25 = arith.constant 0 : index
    %c0_26 = arith.constant 0 : index
    %37 = vector.load %arg10[%36, %c0_25, %c0_26] : memref<8x1x64xf32, #tpu.memory_space<vmem>>, vector<1x1x64xf32>
    %38 = vector.shape_cast %37 : vector<1x1x64xf32> to vector<1x64xf32>
    %39 = vector.broadcast %38 : vector<1x64xf32> to vector<16x64xf32>
    %40 = arith.mulf %9, %39 : vector<16x64xf32>
    %41 = arith.truncf %40 : vector<16x64xf32> to vector<16x64xbf16>
    %cst_27 = arith.constant dense<0.000000e+00> : vector<16x32xf32>
    %42 = tpu.matmul %41, %10, %cst_27 {dimension_numbers = #tpu.dot_dimension_numbers<[1], [1], [0], [0], [0, 0, 1, 0], [], []>} : vector<16x64xbf16>, vector<32x64xbf16>, vector<16x32xf32> -> vector<16x32xf32>
    %cst_28 = arith.constant dense<0xFF800000> : vector<16xf32>
    %43 = vector.multi_reduction <maximumf>, %42, %cst_28 [1] : vector<16x32xf32> to vector<16xf32>
    %44 = vector.shape_cast %43 : vector<16xf32> to vector<16x1xf32>
    %45 = vector.broadcast %44 : vector<16x1xf32> to vector<16x32xf32>
    %46 = arith.subf %42, %45 : vector<16x32xf32>
    %47 = math.exp %46 : vector<16x32xf32>
    %cst_29 = arith.constant dense<0.000000e+00> : vector<16xf32>
    %48 = vector.multi_reduction <add>, %47, %cst_29 [1] : vector<16x32xf32> to vector<16xf32>
    %49 = vector.shape_cast %48 : vector<16xf32> to vector<16x1xf32>
    %50 = tpu.reciprocal %49 {approx = true} : vector<16x1xf32> -> vector<16x1xf32>
    %51 = arith.truncf %47 : vector<16x32xf32> to vector<16x32xbf16>
    %cst_30 = arith.constant dense<0.000000e+00> : vector<16x64xf32>
    %52 = tpu.matmul %51, %11, %cst_30 {dimension_numbers = #tpu.dot_dimension_numbers<[1], [0], [0], [1], [0, 0, 1, 1], [], []>} : vector<16x32xbf16>, vector<32x64xbf16>, vector<16x64xf32> -> vector<16x64xf32>
    %53 = arith.index_cast %c1_i32 : i32 to index
    %c0_31 = arith.constant 0 : index
    %c0_32 = arith.constant 0 : index
    %54 = vector.load %arg11[%53, %c0_31, %c0_32] : memref<8x1x64xf32, #tpu.memory_space<vmem>>, vector<1x1x64xf32>
    %55 = vector.shape_cast %54 : vector<1x1x64xf32> to vector<1x64xf32>
    %56 = vector.broadcast %50 : vector<16x1xf32> to vector<16x64xf32>
    %57 = vector.broadcast %55 : vector<1x64xf32> to vector<16x64xf32>
    %58 = arith.mulf %56, %57 : vector<16x64xf32>
    %59 = arith.mulf %52, %58 : vector<16x64xf32>
    %60 = arith.addf %35, %59 : vector<16x64xf32>
    %c0_33 = arith.constant 0 : index
    %c0_34 = arith.constant 0 : index
    %61 = vector.load %arg19[%c0_33, %c0_34] : memref<16x64xf32, #tpu.memory_space<vmem>>, vector<16x64xf32>
    tpu.vector_store %arg19[%c0_33, %c0_34], %60 {strides = array<i32>} : memref<16x64xf32, #tpu.memory_space<vmem>>, vector<16x64xf32>,
    %c2_i32 = arith.constant 2 : i32
    %c0_35 = arith.constant 0 : index
    %c0_36 = arith.constant 0 : index
    %62 = vector.load %arg19[%c0_35, %c0_36] : memref<16x64xf32, #tpu.memory_space<vmem>>, vector<16x64xf32>
    %63 = arith.index_cast %c2_i32 : i32 to index
    %c0_37 = arith.constant 0 : index
    %c0_38 = arith.constant 0 : index
    %64 = vector.load %arg10[%63, %c0_37, %c0_38] : memref<8x1x64xf32, #tpu.memory_space<vmem>>, vector<1x1x64xf32>
    %65 = vector.shape_cast %64 : vector<1x1x64xf32> to vector<1x64xf32>
    %66 = vector.broadcast %65 : vector<1x64xf32> to vector<16x64xf32>
    %67 = arith.mulf %9, %66 : vector<16x64xf32>
    %68 = arith.truncf %67 : vector<16x64xf32> to vector<16x64xbf16>
    %cst_39 = arith.constant dense<0.000000e+00> : vector<16x32xf32>
    %69 = tpu.matmul %68, %10, %cst_39 {dimension_numbers = #tpu.dot_dimension_numbers<[1], [1], [0], [0], [0, 0, 1, 0], [], []>} : vector<16x64xbf16>, vector<32x64xbf16>, vector<16x32xf32> -> vector<16x32xf32>
    %cst_40 = arith.constant dense<0xFF800000> : vector<16xf32>
    %70 = vector.multi_reduction <maximumf>, %69, %cst_40 [1] : vector<16x32xf32> to vector<16xf32>
    %71 = vector.shape_cast %70 : vector<16xf32> to vector<16x1xf32>
    %72 = vector.broadcast %71 : vector<16x1xf32> to vector<16x32xf32>
    %73 = arith.subf %69, %72 : vector<16x32xf32>
    %74 = math.exp %73 : vector<16x32xf32>
    %cst_41 = arith.constant dense<0.000000e+00> : vector<16xf32>
    %75 = vector.multi_reduction <add>, %74, %cst_41 [1] : vector<16x32xf32> to vector<16xf32>
    %76 = vector.shape_cast %75 : vector<16xf32> to vector<16x1xf32>
    %77 = tpu.reciprocal %76 {approx = true} : vector<16x1xf32> -> vector<16x1xf32>
    %78 = arith.truncf %74 : vector<16x32xf32> to vector<16x32xbf16>
    %cst_42 = arith.constant dense<0.000000e+00> : vector<16x64xf32>
    %79 = tpu.matmul %78, %11, %cst_42 {dimension_numbers = #tpu.dot_dimension_numbers<[1], [0], [0], [1], [0, 0, 1, 1], [], []>} : vector<16x32xbf16>, vector<32x64xbf16>, vector<16x64xf32> -> vector<16x64xf32>
    %80 = arith.index_cast %c2_i32 : i32 to index
    %c0_43 = arith.constant 0 : index
    %c0_44 = arith.constant 0 : index
    %81 = vector.load %arg11[%80, %c0_43, %c0_44] : memref<8x1x64xf32, #tpu.memory_space<vmem>>, vector<1x1x64xf32>
    %82 = vector.shape_cast %81 : vector<1x1x64xf32> to vector<1x64xf32>
    %83 = vector.broadcast %77 : vector<16x1xf32> to vector<16x64xf32>
    %84 = vector.broadcast %82 : vector<1x64xf32> to vector<16x64xf32>
    %85 = arith.mulf %83, %84 : vector<16x64xf32>
    %86 = arith.mulf %79, %85 : vector<16x64xf32>
    %87 = arith.addf %62, %86 : vector<16x64xf32>
    %c0_45 = arith.constant 0 : index
    %c0_46 = arith.constant 0 : index
    %88 = vector.load %arg19[%c0_45, %c0_46] : memref<16x64xf32, #tpu.memory_space<vmem>>, vector<16x64xf32>
    tpu.vector_store %arg19[%c0_45, %c0_46], %87 {strides = array<i32>} : memref<16x64xf32, #tpu.memory_space<vmem>>, vector<16x64xf32>,
    %c3_i32 = arith.constant 3 : i32
    %c0_47 = arith.constant 0 : index
    %c0_48 = arith.constant 0 : index
    %89 = vector.load %arg19[%c0_47, %c0_48] : memref<16x64xf32, #tpu.memory_space<vmem>>, vector<16x64xf32>
    %90 = arith.index_cast %c3_i32 : i32 to index
    %c0_49 = arith.constant 0 : index
    %c0_50 = arith.constant 0 : index
    %91 = vector.load %arg10[%90, %c0_49, %c0_50] : memref<8x1x64xf32, #tpu.memory_space<vmem>>, vector<1x1x64xf32>
    %92 = vector.shape_cast %91 : vector<1x1x64xf32> to vector<1x64xf32>
    %93 = vector.broadcast %92 : vector<1x64xf32> to vector<16x64xf32>
    %94 = arith.mulf %9, %93 : vector<16x64xf32>
    %95 = arith.truncf %94 : vector<16x64xf32> to vector<16x64xbf16>
    %cst_51 = arith.constant dense<0.000000e+00> : vector<16x32xf32>
    %96 = tpu.matmul %95, %10, %cst_51 {dimension_numbers = #tpu.dot_dimension_numbers<[1], [1], [0], [0], [0, 0, 1, 0], [], []>} : vector<16x64xbf16>, vector<32x64xbf16>, vector<16x32xf32> -> vector<16x32xf32>
    %cst_52 = arith.constant dense<0xFF800000> : vector<16xf32>
    %97 = vector.multi_reduction <maximumf>, %96, %cst_52 [1] : vector<16x32xf32> to vector<16xf32>
    %98 = vector.shape_cast %97 : vector<16xf32> to vector<16x1xf32>
    %99 = vector.broadcast %98 : vector<16x1xf32> to vector<16x32xf32>
    %100 = arith.subf %96, %99 : vector<16x32xf32>
    %101 = math.exp %100 : vector<16x32xf32>
    %cst_53 = arith.constant dense<0.000000e+00> : vector<16xf32>
    %102 = vector.multi_reduction <add>, %101, %cst_53 [1] : vector<16x32xf32> to vector<16xf32>
    %103 = vector.shape_cast %102 : vector<16xf32> to vector<16x1xf32>
    %104 = tpu.reciprocal %103 {approx = true} : vector<16x1xf32> -> vector<16x1xf32>
    %105 = arith.truncf %101 : vector<16x32xf32> to vector<16x32xbf16>
    %cst_54 = arith.constant dense<0.000000e+00> : vector<16x64xf32>
    %106 = tpu.matmul %105, %11, %cst_54 {dimension_numbers = #tpu.dot_dimension_numbers<[1], [0], [0], [1], [0, 0, 1, 1], [], []>} : vector<16x32xbf16>, vector<32x64xbf16>, vector<16x64xf32> -> vector<16x64xf32>
    %107 = arith.index_cast %c3_i32 : i32 to index
    %c0_55 = arith.constant 0 : index
    %c0_56 = arith.constant 0 : index
    %108 = vector.load %arg11[%107, %c0_55, %c0_56] : memref<8x1x64xf32, #tpu.memory_space<vmem>>, vector<1x1x64xf32>
    %109 = vector.shape_cast %108 : vector<1x1x64xf32> to vector<1x64xf32>
    %110 = vector.broadcast %104 : vector<16x1xf32> to vector<16x64xf32>
    %111 = vector.broadcast %109 : vector<1x64xf32> to vector<16x64xf32>
    %112 = arith.mulf %110, %111 : vector<16x64xf32>
    %113 = arith.mulf %106, %112 : vector<16x64xf32>
    %114 = arith.addf %89, %113 : vector<16x64xf32>
    %c0_57 = arith.constant 0 : index
    %c0_58 = arith.constant 0 : index
    %115 = vector.load %arg19[%c0_57, %c0_58] : memref<16x64xf32, #tpu.memory_space<vmem>>, vector<16x64xf32>
    tpu.vector_store %arg19[%c0_57, %c0_58], %114 {strides = array<i32>} : memref<16x64xf32, #tpu.memory_space<vmem>>, vector<16x64xf32>,
    %c4_i32 = arith.constant 4 : i32
    %c0_59 = arith.constant 0 : index
    %c0_60 = arith.constant 0 : index
    %116 = vector.load %arg19[%c0_59, %c0_60] : memref<16x64xf32, #tpu.memory_space<vmem>>, vector<16x64xf32>
    %117 = arith.index_cast %c4_i32 : i32 to index
    %c0_61 = arith.constant 0 : index
    %c0_62 = arith.constant 0 : index
    %118 = vector.load %arg10[%117, %c0_61, %c0_62] : memref<8x1x64xf32, #tpu.memory_space<vmem>>, vector<1x1x64xf32>
    %119 = vector.shape_cast %118 : vector<1x1x64xf32> to vector<1x64xf32>
    %120 = vector.broadcast %119 : vector<1x64xf32> to vector<16x64xf32>
    %121 = arith.mulf %9, %120 : vector<16x64xf32>
    %122 = arith.truncf %121 : vector<16x64xf32> to vector<16x64xbf16>
    %cst_63 = arith.constant dense<0.000000e+00> : vector<16x32xf32>
    %123 = tpu.matmul %122, %10, %cst_63 {dimension_numbers = #tpu.dot_dimension_numbers<[1], [1], [0], [0], [0, 0, 1, 0], [], []>} : vector<16x64xbf16>, vector<32x64xbf16>, vector<16x32xf32> -> vector<16x32xf32>
    %cst_64 = arith.constant dense<0xFF800000> : vector<16xf32>
    %124 = vector.multi_reduction <maximumf>, %123, %cst_64 [1] : vector<16x32xf32> to vector<16xf32>
    %125 = vector.shape_cast %124 : vector<16xf32> to vector<16x1xf32>
    %126 = vector.broadcast %125 : vector<16x1xf32> to vector<16x32xf32>
    %127 = arith.subf %123, %126 : vector<16x32xf32>
    %128 = math.exp %127 : vector<16x32xf32>
    %cst_65 = arith.constant dense<0.000000e+00> : vector<16xf32>
    %129 = vector.multi_reduction <add>, %128, %cst_65 [1] : vector<16x32xf32> to vector<16xf32>
    %130 = vector.shape_cast %129 : vector<16xf32> to vector<16x1xf32>
    %131 = tpu.reciprocal %130 {approx = true} : vector<16x1xf32> -> vector<16x1xf32>
    %132 = arith.truncf %128 : vector<16x32xf32> to vector<16x32xbf16>
    %cst_66 = arith.constant dense<0.000000e+00> : vector<16x64xf32>
    %133 = tpu.matmul %132, %11, %cst_66 {dimension_numbers = #tpu.dot_dimension_numbers<[1], [0], [0], [1], [0, 0, 1, 1], [], []>} : vector<16x32xbf16>, vector<32x64xbf16>, vector<16x64xf32> -> vector<16x64xf32>
    %134 = arith.index_cast %c4_i32 : i32 to index
    %c0_67 = arith.constant 0 : index
    %c0_68 = arith.constant 0 : index
    %135 = vector.load %arg11[%134, %c0_67, %c0_68] : memref<8x1x64xf32, #tpu.memory_space<vmem>>, vector<1x1x64xf32>
    %136 = vector.shape_cast %135 : vector<1x1x64xf32> to vector<1x64xf32>
    %137 = vector.broadcast %131 : vector<16x1xf32> to vector<16x64xf32>
    %138 = vector.broadcast %136 : vector<1x64xf32> to vector<16x64xf32>
    %139 = arith.mulf %137, %138 : vector<16x64xf32>
    %140 = arith.mulf %133, %139 : vector<16x64xf32>
    %141 = arith.addf %116, %140 : vector<16x64xf32>
    %c0_69 = arith.constant 0 : index
    %c0_70 = arith.constant 0 : index
    %142 = vector.load %arg19[%c0_69, %c0_70] : memref<16x64xf32, #tpu.memory_space<vmem>>, vector<16x64xf32>
    tpu.vector_store %arg19[%c0_69, %c0_70], %141 {strides = array<i32>} : memref<16x64xf32, #tpu.memory_space<vmem>>, vector<16x64xf32>,
    %c5_i32 = arith.constant 5 : i32
    %c0_71 = arith.constant 0 : index
    %c0_72 = arith.constant 0 : index
    %143 = vector.load %arg19[%c0_71, %c0_72] : memref<16x64xf32, #tpu.memory_space<vmem>>, vector<16x64xf32>
    %144 = arith.index_cast %c5_i32 : i32 to index
    %c0_73 = arith.constant 0 : index
    %c0_74 = arith.constant 0 : index
    %145 = vector.load %arg10[%144, %c0_73, %c0_74] : memref<8x1x64xf32, #tpu.memory_space<vmem>>, vector<1x1x64xf32>
    %146 = vector.shape_cast %145 : vector<1x1x64xf32> to vector<1x64xf32>
    %147 = vector.broadcast %146 : vector<1x64xf32> to vector<16x64xf32>
    %148 = arith.mulf %9, %147 : vector<16x64xf32>
    %149 = arith.truncf %148 : vector<16x64xf32> to vector<16x64xbf16>
    %cst_75 = arith.constant dense<0.000000e+00> : vector<16x32xf32>
    %150 = tpu.matmul %149, %10, %cst_75 {dimension_numbers = #tpu.dot_dimension_numbers<[1], [1], [0], [0], [0, 0, 1, 0], [], []>} : vector<16x64xbf16>, vector<32x64xbf16>, vector<16x32xf32> -> vector<16x32xf32>
    %cst_76 = arith.constant dense<0xFF800000> : vector<16xf32>
    %151 = vector.multi_reduction <maximumf>, %150, %cst_76 [1] : vector<16x32xf32> to vector<16xf32>
    %152 = vector.shape_cast %151 : vector<16xf32> to vector<16x1xf32>
    %153 = vector.broadcast %152 : vector<16x1xf32> to vector<16x32xf32>
    %154 = arith.subf %150, %153 : vector<16x32xf32>
    %155 = math.exp %154 : vector<16x32xf32>
    %cst_77 = arith.constant dense<0.000000e+00> : vector<16xf32>
    %156 = vector.multi_reduction <add>, %155, %cst_77 [1] : vector<16x32xf32> to vector<16xf32>
    %157 = vector.shape_cast %156 : vector<16xf32> to vector<16x1xf32>
    %158 = tpu.reciprocal %157 {approx = true} : vector<16x1xf32> -> vector<16x1xf32>
    %159 = arith.truncf %155 : vector<16x32xf32> to vector<16x32xbf16>
    %cst_78 = arith.constant dense<0.000000e+00> : vector<16x64xf32>
    %160 = tpu.matmul %159, %11, %cst_78 {dimension_numbers = #tpu.dot_dimension_numbers<[1], [0], [0], [1], [0, 0, 1, 1], [], []>} : vector<16x32xbf16>, vector<32x64xbf16>, vector<16x64xf32> -> vector<16x64xf32>
    %161 = arith.index_cast %c5_i32 : i32 to index
    %c0_79 = arith.constant 0 : index
    %c0_80 = arith.constant 0 : index
    %162 = vector.load %arg11[%161, %c0_79, %c0_80] : memref<8x1x64xf32, #tpu.memory_space<vmem>>, vector<1x1x64xf32>
    %163 = vector.shape_cast %162 : vector<1x1x64xf32> to vector<1x64xf32>
    %164 = vector.broadcast %158 : vector<16x1xf32> to vector<16x64xf32>
    %165 = vector.broadcast %163 : vector<1x64xf32> to vector<16x64xf32>
    %166 = arith.mulf %164, %165 : vector<16x64xf32>
    %167 = arith.mulf %160, %166 : vector<16x64xf32>
    %168 = arith.addf %143, %167 : vector<16x64xf32>
    %c0_81 = arith.constant 0 : index
    %c0_82 = arith.constant 0 : index
    %169 = vector.load %arg19[%c0_81, %c0_82] : memref<16x64xf32, #tpu.memory_space<vmem>>, vector<16x64xf32>
    tpu.vector_store %arg19[%c0_81, %c0_82], %168 {strides = array<i32>} : memref<16x64xf32, #tpu.memory_space<vmem>>, vector<16x64xf32>,
    %c6_i32 = arith.constant 6 : i32
    %c0_83 = arith.constant 0 : index
    %c0_84 = arith.constant 0 : index
    %170 = vector.load %arg19[%c0_83, %c0_84] : memref<16x64xf32, #tpu.memory_space<vmem>>, vector<16x64xf32>
    %171 = arith.index_cast %c6_i32 : i32 to index
    %c0_85 = arith.constant 0 : index
    %c0_86 = arith.constant 0 : index
    %172 = vector.load %arg10[%171, %c0_85, %c0_86] : memref<8x1x64xf32, #tpu.memory_space<vmem>>, vector<1x1x64xf32>
    %173 = vector.shape_cast %172 : vector<1x1x64xf32> to vector<1x64xf32>
    %174 = vector.broadcast %173 : vector<1x64xf32> to vector<16x64xf32>
    %175 = arith.mulf %9, %174 : vector<16x64xf32>
    %176 = arith.truncf %175 : vector<16x64xf32> to vector<16x64xbf16>
    %cst_87 = arith.constant dense<0.000000e+00> : vector<16x32xf32>
    %177 = tpu.matmul %176, %10, %cst_87 {dimension_numbers = #tpu.dot_dimension_numbers<[1], [1], [0], [0], [0, 0, 1, 0], [], []>} : vector<16x64xbf16>, vector<32x64xbf16>, vector<16x32xf32> -> vector<16x32xf32>
    %cst_88 = arith.constant dense<0xFF800000> : vector<16xf32>
    %178 = vector.multi_reduction <maximumf>, %177, %cst_88 [1] : vector<16x32xf32> to vector<16xf32>
    %179 = vector.shape_cast %178 : vector<16xf32> to vector<16x1xf32>
    %180 = vector.broadcast %179 : vector<16x1xf32> to vector<16x32xf32>
    %181 = arith.subf %177, %180 : vector<16x32xf32>
    %182 = math.exp %181 : vector<16x32xf32>
    %cst_89 = arith.constant dense<0.000000e+00> : vector<16xf32>
    %183 = vector.multi_reduction <add>, %182, %cst_89 [1] : vector<16x32xf32> to vector<16xf32>
    %184 = vector.shape_cast %183 : vector<16xf32> to vector<16x1xf32>
    %185 = tpu.reciprocal %184 {approx = true} : vector<16x1xf32> -> vector<16x1xf32>
    %186 = arith.truncf %182 : vector<16x32xf32> to vector<16x32xbf16>
    %cst_90 = arith.constant dense<0.000000e+00> : vector<16x64xf32>
    %187 = tpu.matmul %186, %11, %cst_90 {dimension_numbers = #tpu.dot_dimension_numbers<[1], [0], [0], [1], [0, 0, 1, 1], [], []>} : vector<16x32xbf16>, vector<32x64xbf16>, vector<16x64xf32> -> vector<16x64xf32>
    %188 = arith.index_cast %c6_i32 : i32 to index
    %c0_91 = arith.constant 0 : index
    %c0_92 = arith.constant 0 : index
    %189 = vector.load %arg11[%188, %c0_91, %c0_92] : memref<8x1x64xf32, #tpu.memory_space<vmem>>, vector<1x1x64xf32>
    %190 = vector.shape_cast %189 : vector<1x1x64xf32> to vector<1x64xf32>
    %191 = vector.broadcast %185 : vector<16x1xf32> to vector<16x64xf32>
    %192 = vector.broadcast %190 : vector<1x64xf32> to vector<16x64xf32>
    %193 = arith.mulf %191, %192 : vector<16x64xf32>
    %194 = arith.mulf %187, %193 : vector<16x64xf32>
    %195 = arith.addf %170, %194 : vector<16x64xf32>
    %c0_93 = arith.constant 0 : index
    %c0_94 = arith.constant 0 : index
    %196 = vector.load %arg19[%c0_93, %c0_94] : memref<16x64xf32, #tpu.memory_space<vmem>>, vector<16x64xf32>
    tpu.vector_store %arg19[%c0_93, %c0_94], %195 {strides = array<i32>} : memref<16x64xf32, #tpu.memory_space<vmem>>, vector<16x64xf32>,
    %c7_i32 = arith.constant 7 : i32
    %c0_95 = arith.constant 0 : index
    %c0_96 = arith.constant 0 : index
    %197 = vector.load %arg19[%c0_95, %c0_96] : memref<16x64xf32, #tpu.memory_space<vmem>>, vector<16x64xf32>
    %198 = arith.index_cast %c7_i32 : i32 to index
    %c0_97 = arith.constant 0 : index
    %c0_98 = arith.constant 0 : index
    %199 = vector.load %arg10[%198, %c0_97, %c0_98] : memref<8x1x64xf32, #tpu.memory_space<vmem>>, vector<1x1x64xf32>
    %200 = vector.shape_cast %199 : vector<1x1x64xf32> to vector<1x64xf32>
    %201 = vector.broadcast %200 : vector<1x64xf32> to vector<16x64xf32>
    %202 = arith.mulf %9, %201 : vector<16x64xf32>
    %203 = arith.truncf %202 : vector<16x64xf32> to vector<16x64xbf16>
    %cst_99 = arith.constant dense<0.000000e+00> : vector<16x32xf32>
    %204 = tpu.matmul %203, %10, %cst_99 {dimension_numbers = #tpu.dot_dimension_numbers<[1], [1], [0], [0], [0, 0, 1, 0], [], []>} : vector<16x64xbf16>, vector<32x64xbf16>, vector<16x32xf32> -> vector<16x32xf32>
    %cst_100 = arith.constant dense<0xFF800000> : vector<16xf32>
    %205 = vector.multi_reduction <maximumf>, %204, %cst_100 [1] : vector<16x32xf32> to vector<16xf32>
    %206 = vector.shape_cast %205 : vector<16xf32> to vector<16x1xf32>
    %207 = vector.broadcast %206 : vector<16x1xf32> to vector<16x32xf32>
    %208 = arith.subf %204, %207 : vector<16x32xf32>
    %209 = math.exp %208 : vector<16x32xf32>
    %cst_101 = arith.constant dense<0.000000e+00> : vector<16xf32>
    %210 = vector.multi_reduction <add>, %209, %cst_101 [1] : vector<16x32xf32> to vector<16xf32>
    %211 = vector.shape_cast %210 : vector<16xf32> to vector<16x1xf32>
    %212 = tpu.reciprocal %211 {approx = true} : vector<16x1xf32> -> vector<16x1xf32>
    %213 = arith.truncf %209 : vector<16x32xf32> to vector<16x32xbf16>
    %cst_102 = arith.constant dense<0.000000e+00> : vector<16x64xf32>
    %214 = tpu.matmul %213, %11, %cst_102 {dimension_numbers = #tpu.dot_dimension_numbers<[1], [0], [0], [1], [0, 0, 1, 1], [], []>} : vector<16x32xbf16>, vector<32x64xbf16>, vector<16x64xf32> -> vector<16x64xf32>
    %215 = arith.index_cast %c7_i32 : i32 to index
    %c0_103 = arith.constant 0 : index
    %c0_104 = arith.constant 0 : index
    %216 = vector.load %arg11[%215, %c0_103, %c0_104] : memref<8x1x64xf32, #tpu.memory_space<vmem>>, vector<1x1x64xf32>
    %217 = vector.shape_cast %216 : vector<1x1x64xf32> to vector<1x64xf32>
    %218 = vector.broadcast %212 : vector<16x1xf32> to vector<16x64xf32>
    %219 = vector.broadcast %217 : vector<1x64xf32> to vector<16x64xf32>
    %220 = arith.mulf %218, %219 : vector<16x64xf32>
    %221 = arith.mulf %214, %220 : vector<16x64xf32>
    %222 = arith.addf %197, %221 : vector<16x64xf32>
    %c0_105 = arith.constant 0 : index
    %c0_106 = arith.constant 0 : index
    %223 = vector.load %arg19[%c0_105, %c0_106] : memref<16x64xf32, #tpu.memory_space<vmem>>, vector<16x64xf32>
    tpu.vector_store %arg19[%c0_105, %c0_106], %222 {strides = array<i32>} : memref<16x64xf32, #tpu.memory_space<vmem>>, vector<16x64xf32>,
    %c7_i32_107 = arith.constant 7 : i32
    %c0_108 = arith.constant 0 : index
    %c0_109 = arith.constant 0 : index
    %224 = vector.load %arg19[%c0_108, %c0_109] : memref<16x64xf32, #tpu.memory_space<vmem>>, vector<16x64xf32>
    %c0_110 = arith.constant 0 : index
    %c0_111 = arith.constant 0 : index
    %225 = vector.load %arg12[%c0_110, %c0_111] : memref<1x64xf32, #tpu.memory_space<vmem>>, vector<1x64xf32>
    %c0_112 = arith.constant 0 : index
    %c0_113 = arith.constant 0 : index
    %226 = vector.load %arg18[%c0_112, %c0_113] : memref<1x64xf32, #tpu.memory_space<vmem>>, vector<1x64xf32>
    %227 = arith.mulf %225, %226 : vector<1x64xf32>
    %228 = vector.broadcast %227 : vector<1x64xf32> to vector<16x64xf32>
    %229 = arith.addf %224, %228 : vector<16x64xf32>
    %230 = arith.truncf %229 : vector<16x64xf32> to vector<16x64xbf16>
    %c0_114 = arith.constant 0 : index
    %c0_115 = arith.constant 0 : index
    %231 = vector.load %arg13[%c0_114, %c0_115] : memref<64x64xbf16, #tpu.memory_space<vmem>>, vector<64x64xbf16>
    %cst_116 = arith.constant dense<0.000000e+00> : vector<16x64xf32>
    %232 = tpu.matmul %230, %231, %cst_116 {dimension_numbers = #tpu.dot_dimension_numbers<[1], [0], [0], [1], [0, 0, 1, 1], [], []>} : vector<16x64xbf16>, vector<64x64xbf16>, vector<16x64xf32> -> vector<16x64xf32>
    %c0_117 = arith.constant 0 : index
    %c0_118 = arith.constant 0 : index
    %233 = vector.load %arg14[%c0_117, %c0_118] : memref<1x64xf32, #tpu.memory_space<vmem>>, vector<1x64xf32>
    %234 = vector.broadcast %233 : vector<1x64xf32> to vector<16x64xf32>
    %235 = arith.addf %232, %234 : vector<16x64xf32>
    %c0_119 = arith.constant 0 : index
    %c0_120 = arith.constant 0 : index
    %c0_121 = arith.constant 0 : index
    %236 = vector.load %arg15[%c0_119, %c0_120, %c0_121] : memref<1x16x64xf32, #tpu.memory_space<vmem>>, vector<1x16x64xf32>
    %237 = vector.shape_cast %236 : vector<1x16x64xf32> to vector<16x64xf32>
    %238 = vector.shape_cast %235 : vector<16x64xf32> to vector<1x16x64xf32>
    tpu.vector_store %arg15[%c0_119, %c0_120, %c0_121], %238 {strides = array<i32>} : memref<1x16x64xf32, #tpu.memory_space<vmem>>, vector<1x16x64xf32>,
    return
  }
  func.func @transform_0(%arg0: i32, %arg1: i32) -> (i32, i32, i32) {
    %c0_i32 = arith.constant 0 : i32
    %c0_i32_0 = arith.constant 0 : i32
    return %arg0, %arg1, %c0_i32 : i32, i32, i32
  }
  func.func @transform_1(%arg0: i32, %arg1: i32) -> (i32, i32, i32) {
    %c0_i32 = arith.constant 0 : i32
    %c0_i32_0 = arith.constant 0 : i32
    %c0_i32_1 = arith.constant 0 : i32
    return %arg0, %c0_i32, %c0_i32_0 : i32, i32, i32
  }
  func.func @transform_2(%arg0: i32, %arg1: i32) -> (i32, i32) {
    %c0_i32 = arith.constant 0 : i32
    %c0_i32_0 = arith.constant 0 : i32
    %c0_i32_1 = arith.constant 0 : i32
    return %c0_i32, %c0_i32_0 : i32, i32
  }
  func.func @transform_3(%arg0: i32, %arg1: i32) -> (i32, i32) {
    %c0_i32 = arith.constant 0 : i32
    %c0_i32_0 = arith.constant 0 : i32
    %c0_i32_1 = arith.constant 0 : i32
    return %c0_i32, %c0_i32_0 : i32, i32
  }
  func.func @transform_4(%arg0: i32, %arg1: i32) -> (i32, i32) {
    %c0_i32 = arith.constant 0 : i32
    %c0_i32_0 = arith.constant 0 : i32
    %c0_i32_1 = arith.constant 0 : i32
    return %c0_i32, %c0_i32_0 : i32, i32
  }
  func.func @transform_5(%arg0: i32, %arg1: i32) -> (i32, i32) {
    %c0_i32 = arith.constant 0 : i32
    %c0_i32_0 = arith.constant 0 : i32
    %c0_i32_1 = arith.constant 0 : i32
    return %c0_i32, %c0_i32_0 : i32, i32
  }
  func.func @transform_6(%arg0: i32, %arg1: i32) -> (i32, i32) {
    %c0_i32 = arith.constant 0 : i32
    %c0_i32_0 = arith.constant 0 : i32
    %c0_i32_1 = arith.constant 0 : i32
    return %c0_i32, %c0_i32_0 : i32, i32
  }
  func.func @transform_7(%arg0: i32, %arg1: i32) -> (i32, i32) {
    %c0_i32 = arith.constant 0 : i32
    %c0_i32_0 = arith.constant 0 : i32
    %c0_i32_1 = arith.constant 0 : i32
    return %c0_i32, %c0_i32_0 : i32, i32
  }
  func.func @transform_8(%arg0: i32, %arg1: i32) -> (i32, i32, i32) {
    %c0_i32 = arith.constant 0 : i32
    %c0_i32_0 = arith.constant 0 : i32
    %c0_i32_1 = arith.constant 0 : i32
    %c0_i32_2 = arith.constant 0 : i32
    return %c0_i32, %c0_i32_0, %c0_i32_1 : i32, i32, i32
  }
  func.func @transform_9(%arg0: i32, %arg1: i32) -> (i32, i32, i32) {
    %c0_i32 = arith.constant 0 : i32
    %c0_i32_0 = arith.constant 0 : i32
    %c0_i32_1 = arith.constant 0 : i32
    %c0_i32_2 = arith.constant 0 : i32
    return %c0_i32, %c0_i32_0, %c0_i32_1 : i32, i32, i32
  }
  func.func @transform_10(%arg0: i32, %arg1: i32) -> (i32, i32) {
    %c0_i32 = arith.constant 0 : i32
    %c0_i32_0 = arith.constant 0 : i32
    %c0_i32_1 = arith.constant 0 : i32
    return %c0_i32, %c0_i32_0 : i32, i32
  }
  func.func @transform_11(%arg0: i32, %arg1: i32) -> (i32, i32) {
    %c0_i32 = arith.constant 0 : i32
    %c0_i32_0 = arith.constant 0 : i32
    %c0_i32_1 = arith.constant 0 : i32
    return %c0_i32, %c0_i32_0 : i32, i32
  }
  func.func @transform_12(%arg0: i32, %arg1: i32) -> (i32, i32) {
    %c0_i32 = arith.constant 0 : i32
    %c0_i32_0 = arith.constant 0 : i32
    %c0_i32_1 = arith.constant 0 : i32
    return %c0_i32, %c0_i32_0 : i32, i32
  }
  func.func @transform_13(%arg0: i32, %arg1: i32) -> (i32, i32, i32) {
    %c0_i32 = arith.constant 0 : i32
    %c0_i32_0 = arith.constant 0 : i32
    return %arg0, %arg1, %c0_i32 : i32, i32, i32
  }
}

</mosaic_0001>

<llo_original>
// kernel: tpu_custom_call.1
$region0: #{tpu_custom_call.1}
  #allocation0 [shape = 'u32[]', space=smem, size = 0x4, offset = 0x4, fixed_abs, tag = 'smem constant byte address 0x4 - core index']
  #allocation1 [shape = 'u32[144,128]{1,0:T(1,128)}', space=vmem, size = 0x12000, scoped, tag = 'internal scratch']
  #allocation2 [shape = 'bf16[32,64]{1,0:T(8,128)(2,1)}', space=vmem, size = 0x2000, scoped, tag = 'scratch operand']
  #allocation3 [shape = 'bf16[32,64]{1,0:T(8,128)(2,1)}', space=vmem, size = 0x2000, scoped, tag = 'scratch operand']
  #allocation4 [shape = 'f32[1,64]{1,0:T(1,128)}', space=vmem, size = 0x200, scoped, tag = 'scratch operand']
  #allocation5 [shape = 'f32[16,64]{1,0:T(8,128)}', space=vmem, size = 0x2000, scoped, tag = 'scratch operand']
  %s0 = inlined_call_operand.hbm [shape: bf16[2,32,64], index: 0, kind: input, shape index: {}]
  %s1 = inlined_call_operand.hbm [shape: bf16[2,32,64], index: 1, kind: input, shape index: {}]
  %s2 = inlined_call_operand.hbm [shape: bf16[64,64], index: 2, kind: input, shape index: {}]
  %s3 = inlined_call_operand.hbm [shape: f32[1,64], index: 3, kind: input, shape index: {}]
  %s4 = inlined_call_operand.hbm [shape: bf16[64,64], index: 4, kind: input, shape index: {}]
  %s5 = inlined_call_operand.hbm [shape: f32[1,64], index: 5, kind: input, shape index: {}]
  %s6 = inlined_call_operand.hbm [shape: bf16[64,64], index: 6, kind: input, shape index: {}]
  %s7 = inlined_call_operand.hbm [shape: f32[1,64], index: 7, kind: input, shape index: {}]
  %s8 = inlined_call_operand.vmem [shape: f32[8,1,64], index: 8, kind: input, shape index: {}]
  %s9 = inlined_call_operand.vmem [shape: f32[8,1,64], index: 9, kind: input, shape index: {}]
  %s10 = inlined_call_operand.vmem [shape: f32[1,64], index: 10, kind: input, shape index: {}]
  %s11 = inlined_call_operand.hbm [shape: bf16[64,64], index: 11, kind: input, shape index: {}]
  %s12 = inlined_call_operand.vmem [shape: f32[1,64], index: 12, kind: input, shape index: {}]
  %s13 = inlined_call_operand.hbm [shape: f32[2,32,64], index: 13, kind: output, shape index: {}]
  %s14 = sld [smem:[#allocation0]]
  $region125: #{tpu_custom_call.1} parent=0
    _
  %s16 = ssub.s32 1, %s14
  %s17 = scalar_select 0, %s16, %s14
  $region1: #{tpu_custom_call.1} parent=0
    #allocation6 [shape = 'u8[8192]{0}', space=vmem, size = 0x2000, scoped, tag = 'input window, operand 0']
    #allocation7 [shape = 's32[2]{0}', space=sflag, size = 0x8, scoped, tag = 'scoped memory for tpu_custom_call.1']
    #allocation8 [shape = 's32[2]{0}', space=sflag, size = 0x8, scoped, tag = 'scoped memory for tpu_custom_call.1']
    #allocation9 [shape = 'u8[16384]{0}', space=vmem, size = 0x4000, scoped, tag = 'input window, operand 1']
    #allocation10 [shape = 's32[2]{0}', space=sflag, size = 0x8, scoped, tag = 'scoped memory for tpu_custom_call.1']
    #allocation11 [shape = 'u8[16384]{0}', space=vmem, size = 0x4000, scoped, tag = 'input window, operand 2, single buffered']
    #allocation12 [shape = 'u8[512]{0}', space=vmem, size = 0x400, scoped, tag = 'input window, operand 3, single buffered']
    #allocation13 [shape = 's32[1]{0}', space=sflag, size = 0x4, scoped, tag = 'scoped memory for tpu_custom_call.1']
    #allocation14 [shape = 'u8[16384]{0}', space=vmem, size = 0x4000, scoped, tag = 'input window, operand 4, single buffered']
    #allocation15 [shape = 'u8[512]{0}', space=vmem, size = 0x400, scoped, tag = 'input window, operand 5, single buffered']
    #allocation16 [shape = 's32[1]{0}', space=sflag, size = 0x4, scoped, tag = 'scoped memory for tpu_custom_call.1']
    #allocation17 [shape = 'u8[16384]{0}', space=vmem, size = 0x4000, scoped, tag = 'input window, operand 6, single buffered']
    #allocation18 [shape = 'u8[512]{0}', space=vmem, size = 0x400, scoped, tag = 'input window, operand 7, single buffered']
    #allocation19 [shape = 's32[1]{0}', space=sflag, size = 0x4, scoped, tag = 'scoped memory for tpu_custom_call.1']
    #allocation20 [shape = 'u8[16384]{0}', space=vmem, size = 0x4000, scoped, tag = 'input window, operand 11, single buffered']
    #allocation21 [shape = 'u8[16384]{0}', space=vmem, size = 0x4000, scoped, tag = 'output window, operand 0']
    %18 = vsyncpa [#allocation7], 0
    %s19 = scalar_lea.sflag [#allocation7], 1
    %20 = vsyncpa %s19, 0
    %21 = vsyncpa [#allocation10], 0
    %s22 = scalar_lea.sflag [#allocation10], 1
    %23 = vsyncpa %s22, 0
    %24 = vsyncpa [#allocation13], 0
    %25 = vsyncpa [#allocation16], 0
    %26 = vsyncpa [#allocation19], 0
    %27 = vsyncpa [#allocation8], 0
    %s28 = scalar_lea.sflag [#allocation8], 1
    %29 = vsyncpa %s28, 0
    loop: start=0, step=1, limit=6
    $region2: #{tpu_custom_call.1} parent=1 // loop_pre_header
      _
    $region3: #{tpu_custom_call.1} parent=1 // loop_header
      %s31 = sphi 0, %s35
      %p32 = scmp.ge.s32.totalorder %s31, 6
      %s38 = sphi 0, %s50
      %s39 = sphi 0, %s46
      %s40 = sphi 0, %s38
      %s41 = sphi 0, %s39
      %s42 = sphi 0, %s40
      %s43 = sphi 0, %s41
      %s55 = sphi 0, %s57
      %s58 = sphi 0, %s55
      %s59 = sphi 0, %s58
      %s75 = sphi 0, %s59
      %s81 = sphi 0, %s83
      %s84 = sphi 0, %s81
      %s85 = sphi 0, %s84
      %s101 = sphi 0, %s85
      %s105 = sphi 0, %s105
      %s107 = sphi 0, %s105
      %s108 = sphi 0, %s107
      %s122 = sphi 0, %s108
      %s126 = sphi 0, %s126
      %s128 = sphi 0, %s126
      %s129 = sphi 0, %s128
      %s143 = sphi 0, %s129
      %s147 = sphi 0, %s147
      %s149 = sphi 0, %s147
      %s150 = sphi 0, %s149
      %s164 = sphi 0, %s150
      %s168 = sphi 0, %s168
      %s170 = sphi 0, %s168
      %s171 = sphi 0, %s170
      %s185 = sphi 0, %s171
      %s189 = sphi 0, %s189
      %s191 = sphi 0, %s189
      %s192 = sphi 0, %s191
      %s206 = sphi 0, %s192
      %s210 = sphi 0, %s210
      %s212 = sphi 0, %s210
      %s213 = sphi 0, %s212
      %s227 = sphi 0, %s213
      %s231 = sphi 0, %s231
      %s233 = sphi 0, %s231
      %s234 = sphi 0, %s233
      %s248 = sphi 0, %s234
      %s252 = sphi 0, %s252
      %s254 = sphi 0, %s252
      %s255 = sphi 0, %s254
      %s269 = sphi 0, %s255
      %s273 = sphi 0, %s273
      %s275 = sphi 0, %s273
      %s276 = sphi 0, %s275
      %s290 = sphi 0, %s276
      %s294 = sphi 0, %s294
      %s296 = sphi 0, %s294
      %s297 = sphi 0, %s296
      %s311 = sphi 0, %s297
      %s315 = sphi 0, %s315
      %s317 = sphi 0, %s315
      %s318 = sphi 0, %s317
      %s332 = sphi 0, %s318
      %s340 = sphi 0, %s342
      %s343 = sphi 0, %s340
      %s344 = sphi 0, %s343
      %s360 = sphi 0, %s344
    $region4: #{tpu_custom_call.1} parent=1 // loop_header_branch
      %34 = sbr.rel (%p32) target = $region8
    $region5: #{tpu_custom_call.1} parent=1 // loop_body
      %s36 = ssub.s32 %s31, 1
      %s37 = ssub.s32 %s31, 2
      %s44 = sadd.s32 1, %s39
      %p45 = scmp.ge.s32.totalorder %s44, 2
      %s46 = scalar_select %p45, 0, %s44
      %s47 = sadd.s32 1, %s38
      %s48 = scalar_select %p45, %s47, %s38
      %p49 = scmp.ge.s32.totalorder %s48, 2
      %s50 = scalar_select %p49, 0, %s48
      %s51 = ssub.s32 %s38, %s50
      %s52 = ssub.s32 %s39, %s46
      %s53 = sor.u32 %s51, %s52
      %p54 = scmp.eq.s32.totalorder %s53, 0
      %s56 = sadd.s32 %s55, 1
      %s57 = scalar_select %p54, %s55, %s56
      %p60 = pneg %p54
      %p61 = scmp.eq.s32.totalorder %s31, 3
      %p62 = por %p60, %p61
      %p63 = scmp.ne.s32.totalorder %s55, %s58
      %p64 = scmp.eq.s32.totalorder %s31, 0
      %p65 = por %p63, %p64
      %p66 = scmp.ne.s32.totalorder %s55, %s58
      %p67 = scmp.eq.s32.totalorder %s36, 3
      %p68 = por %p66, %p67
      %p69 = scmp.ne.s32.totalorder %s58, %s59
      %p70 = scmp.eq.s32.totalorder %s36, 0
      %p71 = por %p69, %p70
      %p72 = scmp.ne.s32.totalorder %s58, %s59
      %p73 = scmp.eq.s32.totalorder %s37, 3
      %p74 = por %p72, %p73
      %p76 = scmp.ne.s32.totalorder %s59, %s75
      %p77 = scmp.eq.s32.totalorder %s37, 0
      %p78 = por %p76, %p77
      %s79 = ssub.s32 %s38, %s50
      %p80 = scmp.eq.s32.totalorder %s79, 0
      %s82 = sadd.s32 %s81, 1
      %s83 = scalar_select %p80, %s81, %s82
      %p86 = pneg %p80
      %p87 = scmp.eq.s32.totalorder %s31, 3
      %p88 = por %p86, %p87
      %p89 = scmp.ne.s32.totalorder %s81, %s84
      %p90 = scmp.eq.s32.totalorder %s31, 0
      %p91 = por %p89, %p90
      %p92 = scmp.ne.s32.totalorder %s81, %s84
      %p93 = scmp.eq.s32.totalorder %s36, 3
      %p94 = por %p92, %p93
      %p95 = scmp.ne.s32.totalorder %s84, %s85
      %p96 = scmp.eq.s32.totalorder %s36, 0
      %p97 = por %p95, %p96
      %p98 = scmp.ne.s32.totalorder %s84, %s85
      %p99 = scmp.eq.s32.totalorder %s37, 3
      %p100 = por %p98, %p99
      %p102 = scmp.ne.s32.totalorder %s85, %s101
      %p103 = scmp.eq.s32.totalorder %s37, 0
      %p104 = por %p102, %p103
      %s106 = sadd.s32 %s105, 1
      %p109 = scmp.eq.s32.totalorder %s31, 3
      %p110 = scmp.ne.s32.totalorder %s105, %s107
      %p111 = scmp.eq.s32.totalorder %s31, 0
      %p112 = por %p110, %p111
      %p113 = scmp.ne.s32.totalorder %s105, %s107
      %p114 = scmp.eq.s32.totalorder %s36, 3
      %p115 = por %p113, %p114
      %p116 = scmp.ne.s32.totalorder %s107, %s108
      %p117 = scmp.eq.s32.totalorder %s36, 0
      %p118 = por %p116, %p117
      %p119 = scmp.ne.s32.totalorder %s107, %s108
      %p120 = scmp.eq.s32.totalorder %s37, 3
      %p121 = por %p119, %p120
      %p123 = scmp.ne.s32.totalorder %s108, %s122
      %p124 = scmp.eq.s32.totalorder %s37, 0
      %p125 = por %p123, %p124
      %s127 = sadd.s32 %s126, 1
      %p130 = scmp.eq.s32.totalorder %s31, 3
      %p131 = scmp.ne.s32.totalorder %s126, %s128
      %p132 = scmp.eq.s32.totalorder %s31, 0
      %p133 = por %p131, %p132
      %p134 = scmp.ne.s32.totalorder %s126, %s128
      %p135 = scmp.eq.s32.totalorder %s36, 3
      %p136 = por %p134, %p135
      %p137 = scmp.ne.s32.totalorder %s128, %s129
      %p138 = scmp.eq.s32.totalorder %s36, 0
      %p139 = por %p137, %p138
      %p140 = scmp.ne.s32.totalorder %s128, %s129
      %p141 = scmp.eq.s32.totalorder %s37, 3
      %p142 = por %p140, %p141
      %p144 = scmp.ne.s32.totalorder %s129, %s143
      %p145 = scmp.eq.s32.totalorder %s37, 0
      %p146 = por %p144, %p145
      %s148 = sadd.s32 %s147, 1
      %p151 = scmp.eq.s32.totalorder %s31, 3
      %p152 = scmp.ne.s32.totalorder %s147, %s149
      %p153 = scmp.eq.s32.totalorder %s31, 0
      %p154 = por %p152, %p153
      %p155 = scmp.ne.s32.totalorder %s147, %s149
      %p156 = scmp.eq.s32.totalorder %s36, 3
      %p157 = por %p155, %p156
      %p158 = scmp.ne.s32.totalorder %s149, %s150
      %p159 = scmp.eq.s32.totalorder %s36, 0
      %p160 = por %p158, %p159
      %p161 = scmp.ne.s32.totalorder %s149, %s150
      %p162 = scmp.eq.s32.totalorder %s37, 3
      %p163 = por %p161, %p162
      %p165 = scmp.ne.s32.totalorder %s150, %s164
      %p166 = scmp.eq.s32.totalorder %s37, 0
      %p167 = por %p165, %p166
      %s169 = sadd.s32 %s168, 1
      %p172 = scmp.eq.s32.totalorder %s31, 3
      %p173 = scmp.ne.s32.totalorder %s168, %s170
      %p174 = scmp.eq.s32.totalorder %s31, 0
      %p175 = por %p173, %p174
      %p176 = scmp.ne.s32.totalorder %s168, %s170
      %p177 = scmp.eq.s32.totalorder %s36, 3
      %p178 = por %p176, %p177
      %p179 = scmp.ne.s32.totalorder %s170, %s171
      %p180 = scmp.eq.s32.totalorder %s36, 0
      %p181 = por %p179, %p180
      %p182 = scmp.ne.s32.totalorder %s170, %s171
      %p183 = scmp.eq.s32.totalorder %s37, 3
      %p184 = por %p182, %p183
      %p186 = scmp.ne.s32.totalorder %s171, %s185
      %p187 = scmp.eq.s32.totalorder %s37, 0
      %p188 = por %p186, %p187
      %s190 = sadd.s32 %s189, 1
      %p193 = scmp.eq.s32.totalorder %s31, 3
      %p194 = scmp.ne.s32.totalorder %s189, %s191
      %p195 = scmp.eq.s32.totalorder %s31, 0
      %p196 = por %p194, %p195
      %p197 = scmp.ne.s32.totalorder %s189, %s191
      %p198 = scmp.eq.s32.totalorder %s36, 3
      %p199 = por %p197, %p198
      %p200 = scmp.ne.s32.totalorder %s191, %s192
      %p201 = scmp.eq.s32.totalorder %s36, 0
      %p202 = por %p200, %p201
      %p203 = scmp.ne.s32.totalorder %s191, %s192
      %p204 = scmp.eq.s32.totalorder %s37, 3
      %p205 = por %p203, %p204
      %p207 = scmp.ne.s32.totalorder %s192, %s206
      %p208 = scmp.eq.s32.totalorder %s37, 0
      %p209 = por %p207, %p208
      %s211 = sadd.s32 %s210, 1
      %p214 = scmp.eq.s32.totalorder %s31, 3
      %p215 = scmp.ne.s32.totalorder %s210, %s212
      %p216 = scmp.eq.s32.totalorder %s31, 0
      %p217 = por %p215, %p216
      %p218 = scmp.ne.s32.totalorder %s210, %s212
      %p219 = scmp.eq.s32.totalorder %s36, 3
      %p220 = por %p218, %p219
      %p221 = scmp.ne.s32.totalorder %s212, %s213
      %p222 = scmp.eq.s32.totalorder %s36, 0
      %p223 = por %p221, %p222
      %p224 = scmp.ne.s32.totalorder %s212, %s213
      %p225 = scmp.eq.s32.totalorder %s37, 3
      %p226 = por %p224, %p225
      %p228 = scmp.ne.s32.totalorder %s213, %s227
      %p229 = scmp.eq.s32.totalorder %s37, 0
      %p230 = por %p228, %p229
      %s232 = sadd.s32 %s231, 1
      %p235 = scmp.eq.s32.totalorder %s31, 3
      %p236 = scmp.ne.s32.totalorder %s231, %s233
      %p237 = scmp.eq.s32.totalorder %s31, 0
      %p238 = por %p236, %p237
      %p239 = scmp.ne.s32.totalorder %s231, %s233
      %p240 = scmp.eq.s32.totalorder %s36, 3
      %p241 = por %p239, %p240
      %p242 = scmp.ne.s32.totalorder %s233, %s234
      %p243 = scmp.eq.s32.totalorder %s36, 0
      %p244 = por %p242, %p243
      %p245 = scmp.ne.s32.totalorder %s233, %s234
      %p246 = scmp.eq.s32.totalorder %s37, 3
      %p247 = por %p245, %p246
      %p249 = scmp.ne.s32.totalorder %s234, %s248
      %p250 = scmp.eq.s32.totalorder %s37, 0
      %p251 = por %p249, %p250
      %s253 = sadd.s32 %s252, 1
      %p256 = scmp.eq.s32.totalorder %s31, 3
      %p257 = scmp.ne.s32.totalorder %s252, %s254
      %p258 = scmp.eq.s32.totalorder %s31, 0
      %p259 = por %p257, %p258
      %p260 = scmp.ne.s32.totalorder %s252, %s254
      %p261 = scmp.eq.s32.totalorder %s36, 3
      %p262 = por %p260, %p261
      %p263 = scmp.ne.s32.totalorder %s254, %s255
      %p264 = scmp.eq.s32.totalorder %s36, 0
      %p265 = por %p263, %p264
      %p266 = scmp.ne.s32.totalorder %s254, %s255
      %p267 = scmp.eq.s32.totalorder %s37, 3
      %p268 = por %p266, %p267
      %p270 = scmp.ne.s32.totalorder %s255, %s269
      %p271 = scmp.eq.s32.totalorder %s37, 0
      %p272 = por %p270, %p271
      %s274 = sadd.s32 %s273, 1
      %p277 = scmp.eq.s32.totalorder %s31, 3
      %p278 = scmp.ne.s32.totalorder %s273, %s275
      %p279 = scmp.eq.s32.totalorder %s31, 0
      %p280 = por %p278, %p279
      %p281 = scmp.ne.s32.totalorder %s273, %s275
      %p282 = scmp.eq.s32.totalorder %s36, 3
      %p283 = por %p281, %p282
      %p284 = scmp.ne.s32.totalorder %s275, %s276
      %p285 = scmp.eq.s32.totalorder %s36, 0
      %p286 = por %p284, %p285
      %p287 = scmp.ne.s32.totalorder %s275, %s276
      %p288 = scmp.eq.s32.totalorder %s37, 3
      %p289 = por %p287, %p288
      %p291 = scmp.ne.s32.totalorder %s276, %s290
      %p292 = scmp.eq.s32.totalorder %s37, 0
      %p293 = por %p291, %p292
      %s295 = sadd.s32 %s294, 1
      %p298 = scmp.eq.s32.totalorder %s31, 3
      %p299 = scmp.ne.s32.totalorder %s294, %s296
      %p300 = scmp.eq.s32.totalorder %s31, 0
      %p301 = por %p299, %p300
      %p302 = scmp.ne.s32.totalorder %s294, %s296
      %p303 = scmp.eq.s32.totalorder %s36, 3
      %p304 = por %p302, %p303
      %p305 = scmp.ne.s32.totalorder %s296, %s297
      %p306 = scmp.eq.s32.totalorder %s36, 0
      %p307 = por %p305, %p306
      %p308 = scmp.ne.s32.totalorder %s296, %s297
      %p309 = scmp.eq.s32.totalorder %s37, 3
      %p310 = por %p308, %p309
      %p312 = scmp.ne.s32.totalorder %s297, %s311
      %p313 = scmp.eq.s32.totalorder %s37, 0
      %p314 = por %p312, %p313
      %s316 = sadd.s32 %s315, 1
      %p319 = scmp.eq.s32.totalorder %s31, 3
      %p320 = scmp.ne.s32.totalorder %s315, %s317
      %p321 = scmp.eq.s32.totalorder %s31, 0
      %p322 = por %p320, %p321
      %p323 = scmp.ne.s32.totalorder %s315, %s317
      %p324 = scmp.eq.s32.totalorder %s36, 3
      %p325 = por %p323, %p324
      %p326 = scmp.ne.s32.totalorder %s317, %s318
      %p327 = scmp.eq.s32.totalorder %s36, 0
      %p328 = por %p326, %p327
      %p329 = scmp.ne.s32.totalorder %s317, %s318
      %p330 = scmp.eq.s32.totalorder %s37, 3
      %p331 = por %p329, %p330
      %p333 = scmp.ne.s32.totalorder %s318, %s332
      %p334 = scmp.eq.s32.totalorder %s37, 0
      %p335 = por %p333, %p334
      %s336 = ssub.s32 %s38, %s50
      %s337 = ssub.s32 %s39, %s46
      %s338 = sor.u32 %s336, %s337
      %p339 = scmp.eq.s32.totalorder %s338, 0
      %s341 = sadd.s32 %s340, 1
      %s342 = scalar_select %p339, %s340, %s341
      %p345 = pneg %p339
      %p346 = scmp.eq.s32.totalorder %s31, 3
      %p347 = por %p345, %p346
      %p348 = scmp.ne.s32.totalorder %s340, %s343
      %p349 = scmp.eq.s32.totalorder %s31, 0
      %p350 = por %p348, %p349
      %p351 = scmp.ne.s32.totalorder %s340, %s343
      %p352 = scmp.eq.s32.totalorder %s36, 3
      %p353 = por %p351, %p352
      %p354 = scmp.ne.s32.totalorder %s343, %s344
      %p355 = scmp.eq.s32.totalorder %s36, 0
      %p356 = por %p354, %p355
      %p357 = scmp.ne.s32.totalorder %s343, %s344
      %p358 = scmp.eq.s32.totalorder %s37, 3
      %p359 = por %p357, %p358
      %p361 = scmp.ne.s32.totalorder %s344, %s360
      %p362 = scmp.eq.s32.totalorder %s37, 0
      %p363 = por %p361, %p362
      %p364 = scmp.le.s32.totalorder 1, %s31
      %p365 = scmp.lt.s32.totalorder %s31, 5
      %p366 = pnand %p364, %p365
      %p367 = pneg %p366
      // Predicated region
      $region9: #{tpu_custom_call.1} parent=5 // pred_check
        _
      $region10: #{tpu_custom_call.1} parent=5 // pred_check_branch
        %369 = sbr.rel (%p366) target = $region12
      $region11: #{tpu_custom_call.1} parent=5 // pred_region
        %s370 = ssub.s32 %s31, 1
        // Predicated region
        $region13: #{tpu_custom_call.1} parent=11 // pred_check
          %p371 = pneg %p118
        $region14: #{tpu_custom_call.1} parent=11 // pred_check_branch
          %373 = sbr.rel (%p371) target = $region16
        $region15: #{tpu_custom_call.1} parent=11 // pred_region
          %s375 = ssub.s32 512, 512
          %376 = vsyncadd [#allocation10], %s375
          %s377 = sshll.u32 [#allocation11], 4
          %s378 = int_to_ptr.vmem [resolvable:$true] %s377
          %383 = dma.hbm_to_vmem [thread:$0]  %s2, 512, %s378, [#allocation10], 64, 64, 4
        $region16: #{tpu_custom_call.1} parent=11 // pred_fallthru
          _
        // Predicated region
        $region17: #{tpu_custom_call.1} parent=11 // pred_check
          %p384 = pneg %p139
        $region18: #{tpu_custom_call.1} parent=11 // pred_check_branch
          %386 = sbr.rel (%p384) target = $region20
        $region19: #{tpu_custom_call.1} parent=11 // pred_region
          %s388 = ssub.s32 16, 16
          %389 = vsyncadd [#allocation13], %s388
          %s391 = sshll.u32 [#allocation12], 4
          %s392 = int_to_ptr.vmem [resolvable:$true] %s391
          %394 = dma.hbm_to_vmem [thread:$0]  %s3, 16, %s392, [#allocation13]
        $region20: #{tpu_custom_call.1} parent=11 // pred_fallthru
          _
        // Predicated region
        $region21: #{tpu_custom_call.1} parent=11 // pred_check
          %p395 = pneg %p160
        $region22: #{tpu_custom_call.1} parent=11 // pred_check_branch
          %397 = sbr.rel (%p395) target = $region24
        $region23: #{tpu_custom_call.1} parent=11 // pred_region
          %s399 = ssub.s32 512, 512
          %400 = vsyncadd [#allocation13], %s399
          %s401 = sshll.u32 [#allocation14], 4
          %s402 = int_to_ptr.vmem [resolvable:$true] %s401
          %407 = dma.hbm_to_vmem [thread:$0]  %s4, 512, %s402, [#allocation13], 64, 64, 4
        $region24: #{tpu_custom_call.1} parent=11 // pred_fallthru
          _
        // Predicated region
        $region25: #{tpu_custom_call.1} parent=11 // pred_check
          %p408 = pneg %p181
        $region26: #{tpu_custom_call.1} parent=11 // pred_check_branch
          %410 = sbr.rel (%p408) target = $region28
        $region27: #{tpu_custom_call.1} parent=11 // pred_region
          %s412 = ssub.s32 16, 16
          %413 = vsyncadd [#allocation16], %s412
          %s415 = sshll.u32 [#allocation15], 4
          %s416 = int_to_ptr.vmem [resolvable:$true] %s415
          %418 = dma.hbm_to_vmem [thread:$0]  %s5, 16, %s416, [#allocation16]
        $region28: #{tpu_custom_call.1} parent=11 // pred_fallthru
          _
        // Predicated region
        $region29: #{tpu_custom_call.1} parent=11 // pred_check
          %p419 = pneg %p202
        $region30: #{tpu_custom_call.1} parent=11 // pred_check_branch
          %421 = sbr.rel (%p419) target = $region32
        $region31: #{tpu_custom_call.1} parent=11 // pred_region
          %s423 = ssub.s32 512, 512
          %424 = vsyncadd [#allocation16], %s423
          %s425 = sshll.u32 [#allocation17], 4
          %s426 = int_to_ptr.vmem [resolvable:$true] %s425
          %431 = dma.hbm_to_vmem [thread:$0]  %s6, 512, %s426, [#allocation16], 64, 64, 4
        $region32: #{tpu_custom_call.1} parent=11 // pred_fallthru
          _
        // Predicated region
        $region33: #{tpu_custom_call.1} parent=11 // pred_check
          %p432 = pneg %p223
        $region34: #{tpu_custom_call.1} parent=11 // pred_check_branch
          %434 = sbr.rel (%p432) target = $region36
        $region35: #{tpu_custom_call.1} parent=11 // pred_region
          %s436 = ssub.s32 16, 16
          %437 = vsyncadd [#allocation19], %s436
          %s439 = sshll.u32 [#allocation18], 4
          %s440 = int_to_ptr.vmem [resolvable:$true] %s439
          %442 = dma.hbm_to_vmem [thread:$0]  %s7, 16, %s440, [#allocation19]
        $region36: #{tpu_custom_call.1} parent=11 // pred_fallthru
          _
        // Predicated region
        $region37: #{tpu_custom_call.1} parent=11 // pred_check
          %p443 = pneg %p244
        $region38: #{tpu_custom_call.1} parent=11 // pred_check_branch
          %445 = sbr.rel (%p443) target = $region40
        $region39: #{tpu_custom_call.1} parent=11 // pred_region
          _
        $region40: #{tpu_custom_call.1} parent=11 // pred_fallthru
          _
        // Predicated region
        $region41: #{tpu_custom_call.1} parent=11 // pred_check
          %p446 = pneg %p265
        $region42: #{tpu_custom_call.1} parent=11 // pred_check_branch
          %448 = sbr.rel (%p446) target = $region44
        $region43: #{tpu_custom_call.1} parent=11 // pred_region
          _
        $region44: #{tpu_custom_call.1} parent=11 // pred_fallthru
          _
        // Predicated region
        $region45: #{tpu_custom_call.1} parent=11 // pred_check
          %p449 = pneg %p286
        $region46: #{tpu_custom_call.1} parent=11 // pred_check_branch
          %451 = sbr.rel (%p449) target = $region48
        $region47: #{tpu_custom_call.1} parent=11 // pred_region
          _
        $region48: #{tpu_custom_call.1} parent=11 // pred_fallthru
          _
        // Predicated region
        $region49: #{tpu_custom_call.1} parent=11 // pred_check
          %p452 = pneg %p307
        $region50: #{tpu_custom_call.1} parent=11 // pred_check_branch
          %454 = sbr.rel (%p452) target = $region52
        $region51: #{tpu_custom_call.1} parent=11 // pred_region
          %s456 = ssub.s32 512, 512
          %457 = vsyncadd [#allocation19], %s456
          %s458 = sshll.u32 [#allocation20], 4
          %s459 = int_to_ptr.vmem [resolvable:$true] %s458
          %464 = dma.hbm_to_vmem [thread:$0]  %s11, 512, %s459, [#allocation19], 64, 64, 4
        $region52: #{tpu_custom_call.1} parent=11 // pred_fallthru
          _
        // Predicated region
        $region53: #{tpu_custom_call.1} parent=11 // pred_check
          %p465 = pneg %p328
        $region54: #{tpu_custom_call.1} parent=11 // pred_check_branch
          %467 = sbr.rel (%p465) target = $region56
        $region55: #{tpu_custom_call.1} parent=11 // pred_region
          _
        $region56: #{tpu_custom_call.1} parent=11 // pred_fallthru
          _
      $region12: #{tpu_custom_call.1} parent=5 // pred_fallthru
        _
      %p468 = scmp.lt.s32.totalorder %s31, 4
      // Predicated region
      $region57: #{tpu_custom_call.1} parent=5 // pred_check
        %p469 = pneg %p468
      $region58: #{tpu_custom_call.1} parent=5 // pred_check_branch
        %471 = sbr.rel (%p469) target = $region60
      $region59: #{tpu_custom_call.1} parent=5 // pred_region
        // Predicated region
        $region61: #{tpu_custom_call.1} parent=59 // pred_check
          %p472 = pneg %p65
        $region62: #{tpu_custom_call.1} parent=59 // pred_check_branch
          %474 = sbr.rel (%p472) target = $region64
        $region63: #{tpu_custom_call.1} parent=59 // pred_region
          %s475 = sand.u32 %s55, 1
          %s476 = scalar_lea.sflag [#allocation7], %s475
          %s477 = sand.u32 %s55, 1
          %s478 = smul.addr %s477, 8
          %s479 = scalar_lea.vmem [#allocation6], %s478
          %s480 = smul.u32 2, %s39
          %s482 = ssub.s32 128, 128
          %483 = vsyncadd %s476, %s482
          %s484 = smul.addr %s38, 4
          %s485 = sadd.s32 %s480, %s484
          %s486 = smul.addr %s485, 64
          %s487 = scalar_lea.hbm %s0, %s486
          %s488 = sshll.u32 %s479, 4
          %s489 = int_to_ptr.vmem [resolvable:$true] %s488
          %494 = dma.hbm_to_vmem [thread:$0]  %s487, 128, %s489, %s476, 64, 64, 4
        $region64: #{tpu_custom_call.1} parent=59 // pred_fallthru
          _
        // Predicated region
        $region65: #{tpu_custom_call.1} parent=59 // pred_check
          %p495 = pneg %p91
        $region66: #{tpu_custom_call.1} parent=59 // pred_check_branch
          %497 = sbr.rel (%p495) target = $region68
        $region67: #{tpu_custom_call.1} parent=59 // pred_region
          %s498 = sand.u32 %s31, 1
          %s499 = scalar_lea.sflag [#allocation10], %s498
          %s500 = sand.u32 %s81, 1
          %s501 = smul.addr %s500, 16
          %s502 = scalar_lea.vmem [#allocation9], %s501
          %s504 = ssub.s32 256, 256
          %505 = vsyncadd %s499, %s504
          %s506 = smul.addr %s38, 4
          %s507 = smul.addr %s506, 64
          %s508 = scalar_lea.hbm %s1, %s507
          %s509 = sshll.u32 %s502, 4
          %s510 = int_to_ptr.vmem [resolvable:$true] %s509
          %515 = dma.hbm_to_vmem [thread:$0]  %s508, 256, %s510, %s499, 64, 64, 4
        $region68: #{tpu_custom_call.1} parent=59 // pred_fallthru
          _
      $region60: #{tpu_custom_call.1} parent=5 // pred_fallthru
        _
      %p516 = scmp.le.s32.totalorder 1, %s31
      %p517 = scmp.lt.s32.totalorder %s31, 5
      %p518 = pnand %p516, %p517
      %p519 = pneg %p518
      // Predicated region
      $region69: #{tpu_custom_call.1} parent=5 // pred_check
        _
      $region70: #{tpu_custom_call.1} parent=5 // pred_check_branch
        %521 = sbr.rel (%p518) target = $region72
      $region71: #{tpu_custom_call.1} parent=5 // pred_region
        %s522 = ssub.s32 %s31, 1
        %s523 = sand.u32 %s58, 1
        %s524 = scalar_lea.sflag [#allocation7], %s523
        %s525 = sand.u32 %s58, 1
        %s526 = smul.addr %s525, 8
        %s527 = scalar_lea.vmem [#allocation6], %s526
        // Predicated region
        $region73: #{tpu_custom_call.1} parent=71 // pred_check
          %p528 = pneg %p71
        $region74: #{tpu_custom_call.1} parent=71 // pred_check_branch
          %530 = sbr.rel (%p528) target = $region76
        $region75: #{tpu_custom_call.1} parent=71 // pred_region
          %531 = dma.done %s524, 128
        $region76: #{tpu_custom_call.1} parent=71 // pred_fallthru
          _
        %s532 = sand.u32 %s36, 1
        %s533 = scalar_lea.sflag [#allocation10], %s532
        %s534 = sand.u32 %s84, 1
        %s535 = smul.addr %s534, 16
        %s536 = scalar_lea.vmem [#allocation9], %s535
        // Predicated region
        $region77: #{tpu_custom_call.1} parent=71 // pred_check
          %p537 = pneg %p97
        $region78: #{tpu_custom_call.1} parent=71 // pred_check_branch
          %539 = sbr.rel (%p537) target = $region80
        $region79: #{tpu_custom_call.1} parent=71 // pred_region
          %540 = dma.done %s533, 256
        $region80: #{tpu_custom_call.1} parent=71 // pred_fallthru
          _
        // Predicated region
        $region81: #{tpu_custom_call.1} parent=71 // pred_check
          %p541 = pneg %p118
        $region82: #{tpu_custom_call.1} parent=71 // pred_check_branch
          %543 = sbr.rel (%p541) target = $region84
        $region83: #{tpu_custom_call.1} parent=71 // pred_region
          %544 = dma.done [#allocation10], 512
        $region84: #{tpu_custom_call.1} parent=71 // pred_fallthru
          _
        // Predicated region
        $region85: #{tpu_custom_call.1} parent=71 // pred_check
          %p545 = pneg %p139
        $region86: #{tpu_custom_call.1} parent=71 // pred_check_branch
          %547 = sbr.rel (%p545) target = $region88
        $region87: #{tpu_custom_call.1} parent=71 // pred_region
          %548 = dma.done [#allocation13], 16
        $region88: #{tpu_custom_call.1} parent=71 // pred_fallthru
          _
        // Predicated region
        $region89: #{tpu_custom_call.1} parent=71 // pred_check
          %p549 = pneg %p160
        $region90: #{tpu_custom_call.1} parent=71 // pred_check_branch
          %551 = sbr.rel (%p549) target = $region92
        $region91: #{tpu_custom_call.1} parent=71 // pred_region
          %552 = dma.done [#allocation13], 512
        $region92: #{tpu_custom_call.1} parent=71 // pred_fallthru
          _
        // Predicated region
        $region93: #{tpu_custom_call.1} parent=71 // pred_check
          %p553 = pneg %p181
        $region94: #{tpu_custom_call.1} parent=71 // pred_check_branch
          %555 = sbr.rel (%p553) target = $region96
        $region95: #{tpu_custom_call.1} parent=71 // pred_region
          %556 = dma.done [#allocation16], 16
        $region96: #{tpu_custom_call.1} parent=71 // pred_fallthru
          _
        // Predicated region
        $region97: #{tpu_custom_call.1} parent=71 // pred_check
          %p557 = pneg %p202
        $region98: #{tpu_custom_call.1} parent=71 // pred_check_branch
          %559 = sbr.rel (%p557) target = $region100
        $region99: #{tpu_custom_call.1} parent=71 // pred_region
          %560 = dma.done [#allocation16], 512
        $region100: #{tpu_custom_call.1} parent=71 // pred_fallthru
          _
        // Predicated region
        $region101: #{tpu_custom_call.1} parent=71 // pred_check
          %p561 = pneg %p223
        $region102: #{tpu_custom_call.1} parent=71 // pred_check_branch
          %563 = sbr.rel (%p561) target = $region104
        $region103: #{tpu_custom_call.1} parent=71 // pred_region
          %564 = dma.done [#allocation19], 16
        $region104: #{tpu_custom_call.1} parent=71 // pred_fallthru
          _
        // Predicated region
        $region105: #{tpu_custom_call.1} parent=71 // pred_check
          %p565 = pneg %p307
        $region106: #{tpu_custom_call.1} parent=71 // pred_check_branch
          %567 = sbr.rel (%p565) target = $region108
        $region107: #{tpu_custom_call.1} parent=71 // pred_region
          %568 = dma.done [#allocation19], 512
        $region108: #{tpu_custom_call.1} parent=71 // pred_fallthru
          _
        %s569 = sand.u32 %s58, 1
        %s570 = scalar_lea.sflag [#allocation7], %s569
        %s571 = sand.u32 %s58, 1
        %s572 = smul.addr %s571, 8
        %s573 = scalar_lea.vmem [#allocation6], %s572
        %p574 = pneg %p71
        %p575 = pneg %p68
        %s576 = sand.u32 %s36, 1
        %s577 = scalar_lea.sflag [#allocation10], %s576
        %s578 = sand.u32 %s84, 1
        %s579 = smul.addr %s578, 16
        %s580 = scalar_lea.vmem [#allocation9], %s579
        %p581 = pneg %p97
        %p582 = pneg %p94
        %p583 = pneg %p118
        %p584 = pneg %p115
        %p585 = pneg %p139
        %p586 = pneg %p136
        %p587 = pneg %p160
        %p588 = pneg %p157
        %p589 = pneg %p181
        %p590 = pneg %p178
        %p591 = pneg %p202
        %p592 = pneg %p199
        %p593 = pneg %p223
        %p594 = pneg %p220
        %p595 = pneg %p244
        %p596 = pneg %p241
        %p597 = pneg %p265
        %p598 = pneg %p262
        %p599 = pneg %p286
        %p600 = pneg %p283
        %p601 = pneg %p307
        %p602 = pneg %p304
        %p603 = pneg %p328
        %p604 = pneg %p325
        %p605 = pneg %p356
        %p606 = pneg %p353
        %s607 = sand.u32 %s343, 1
        %s608 = scalar_lea.sflag [#allocation8], %s607
        %s609 = sand.u32 %s343, 1
        %s610 = smul.addr %s609, 16
        %s611 = scalar_lea.vmem [#allocation21], %s610
        %s612 = smul.u32 2, %s41
        %s613 = smul.u32 2, %s41
        %p615 = scmp.eq.s32.totalorder %s41, 0
        // Predicated region
        $region109: #{tpu_custom_call.1} parent=71 // pred_check
          %p616 = pneg %p615
        $region110: #{tpu_custom_call.1} parent=71 // pred_check_branch
          %618 = sbr.rel (%p616) target = $region112
        $region111: #{tpu_custom_call.1} parent=71 // pred_region
          %v619 = vld [vmem:[%s536] sm:$0xf]
          %v620 = vld [vmem:[%s536 + $0x4] sm:$0xf]
          %v621 = vld [vmem:[%s536 + $0x8] sm:$0xf]
          %v622 = vld [vmem:[%s536 + $0xc] sm:$0xf]
          %v623 = vld [vmem:[#allocation14] sm:$0xf]
          %v624 = vld [vmem:[#allocation14 + $0x4] sm:$0xf]
          %v625 = vld [vmem:[#allocation14 + $0x8] sm:$0xf]
          %v626 = vld [vmem:[#allocation14 + $0xc] sm:$0xf]
          %v627 = vld [vmem:[#allocation14 + $0x10] sm:$0xf]
          %v628 = vld [vmem:[#allocation14 + $0x14] sm:$0xf]
          %v629 = vld [vmem:[#allocation14 + $0x18] sm:$0xf]
          %v630 = vld [vmem:[#allocation14 + $0x1c] sm:$0xf]
          %v631 = vld [vmem:[#allocation15] sm:$0x1]
          %v633 = vlaneseq
          %v634 = vshrl.u32 %v633, 7
          %v635 = vsub.s32 0, %v634
          %v636 = vrot.slane %v631, %v635
          %v642 = vunpack.c.l.b16 %v619
          %v643 = vunpack.c.l.b16 %v620
          %v644 = vunpack.c.l.b16 %v621
          %v645 = vunpack.c.l.b16 %v622
          %v646 = vpack.c.b16 %v643, %v642
          %v647 = vpack.c.b16 %v645, %v644
          %v656 = vunpack.c.l.b16 %v623
          %v657 = vunpack.c.l.b16 %v624
          %v658 = vunpack.c.l.b16 %v625
          %v659 = vunpack.c.l.b16 %v626
          %v660 = vunpack.c.l.b16 %v627
          %v661 = vunpack.c.l.b16 %v628
          %v662 = vunpack.c.l.b16 %v629
          %v663 = vunpack.c.l.b16 %v630
          %v664 = vpack.c.b16 %v657, %v656
          %v665 = vpack.c.b16 %v659, %v658
          %v666 = vpack.c.b16 %v661, %v660
          %v667 = vpack.c.b16 %v663, %v662
          %vm672 = vcmask 523264
          %v674 = vsel %vm672, %v646, 0
          %v677 = vsel %vm672, %v647, 0
          %679 = vmatprep.subr.bf16.mxu0 0
          %680 = vmatpush1.bf16.msra.mxu0 0
          %681 = vmatprep.subr.bf16.mxu0 0
          %682 = vmatpush1.bf16.msra.mxu0 0
          %683 = vmatprep.subr.bf16.mxu0 0
          %684 = vmatpush1.bf16.msra.mxu0 0
          %685 = vmatprep.subr.bf16.mxu0 0
          %686 = vmatpush1.bf16.msra.mxu0 0
          %687 = vmatprep.subr.bf16.mxu0 0
          %688 = vmatpush1.bf16.msra.mxu0 %v667
          %689 = vmatprep.subr.bf16.mxu0 0
          %690 = vmatpush1.bf16.msra.mxu0 %v666
          %691 = vmatprep.subr.bf16.mxu0 0
          %692 = vmatpush1.bf16.msra.mxu0 %v665
          %693 = vmatprep.subr.bf16.mxu0 0
          %694 = vmatpush1.bf16.msra.mxu0 %v664
          %695 = vmatprep.subr.bf16.mxu0 0
          %696 = vmatpush2.bf16.msra.mxu0 0
          %697 = vmatprep.subr.bf16.mxu0 0
          %698 = vmatpush2.bf16.msra.mxu0 0
          %699 = vmatprep.subr.bf16.mxu0 0
          %700 = vmatpush2.bf16.msra.mxu0 0
          %701 = vmatprep.subr.bf16.mxu0 0
          %702 = vmatpush2.bf16.msra.mxu0 0
          %703 = vmatprep.subr.bf16.mxu0 0
          %704 = vmatpush2.bf16.msra.mxu0 0
          %705 = vmatprep.subr.bf16.mxu0 0
          %706 = vmatpush2.bf16.msra.mxu0 0
          %707 = vmatprep.subr.bf16.mxu0 0
          %708 = vmatpush2.bf16.msra.mxu0 0
          %709 = vmatprep.subr.bf16.mxu0 0
          %710 = vmatpush2.bf16.msra.mxu0 0
          %711 = vmatprep.mubr.bf16.mxu0 0
          %712 = vmatmul.mubr.bf16.gmra.mxu0 %v674
          %v713 = vpop.f32.mrf.mxu0
          %v714 = vadd.f32 %v636, %v713
          %v715 = vpop.f32.mrf.mxu0
          %v716 = vpop.f32.mrf.mxu0
          %v717 = vadd.f32 %v636, %v716
          %v718 = vpop.f32.mrf.mxu0
          %719 = vmatprep.mubr.bf16.mxu0 0
          %720 = vmatmul.mubr.bf16.gmra.mxu0 %v677
          %v721 = vpop.f32.mrf.mxu0
          %v722 = vadd.f32 %v636, %v721
          %v723 = vpop.f32.mrf.mxu0
          %v724 = vpop.f32.mrf.mxu0
          %v725 = vadd.f32 %v636, %v724
          %v726 = vpop.f32.mrf.mxu0
          %727 = vdwg.mxu0
          %v728 = vld [vmem:[#allocation17] sm:$0xf]
          %v729 = vld [vmem:[#allocation17 + $0x4] sm:$0xf]
          %v730 = vld [vmem:[#allocation17 + $0x8] sm:$0xf]
          %v731 = vld [vmem:[#allocation17 + $0xc] sm:$0xf]
          %v732 = vld [vmem:[#allocation17 + $0x10] sm:$0xf]
          %v733 = vld [vmem:[#allocation17 + $0x14] sm:$0xf]
          %v734 = vld [vmem:[#allocation17 + $0x18] sm:$0xf]
          %v735 = vld [vmem:[#allocation17 + $0x1c] sm:$0xf]
          %v736 = vld [vmem:[#allocation18] sm:$0x1]
          %v738 = vlaneseq
          %v739 = vshrl.u32 %v738, 7
          %v740 = vsub.s32 0, %v739
          %v741 = vrot.slane %v736, %v740
          %v751 = vunpack.c.l.b16 %v728
          %v752 = vunpack.c.l.b16 %v729
          %v753 = vunpack.c.l.b16 %v730
          %v754 = vunpack.c.l.b16 %v731
          %v755 = vunpack.c.l.b16 %v732
          %v756 = vunpack.c.l.b16 %v733
          %v757 = vunpack.c.l.b16 %v734
          %v758 = vunpack.c.l.b16 %v735
          %v759 = vpack.c.b16 %v752, %v751
          %v760 = vpack.c.b16 %v754, %v753
          %v761 = vpack.c.b16 %v756, %v755
          %v762 = vpack.c.b16 %v758, %v757
          %767 = vmatprep.subr.bf16.mxu0 0
          %768 = vmatpush1.bf16.msra.mxu0 0
          %769 = vmatprep.subr.bf16.mxu0 0
          %770 = vmatpush1.bf16.msra.mxu0 0
          %771 = vmatprep.subr.bf16.mxu0 0
          %772 = vmatpush1.bf16.msra.mxu0 0
          %773 = vmatprep.subr.bf16.mxu0 0
          %774 = vmatpush1.bf16.msra.mxu0 0
          %775 = vmatprep.subr.bf16.mxu0 0
          %776 = vmatpush1.bf16.msra.mxu0 %v762
          %777 = vmatprep.subr.bf16.mxu0 0
          %778 = vmatpush1.bf16.msra.mxu0 %v761
          %779 = vmatprep.subr.bf16.mxu0 0
          %780 = vmatpush1.bf16.msra.mxu0 %v760
          %781 = vmatprep.subr.bf16.mxu0 0
          %782 = vmatpush1.bf16.msra.mxu0 %v759
          %783 = vmatprep.subr.bf16.mxu0 0
          %784 = vmatpush2.bf16.msra.mxu0 0
          %785 = vmatprep.subr.bf16.mxu0 0
          %786 = vmatpush2.bf16.msra.mxu0 0
          %787 = vmatprep.subr.bf16.mxu0 0
          %788 = vmatpush2.bf16.msra.mxu0 0
          %789 = vmatprep.subr.bf16.mxu0 0
          %790 = vmatpush2.bf16.msra.mxu0 0
          %791 = vmatprep.subr.bf16.mxu0 0
          %792 = vmatpush2.bf16.msra.mxu0 0
          %793 = vmatprep.subr.bf16.mxu0 0
          %794 = vmatpush2.bf16.msra.mxu0 0
          %795 = vmatprep.subr.bf16.mxu0 0
          %796 = vmatpush2.bf16.msra.mxu0 0
          %797 = vmatprep.subr.bf16.mxu0 0
          %798 = vmatpush2.bf16.msra.mxu0 0
          %799 = vmatprep.mubr.bf16.mxu0 0
          %800 = vmatmul.mubr.bf16.gmra.mxu0 %v674
          %v801 = vpop.f32.mrf.mxu0
          %v802 = vadd.f32 %v741, %v801
          %v803 = vpop.f32.mrf.mxu0
          %v804 = vpop.f32.mrf.mxu0
          %v805 = vadd.f32 %v741, %v804
          %v806 = vpop.f32.mrf.mxu0
          %807 = vmatprep.mubr.bf16.mxu0 0
          %808 = vmatmul.mubr.bf16.gmra.mxu0 %v677
          %v809 = vpop.f32.mrf.mxu0
          %v810 = vadd.f32 %v741, %v809
          %v811 = vpop.f32.mrf.mxu0
          %v812 = vpop.f32.mrf.mxu0
          %v813 = vadd.f32 %v741, %v812
          %v814 = vpop.f32.mrf.mxu0
          %815 = vdwg.mxu0
          %v816 = vpack.c.bf16 %v717, %v714
          %v817 = vpack.c.bf16 %v725, %v722
          %v820 = vunpack.c.l.b16 %v816
          %v821 = vunpack.c.h.b16 %v816
          %v822 = vunpack.c.l.b16 %v817
          %v823 = vunpack.c.h.b16 %v817
          %v824 = vpack.c.b16 %v820, %v820
          %v825 = vpack.c.b16 %v821, %v821
          %v826 = vpack.c.b16 %v822, %v822
          %v827 = vpack.c.b16 %v823, %v823
          %vm832 = vcmask 519168
          %833 = vst.msk [vmem:[#allocation2] sm:$0xf] %vm832, %v824
          %834 = vst.msk [vmem:[#allocation2 + $0x4] sm:$0xf] %vm832, %v825
          %835 = vst.msk [vmem:[#allocation2 + $0x8] sm:$0xf] %vm832, %v826
          %836 = vst.msk [vmem:[#allocation2 + $0xc] sm:$0xf] %vm832, %v827
          %v837 = vsel %vm672, %v802, 0.0
          %v838 = vsel %vm672, %v805, 0.0
          %v839 = vadd.f32 %v837, %v838
          %v840 = vsel %vm672, %v810, 0.0
          %v841 = vadd.f32 %v839, %v840
          %v842 = vsel %vm672, %v813, 0.0
          %v843 = vadd.f32 %v841, %v842
          %v844 = vrot.slane %v843, 4
          %v845 = vadd.f32 %v843, %v844
          %v846 = vrot.slane %v845, 2
          %v847 = vadd.f32 %v845, %v846
          %v848 = vrot.slane %v847, 1
          %v849 = vadd.f32 %v847, %v848
          %vm850 = vcmask 516096
          %851 = vst.msk [vmem:[#allocation4] sm:$0x1] %vm850, %v849
          %v852 = vpack.c.bf16 %v805, %v802
          %v853 = vpack.c.bf16 %v813, %v810
          %v856 = vunpack.c.l.b16 %v852
          %v857 = vunpack.c.h.b16 %v852
          %v858 = vunpack.c.l.b16 %v853
          %v859 = vunpack.c.h.b16 %v853
          %v860 = vpack.c.b16 %v856, %v856
          %v861 = vpack.c.b16 %v857, %v857
          %v862 = vpack.c.b16 %v858, %v858
          %v863 = vpack.c.b16 %v859, %v859
          %868 = vst.msk [vmem:[#allocation3] sm:$0xf] %vm832, %v860
          %869 = vst.msk [vmem:[#allocation3 + $0x4] sm:$0xf] %vm832, %v861
          %870 = vst.msk [vmem:[#allocation3 + $0x8] sm:$0xf] %vm832, %v862
          %871 = vst.msk [vmem:[#allocation3 + $0xc] sm:$0xf] %vm832, %v863
        $region112: #{tpu_custom_call.1} parent=71 // pred_fallthru
          _
        %v872 = vld [vmem:[%s527] sm:$0xf]
        %v873 = vld [vmem:[%s527 + $0x4] sm:$0xf]
        %v874 = vld [vmem:[#allocation11] sm:$0xf]
        %v875 = vld [vmem:[#allocation11 + $0x4] sm:$0xf]
        %v876 = vld [vmem:[#allocation11 + $0x8] sm:$0xf]
        %v877 = vld [vmem:[#allocation11 + $0xc] sm:$0xf]
        %v878 = vld [vmem:[#allocation11 + $0x10] sm:$0xf]
        %v879 = vld [vmem:[#allocation11 + $0x14] sm:$0xf]
        %v880 = vld [vmem:[#allocation11 + $0x18] sm:$0xf]
        %v881 = vld [vmem:[#allocation11 + $0x1c] sm:$0xf]
        %v882 = vld [vmem:[#allocation12] sm:$0x1]
        %v884 = vlaneseq
        %v885 = vshrl.u32 %v884, 7
        %v886 = vsub.s32 0, %v885
        %v887 = vrot.slane %v882, %v886
        %v891 = vunpack.c.l.b16 %v872
        %v892 = vunpack.c.l.b16 %v873
        %v893 = vpack.c.b16 %v892, %v891
        %v902 = vunpack.c.l.b16 %v874
        %v903 = vunpack.c.l.b16 %v875
        %v904 = vunpack.c.l.b16 %v876
        %v905 = vunpack.c.l.b16 %v877
        %v906 = vunpack.c.l.b16 %v878
        %v907 = vunpack.c.l.b16 %v879
        %v908 = vunpack.c.l.b16 %v880
        %v909 = vunpack.c.l.b16 %v881
        %v910 = vpack.c.b16 %v903, %v902
        %v911 = vpack.c.b16 %v905, %v904
        %v912 = vpack.c.b16 %v907, %v906
        %v913 = vpack.c.b16 %v909, %v908
        %vm918 = vcmask 523264
        %v920 = vsel %vm918, %v893, 0
        %922 = vmatprep.subr.bf16.mxu0 0
        %923 = vmatpush1.bf16.msra.mxu0 0
        %924 = vmatprep.subr.bf16.mxu0 0
        %925 = vmatpush1.bf16.msra.mxu0 0
        %926 = vmatprep.subr.bf16.mxu0 0
        %927 = vmatpush1.bf16.msra.mxu0 0
        %928 = vmatprep.subr.bf16.mxu0 0
        %929 = vmatpush1.bf16.msra.mxu0 0
        %930 = vmatprep.subr.bf16.mxu0 0
        %931 = vmatpush1.bf16.msra.mxu0 %v913
        %932 = vmatprep.subr.bf16.mxu0 0
        %933 = vmatpush1.bf16.msra.mxu0 %v912
        %934 = vmatprep.subr.bf16.mxu0 0
        %935 = vmatpush1.bf16.msra.mxu0 %v911
        %936 = vmatprep.subr.bf16.mxu0 0
        %937 = vmatpush1.bf16.msra.mxu0 %v910
        %938 = vmatprep.subr.bf16.mxu0 0
        %939 = vmatpush2.bf16.msra.mxu0 0
        %940 = vmatprep.subr.bf16.mxu0 0
        %941 = vmatpush2.bf16.msra.mxu0 0
        %942 = vmatprep.subr.bf16.mxu0 0
        %943 = vmatpush2.bf16.msra.mxu0 0
        %944 = vmatprep.subr.bf16.mxu0 0
        %945 = vmatpush2.bf16.msra.mxu0 0
        %946 = vmatprep.subr.bf16.mxu0 0
        %947 = vmatpush2.bf16.msra.mxu0 0
        %948 = vmatprep.subr.bf16.mxu0 0
        %949 = vmatpush2.bf16.msra.mxu0 0
        %950 = vmatprep.subr.bf16.mxu0 0
        %951 = vmatpush2.bf16.msra.mxu0 0
        %952 = vmatprep.subr.bf16.mxu0 0
        %953 = vmatpush2.bf16.msra.mxu0 0
        %954 = vmatprep.mubr.bf16.mxu0 0
        %955 = vmatmul.mubr.bf16.gmra.mxu0 %v920
        %v956 = vpop.f32.mrf.mxu0
        %v957 = vadd.f32 %v887, %v956
        %v958 = vpop.f32.mrf.mxu0
        %v959 = vpop.f32.mrf.mxu0
        %v960 = vadd.f32 %v887, %v959
        %v961 = vpop.f32.mrf.mxu0
        %962 = vdwg.mxu0
        %v963 = vld [vmem:[#allocation2] sm:$0xf]
        %v964 = vld [vmem:[#allocation2 + $0x4] sm:$0xf]
        %v965 = vld [vmem:[#allocation2 + $0x8] sm:$0xf]
        %v966 = vld [vmem:[#allocation2 + $0xc] sm:$0xf]
        %v967 = vld [vmem:[#allocation3] sm:$0xf]
        %v968 = vld [vmem:[#allocation3 + $0x4] sm:$0xf]
        %v969 = vld [vmem:[#allocation3 + $0x8] sm:$0xf]
        %v970 = vld [vmem:[#allocation3 + $0xc] sm:$0xf]
        %v971 = vld [vmem:[%s8] sm:$0x1]
        %v973 = vlaneseq
        %v974 = vshrl.u32 %v973, 7
        %v975 = vsub.s32 0, %v974
        %v976 = vrot.slane %v971, %v975
        %v978 = vmul.f32 %v957, %v976
        %v979 = vmul.f32 %v960, %v976
        %v980 = vpack.c.bf16 %v979, %v978
        %v985 = vunpack.c.l.b16 %v963
        %v986 = vunpack.c.l.b16 %v964
        %v987 = vunpack.c.l.b16 %v965
        %v988 = vunpack.c.l.b16 %v966
        %v989 = vpack.c.b16 %v986, %v985
        %v990 = vpack.c.b16 %v988, %v987
        %v992 = vsel %vm918, %v980, 0
        %v995 = vsel %vm918, %v989, 0
        %v998 = vsel %vm918, %v990, 0
        %1000 = vmatprep.subr.bf16.mxu0 0
        %1001 = vmatpush1.bf16.xpose.msra.mxu0 0
        %1002 = vmatprep.subr.bf16.mxu0 0
        %1003 = vmatpush1.bf16.xpose.msra.mxu0 0
        %1004 = vmatprep.subr.bf16.mxu0 0
        %1005 = vmatpush1.bf16.xpose.msra.mxu0 0
        %1006 = vmatprep.subr.bf16.mxu0 0
        %1007 = vmatpush1.bf16.xpose.msra.mxu0 0
        %1008 = vmatprep.subr.bf16.mxu0 0
        %1009 = vmatpush1.bf16.xpose.msra.mxu0 0
        %1010 = vmatprep.subr.bf16.mxu0 0
        %1011 = vmatpush1.bf16.xpose.msra.mxu0 0
        %1012 = vmatprep.subr.bf16.mxu0 0
        %1013 = vmatpush1.bf16.xpose.msra.mxu0 %v998
        %1014 = vmatprep.subr.bf16.mxu0 0
        %1015 = vmatpush1.bf16.xpose.msra.mxu0 %v995
        %1016 = vmatprep.subr.bf16.mxu0 0
        %1017 = vmatpush2.bf16.xpose.msra.mxu0 0
        %1018 = vmatprep.subr.bf16.mxu0 0
        %1019 = vmatpush2.bf16.xpose.msra.mxu0 0
        %1020 = vmatprep.subr.bf16.mxu0 0
        %1021 = vmatpush2.bf16.xpose.msra.mxu0 0
        %1022 = vmatprep.subr.bf16.mxu0 0
        %1023 = vmatpush2.bf16.xpose.msra.mxu0 0
        %1024 = vmatprep.subr.bf16.mxu0 0
        %1025 = vmatpush2.bf16.xpose.msra.mxu0 0
        %1026 = vmatprep.subr.bf16.mxu0 0
        %1027 = vmatpush2.bf16.xpose.msra.mxu0 0
        %1028 = vmatprep.subr.bf16.mxu0 0
        %1029 = vmatpush2.bf16.xpose.msra.mxu0 0
        %1030 = vmatprep.subr.bf16.mxu0 0
        %1031 = vmatpush2.bf16.xpose.msra.mxu0 0
        %1032 = vmatprep.mubr.bf16.mxu0 0
        %1033 = vmatmul.mubr.bf16.gmra.mxu0 %v992
        %v1034 = vpop.f32.mrf.mxu0
        %v1035 = vadd.f32 0.0, %v1034
        %v1036 = vpop.f32.mrf.mxu0
        %v1037 = vpop.f32.mrf.mxu0
        %v1038 = vadd.f32 0.0, %v1037
        %v1039 = vpop.f32.mrf.mxu0
        %1040 = vdwg.mxu0
        %vm1041 = vcmask 261120
        %v1042 = vsel %vm1041, %v1035, -inf
        %1043 = vmax.xlane.f32.xlu0 %v1042
        %v1044 = vpop.xlane.xlu0 %1043
        %v1045 = vsel %vm1041, %v1038, -inf
        %1046 = vmax.xlane.f32.xlu0 %v1045
        %v1047 = vpop.xlane.xlu0 %1046
        %v1048 = vsub.f32 %v1035, %v1044
        %v1049 = vsub.f32 %v1038, %v1047
        %v1050 = vmul.f32 %v1048, 1.442695
        %v1051 = vpow.pop %v1050
        %v1052 = vmul.f32 %v1049, 1.442695
        %v1053 = vpow.pop %v1052
        %v1054 = vsel %vm1041, %v1051, 0.0
        %1055 = vadd.xlane.f32.xlu0 %v1054
        %v1056 = vpop.xlane.xlu0 %1055
        %v1057 = vsel %vm1041, %v1053, 0.0
        %1058 = vadd.xlane.f32.xlu0 %v1057
        %v1059 = vpop.xlane.xlu0 %1058
        %v1060 = vrcp.pop %v1056
        %v1061 = vrcp.pop %v1059
        %v1062 = vpack.c.bf16 %v1053, %v1051
        %v1067 = vunpack.c.l.b16 %v967
        %v1068 = vunpack.c.l.b16 %v968
        %v1069 = vunpack.c.l.b16 %v969
        %v1070 = vunpack.c.l.b16 %v970
        %v1071 = vpack.c.b16 %v1068, %v1067
        %v1072 = vpack.c.b16 %v1070, %v1069
        %v1076 = vsel %vm1041, %v1062, 0
        %1078 = vmatprep.subr.bf16.mxu0 0
        %1079 = vmatpush1.bf16.msra.mxu0 0
        %1080 = vmatprep.subr.bf16.mxu0 0
        %1081 = vmatpush1.bf16.msra.mxu0 0
        %1082 = vmatprep.subr.bf16.mxu0 0
        %1083 = vmatpush1.bf16.msra.mxu0 0
        %1084 = vmatprep.subr.bf16.mxu0 0
        %1085 = vmatpush1.bf16.msra.mxu0 0
        %1086 = vmatprep.subr.bf16.mxu0 0
        %1087 = vmatpush1.bf16.msra.mxu0 0
        %1088 = vmatprep.subr.bf16.mxu0 0
        %1089 = vmatpush1.bf16.msra.mxu0 0
        %1090 = vmatprep.subr.bf16.mxu0 0
        %1091 = vmatpush1.bf16.msra.mxu0 %v1072
        %1092 = vmatprep.subr.bf16.mxu0 0
        %1093 = vmatpush1.bf16.msra.mxu0 %v1071
        %1094 = vmatprep.subr.bf16.mxu0 0
        %1095 = vmatpush2.bf16.msra.mxu0 0
        %1096 = vmatprep.subr.bf16.mxu0 0
        %1097 = vmatpush2.bf16.msra.mxu0 0
        %1098 = vmatprep.subr.bf16.mxu0 0
        %1099 = vmatpush2.bf16.msra.mxu0 0
        %1100 = vmatprep.subr.bf16.mxu0 0
        %1101 = vmatpush2.bf16.msra.mxu0 0
        %1102 = vmatprep.subr.bf16.mxu0 0
        %1103 = vmatpush2.bf16.msra.mxu0 0
        %1104 = vmatprep.subr.bf16.mxu0 0
        %1105 = vmatpush2.bf16.msra.mxu0 0
        %1106 = vmatprep.subr.bf16.mxu0 0
        %1107 = vmatpush2.bf16.msra.mxu0 0
        %1108 = vmatprep.subr.bf16.mxu0 0
        %1109 = vmatpush2.bf16.msra.mxu0 0
        %1110 = vmatprep.mubr.bf16.mxu0 0
        %1111 = vmatmul.mubr.bf16.gmra.mxu0 %v1076
        %v1112 = vpop.f32.mrf.mxu0
        %v1113 = vadd.f32 0.0, %v1112
        %v1114 = vpop.f32.mrf.mxu0
        %v1115 = vpop.f32.mrf.mxu0
        %v1116 = vadd.f32 0.0, %v1115
        %v1117 = vpop.f32.mrf.mxu0
        %1118 = vdwg.mxu0
        %v1119 = vld [vmem:[%s9] sm:$0x1]
        %v1121 = vlaneseq
        %v1122 = vshrl.u32 %v1121, 7
        %v1123 = vsub.s32 0, %v1122
        %v1124 = vrot.slane %v1119, %v1123
        %v1126 = vmul.f32 %v1060, %v1124
        %v1127 = vmul.f32 %v1061, %v1124
        %v1128 = vmul.f32 %v1113, %v1126
        %v1129 = vmul.f32 %v1116, %v1127
        %1130 = vst.msk [vmem:[#allocation5] sm:$0xff] %vm918, %v1128
        %1131 = vst.msk [vmem:[#allocation5 + $0x8] sm:$0xff] %vm918, %v1129
        %v1132 = vld [vmem:[#allocation5] sm:$0xff]
        %v1133 = vld [vmem:[#allocation5 + $0x8] sm:$0xff]
        %s1134 = scalar_lea.vmem %s8, 1
        %v1135 = vld [vmem:[%s1134] sm:$0x1]
        %v1137 = vlaneseq
        %v1138 = vshrl.u32 %v1137, 7
        %v1139 = vsub.s32 0, %v1138
        %v1140 = vrot.slane %v1135, %v1139
        %v1142 = vmul.f32 %v957, %v1140
        %v1143 = vmul.f32 %v960, %v1140
        %v1144 = vpack.c.bf16 %v1143, %v1142
        %v1146 = vsel %vm918, %v1144, 0
        %1148 = vmatprep.subr.bf16.mxu0 0
        %1149 = vmatpush1.bf16.xpose.msra.mxu0 0
        %1150 = vmatprep.subr.bf16.mxu0 0
        %1151 = vmatpush1.bf16.xpose.msra.mxu0 0
        %1152 = vmatprep.subr.bf16.mxu0 0
        %1153 = vmatpush1.bf16.xpose.msra.mxu0 0
        %1154 = vmatprep.subr.bf16.mxu0 0
        %1155 = vmatpush1.bf16.xpose.msra.mxu0 0
        %1156 = vmatprep.subr.bf16.mxu0 0
        %1157 = vmatpush1.bf16.xpose.msra.mxu0 0
        %1158 = vmatprep.subr.bf16.mxu0 0
        %1159 = vmatpush1.bf16.xpose.msra.mxu0 0
        %1160 = vmatprep.subr.bf16.mxu0 0
        %1161 = vmatpush1.bf16.xpose.msra.mxu0 %v998
        %1162 = vmatprep.subr.bf16.mxu0 0
        %1163 = vmatpush1.bf16.xpose.msra.mxu0 %v995
        %1164 = vmatprep.subr.bf16.mxu0 0
        %1165 = vmatpush2.bf16.xpose.msra.mxu0 0
        %1166 = vmatprep.subr.bf16.mxu0 0
        %1167 = vmatpush2.bf16.xpose.msra.mxu0 0
        %1168 = vmatprep.subr.bf16.mxu0 0
        %1169 = vmatpush2.bf16.xpose.msra.mxu0 0
        %1170 = vmatprep.subr.bf16.mxu0 0
        %1171 = vmatpush2.bf16.xpose.msra.mxu0 0
        %1172 = vmatprep.subr.bf16.mxu0 0
        %1173 = vmatpush2.bf16.xpose.msra.mxu0 0
        %1174 = vmatprep.subr.bf16.mxu0 0
        %1175 = vmatpush2.bf16.xpose.msra.mxu0 0
        %1176 = vmatprep.subr.bf16.mxu0 0
        %1177 = vmatpush2.bf16.xpose.msra.mxu0 0
        %1178 = vmatprep.subr.bf16.mxu0 0
        %1179 = vmatpush2.bf16.xpose.msra.mxu0 0
        %1180 = vmatprep.mubr.bf16.mxu0 0
        %1181 = vmatmul.mubr.bf16.gmra.mxu0 %v1146
        %v1182 = vpop.f32.mrf.mxu0
        %v1183 = vadd.f32 0.0, %v1182
        %v1184 = vpop.f32.mrf.mxu0
        %v1185 = vpop.f32.mrf.mxu0
        %v1186 = vadd.f32 0.0, %v1185
        %v1187 = vpop.f32.mrf.mxu0
        %1188 = vdwg.mxu0
        %v1189 = vsel %vm1041, %v1183, -inf
        %1190 = vmax.xlane.f32.xlu0 %v1189
        %v1191 = vpop.xlane.xlu0 %1190
        %v1192 = vsel %vm1041, %v1186, -inf
        %1193 = vmax.xlane.f32.xlu0 %v1192
        %v1194 = vpop.xlane.xlu0 %1193
        %v1195 = vsub.f32 %v1183, %v1191
        %v1196 = vsub.f32 %v1186, %v1194
        %v1197 = vmul.f32 %v1195, 1.442695
        %v1198 = vpow.pop %v1197
        %v1199 = vmul.f32 %v1196, 1.442695
        %v1200 = vpow.pop %v1199
        %v1201 = vsel %vm1041, %v1198, 0.0
        %1202 = vadd.xlane.f32.xlu0 %v1201
        %v1203 = vpop.xlane.xlu0 %1202
        %v1204 = vsel %vm1041, %v1200, 0.0
        %1205 = vadd.xlane.f32.xlu0 %v1204
        %v1206 = vpop.xlane.xlu0 %1205
        %v1207 = vrcp.pop %v1203
        %v1208 = vrcp.pop %v1206
        %v1209 = vpack.c.bf16 %v1200, %v1198
        %v1211 = vsel %vm1041, %v1209, 0
        %1213 = vmatprep.subr.bf16.mxu0 0
        %1214 = vmatpush1.bf16.msra.mxu0 0
        %1215 = vmatprep.subr.bf16.mxu0 0
        %1216 = vmatpush1.bf16.msra.mxu0 0
        %1217 = vmatprep.subr.bf16.mxu0 0
        %1218 = vmatpush1.bf16.msra.mxu0 0
        %1219 = vmatprep.subr.bf16.mxu0 0
        %1220 = vmatpush1.bf16.msra.mxu0 0
        %1221 = vmatprep.subr.bf16.mxu0 0
        %1222 = vmatpush1.bf16.msra.mxu0 0
        %1223 = vmatprep.subr.bf16.mxu0 0
        %1224 = vmatpush1.bf16.msra.mxu0 0
        %1225 = vmatprep.subr.bf16.mxu0 0
        %1226 = vmatpush1.bf16.msra.mxu0 %v1072
        %1227 = vmatprep.subr.bf16.mxu0 0
        %1228 = vmatpush1.bf16.msra.mxu0 %v1071
        %1229 = vmatprep.subr.bf16.mxu0 0
        %1230 = vmatpush2.bf16.msra.mxu0 0
        %1231 = vmatprep.subr.bf16.mxu0 0
        %1232 = vmatpush2.bf16.msra.mxu0 0
        %1233 = vmatprep.subr.bf16.mxu0 0
        %1234 = vmatpush2.bf16.msra.mxu0 0
        %1235 = vmatprep.subr.bf16.mxu0 0
        %1236 = vmatpush2.bf16.msra.mxu0 0
        %1237 = vmatprep.subr.bf16.mxu0 0
        %1238 = vmatpush2.bf16.msra.mxu0 0
        %1239 = vmatprep.subr.bf16.mxu0 0
        %1240 = vmatpush2.bf16.msra.mxu0 0
        %1241 = vmatprep.subr.bf16.mxu0 0
        %1242 = vmatpush2.bf16.msra.mxu0 0
        %1243 = vmatprep.subr.bf16.mxu0 0
        %1244 = vmatpush2.bf16.msra.mxu0 0
        %1245 = vmatprep.mubr.bf16.mxu0 0
        %1246 = vmatmul.mubr.bf16.gmra.mxu0 %v1211
        %v1247 = vpop.f32.mrf.mxu0
        %v1248 = vadd.f32 0.0, %v1247
        %v1249 = vpop.f32.mrf.mxu0
        %v1250 = vpop.f32.mrf.mxu0
        %v1251 = vadd.f32 0.0, %v1250
        %v1252 = vpop.f32.mrf.mxu0
        %1253 = vdwg.mxu0
        %s1254 = scalar_lea.vmem %s9, 1
        %v1255 = vld [vmem:[%s1254] sm:$0x1]
        %v1257 = vlaneseq
        %v1258 = vshrl.u32 %v1257, 7
        %v1259 = vsub.s32 0, %v1258
        %v1260 = vrot.slane %v1255, %v1259
        %v1262 = vmul.f32 %v1207, %v1260
        %v1263 = vmul.f32 %v1208, %v1260
        %v1264 = vmul.f32 %v1248, %v1262
        %v1265 = vmul.f32 %v1251, %v1263
        %v1266 = vadd.f32 %v1132, %v1264
        %v1267 = vadd.f32 %v1133, %v1265
        %1268 = vst.msk [vmem:[#allocation5] sm:$0xff] %vm918, %v1266
        %1269 = vst.msk [vmem:[#allocation5 + $0x8] sm:$0xff] %vm918, %v1267
        %v1270 = vld [vmem:[#allocation5] sm:$0xff]
        %v1271 = vld [vmem:[#allocation5 + $0x8] sm:$0xff]
        %s1272 = scalar_lea.vmem %s8, 2
        %v1273 = vld [vmem:[%s1272] sm:$0x1]
        %v1275 = vlaneseq
        %v1276 = vshrl.u32 %v1275, 7
        %v1277 = vsub.s32 0, %v1276
        %v1278 = vrot.slane %v1273, %v1277
        %v1280 = vmul.f32 %v957, %v1278
        %v1281 = vmul.f32 %v960, %v1278
        %v1282 = vpack.c.bf16 %v1281, %v1280
        %v1284 = vsel %vm918, %v1282, 0
        %1286 = vmatprep.subr.bf16.mxu0 0
        %1287 = vmatpush1.bf16.xpose.msra.mxu0 0
        %1288 = vmatprep.subr.bf16.mxu0 0
        %1289 = vmatpush1.bf16.xpose.msra.mxu0 0
        %1290 = vmatprep.subr.bf16.mxu0 0
        %1291 = vmatpush1.bf16.xpose.msra.mxu0 0
        %1292 = vmatprep.subr.bf16.mxu0 0
        %1293 = vmatpush1.bf16.xpose.msra.mxu0 0
        %1294 = vmatprep.subr.bf16.mxu0 0
        %1295 = vmatpush1.bf16.xpose.msra.mxu0 0
        %1296 = vmatprep.subr.bf16.mxu0 0
        %1297 = vmatpush1.bf16.xpose.msra.mxu0 0
        %1298 = vmatprep.subr.bf16.mxu0 0
        %1299 = vmatpush1.bf16.xpose.msra.mxu0 %v998
        %1300 = vmatprep.subr.bf16.mxu0 0
        %1301 = vmatpush1.bf16.xpose.msra.mxu0 %v995
        %1302 = vmatprep.subr.bf16.mxu0 0
        %1303 = vmatpush2.bf16.xpose.msra.mxu0 0
        %1304 = vmatprep.subr.bf16.mxu0 0
        %1305 = vmatpush2.bf16.xpose.msra.mxu0 0
        %1306 = vmatprep.subr.bf16.mxu0 0
        %1307 = vmatpush2.bf16.xpose.msra.mxu0 0
        %1308 = vmatprep.subr.bf16.mxu0 0
        %1309 = vmatpush2.bf16.xpose.msra.mxu0 0
        %1310 = vmatprep.subr.bf16.mxu0 0
        %1311 = vmatpush2.bf16.xpose.msra.mxu0 0
        %1312 = vmatprep.subr.bf16.mxu0 0
        %1313 = vmatpush2.bf16.xpose.msra.mxu0 0
        %1314 = vmatprep.subr.bf16.mxu0 0
        %1315 = vmatpush2.bf16.xpose.msra.mxu0 0
        %1316 = vmatprep.subr.bf16.mxu0 0
        %1317 = vmatpush2.bf16.xpose.msra.mxu0 0
        %1318 = vmatprep.mubr.bf16.mxu0 0
        %1319 = vmatmul.mubr.bf16.gmra.mxu0 %v1284
        %v1320 = vpop.f32.mrf.mxu0
        %v1321 = vadd.f32 0.0, %v1320
        %v1322 = vpop.f32.mrf.mxu0
        %v1323 = vpop.f32.mrf.mxu0
        %v1324 = vadd.f32 0.0, %v1323
        %v1325 = vpop.f32.mrf.mxu0
        %1326 = vdwg.mxu0
        %v1327 = vsel %vm1041, %v1321, -inf
        %1328 = vmax.xlane.f32.xlu0 %v1327
        %v1329 = vpop.xlane.xlu0 %1328
        %v1330 = vsel %vm1041, %v1324, -inf
        %1331 = vmax.xlane.f32.xlu0 %v1330
        %v1332 = vpop.xlane.xlu0 %1331
        %v1333 = vsub.f32 %v1321, %v1329
        %v1334 = vsub.f32 %v1324, %v1332
        %v1335 = vmul.f32 %v1333, 1.442695
        %v1336 = vpow.pop %v1335
        %v1337 = vmul.f32 %v1334, 1.442695
        %v1338 = vpow.pop %v1337
        %v1339 = vsel %vm1041, %v1336, 0.0
        %1340 = vadd.xlane.f32.xlu0 %v1339
        %v1341 = vpop.xlane.xlu0 %1340
        %v1342 = vsel %vm1041, %v1338, 0.0
        %1343 = vadd.xlane.f32.xlu0 %v1342
        %v1344 = vpop.xlane.xlu0 %1343
        %v1345 = vrcp.pop %v1341
        %v1346 = vrcp.pop %v1344
        %v1347 = vpack.c.bf16 %v1338, %v1336
        %v1349 = vsel %vm1041, %v1347, 0
        %1351 = vmatprep.subr.bf16.mxu0 0
        %1352 = vmatpush1.bf16.msra.mxu0 0
        %1353 = vmatprep.subr.bf16.mxu0 0
        %1354 = vmatpush1.bf16.msra.mxu0 0
        %1355 = vmatprep.subr.bf16.mxu0 0
        %1356 = vmatpush1.bf16.msra.mxu0 0
        %1357 = vmatprep.subr.bf16.mxu0 0
        %1358 = vmatpush1.bf16.msra.mxu0 0
        %1359 = vmatprep.subr.bf16.mxu0 0
        %1360 = vmatpush1.bf16.msra.mxu0 0
        %1361 = vmatprep.subr.bf16.mxu0 0
        %1362 = vmatpush1.bf16.msra.mxu0 0
        %1363 = vmatprep.subr.bf16.mxu0 0
        %1364 = vmatpush1.bf16.msra.mxu0 %v1072
        %1365 = vmatprep.subr.bf16.mxu0 0
        %1366 = vmatpush1.bf16.msra.mxu0 %v1071
        %1367 = vmatprep.subr.bf16.mxu0 0
        %1368 = vmatpush2.bf16.msra.mxu0 0
        %1369 = vmatprep.subr.bf16.mxu0 0
        %1370 = vmatpush2.bf16.msra.mxu0 0
        %1371 = vmatprep.subr.bf16.mxu0 0
        %1372 = vmatpush2.bf16.msra.mxu0 0
        %1373 = vmatprep.subr.bf16.mxu0 0
        %1374 = vmatpush2.bf16.msra.mxu0 0
        %1375 = vmatprep.subr.bf16.mxu0 0
        %1376 = vmatpush2.bf16.msra.mxu0 0
        %1377 = vmatprep.subr.bf16.mxu0 0
        %1378 = vmatpush2.bf16.msra.mxu0 0
        %1379 = vmatprep.subr.bf16.mxu0 0
        %1380 = vmatpush2.bf16.msra.mxu0 0
        %1381 = vmatprep.subr.bf16.mxu0 0
        %1382 = vmatpush2.bf16.msra.mxu0 0
        %1383 = vmatprep.mubr.bf16.mxu0 0
        %1384 = vmatmul.mubr.bf16.gmra.mxu0 %v1349
        %v1385 = vpop.f32.mrf.mxu0
        %v1386 = vadd.f32 0.0, %v1385
        %v1387 = vpop.f32.mrf.mxu0
        %v1388 = vpop.f32.mrf.mxu0
        %v1389 = vadd.f32 0.0, %v1388
        %v1390 = vpop.f32.mrf.mxu0
        %1391 = vdwg.mxu0
        %s1392 = scalar_lea.vmem %s9, 2
        %v1393 = vld [vmem:[%s1392] sm:$0x1]
        %v1395 = vlaneseq
        %v1396 = vshrl.u32 %v1395, 7
        %v1397 = vsub.s32 0, %v1396
        %v1398 = vrot.slane %v1393, %v1397
        %v1400 = vmul.f32 %v1345, %v1398
        %v1401 = vmul.f32 %v1346, %v1398
        %v1402 = vmul.f32 %v1386, %v1400
        %v1403 = vmul.f32 %v1389, %v1401
        %v1404 = vadd.f32 %v1270, %v1402
        %v1405 = vadd.f32 %v1271, %v1403
        %1406 = vst.msk [vmem:[#allocation5] sm:$0xff] %vm918, %v1404
        %1407 = vst.msk [vmem:[#allocation5 + $0x8] sm:$0xff] %vm918, %v1405
        %v1408 = vld [vmem:[#allocation5] sm:$0xff]
        %v1409 = vld [vmem:[#allocation5 + $0x8] sm:$0xff]
        %s1410 = scalar_lea.vmem %s8, 3
        %v1411 = vld [vmem:[%s1410] sm:$0x1]
        %v1413 = vlaneseq
        %v1414 = vshrl.u32 %v1413, 7
        %v1415 = vsub.s32 0, %v1414
        %v1416 = vrot.slane %v1411, %v1415
        %v1418 = vmul.f32 %v957, %v1416
        %v1419 = vmul.f32 %v960, %v1416
        %v1420 = vpack.c.bf16 %v1419, %v1418
        %v1422 = vsel %vm918, %v1420, 0
        %1424 = vmatprep.subr.bf16.mxu0 0
        %1425 = vmatpush1.bf16.xpose.msra.mxu0 0
        %1426 = vmatprep.subr.bf16.mxu0 0
        %1427 = vmatpush1.bf16.xpose.msra.mxu0 0
        %1428 = vmatprep.subr.bf16.mxu0 0
        %1429 = vmatpush1.bf16.xpose.msra.mxu0 0
        %1430 = vmatprep.subr.bf16.mxu0 0
        %1431 = vmatpush1.bf16.xpose.msra.mxu0 0
        %1432 = vmatprep.subr.bf16.mxu0 0
        %1433 = vmatpush1.bf16.xpose.msra.mxu0 0
        %1434 = vmatprep.subr.bf16.mxu0 0
        %1435 = vmatpush1.bf16.xpose.msra.mxu0 0
        %1436 = vmatprep.subr.bf16.mxu0 0
        %1437 = vmatpush1.bf16.xpose.msra.mxu0 %v998
        %1438 = vmatprep.subr.bf16.mxu0 0
        %1439 = vmatpush1.bf16.xpose.msra.mxu0 %v995
        %1440 = vmatprep.subr.bf16.mxu0 0
        %1441 = vmatpush2.bf16.xpose.msra.mxu0 0
        %1442 = vmatprep.subr.bf16.mxu0 0
        %1443 = vmatpush2.bf16.xpose.msra.mxu0 0
        %1444 = vmatprep.subr.bf16.mxu0 0
        %1445 = vmatpush2.bf16.xpose.msra.mxu0 0
        %1446 = vmatprep.subr.bf16.mxu0 0
        %1447 = vmatpush2.bf16.xpose.msra.mxu0 0
        %1448 = vmatprep.subr.bf16.mxu0 0
        %1449 = vmatpush2.bf16.xpose.msra.mxu0 0
        %1450 = vmatprep.subr.bf16.mxu0 0
        %1451 = vmatpush2.bf16.xpose.msra.mxu0 0
        %1452 = vmatprep.subr.bf16.mxu0 0
        %1453 = vmatpush2.bf16.xpose.msra.mxu0 0
        %1454 = vmatprep.subr.bf16.mxu0 0
        %1455 = vmatpush2.bf16.xpose.msra.mxu0 0
        %1456 = vmatprep.mubr.bf16.mxu0 0
        %1457 = vmatmul.mubr.bf16.gmra.mxu0 %v1422
        %v1458 = vpop.f32.mrf.mxu0
        %v1459 = vadd.f32 0.0, %v1458
        %v1460 = vpop.f32.mrf.mxu0
        %v1461 = vpop.f32.mrf.mxu0
        %v1462 = vadd.f32 0.0, %v1461
        %v1463 = vpop.f32.mrf.mxu0
        %1464 = vdwg.mxu0
        %v1465 = vsel %vm1041, %v1459, -inf
        %1466 = vmax.xlane.f32.xlu0 %v1465
        %v1467 = vpop.xlane.xlu0 %1466
        %v1468 = vsel %vm1041, %v1462, -inf
        %1469 = vmax.xlane.f32.xlu0 %v1468
        %v1470 = vpop.xlane.xlu0 %1469
        %v1471 = vsub.f32 %v1459, %v1467
        %v1472 = vsub.f32 %v1462, %v1470
        %v1473 = vmul.f32 %v1471, 1.442695
        %v1474 = vpow.pop %v1473
        %v1475 = vmul.f32 %v1472, 1.442695
        %v1476 = vpow.pop %v1475
        %v1477 = vsel %vm1041, %v1474, 0.0
        %1478 = vadd.xlane.f32.xlu0 %v1477
        %v1479 = vpop.xlane.xlu0 %1478
        %v1480 = vsel %vm1041, %v1476, 0.0
        %1481 = vadd.xlane.f32.xlu0 %v1480
        %v1482 = vpop.xlane.xlu0 %1481
        %v1483 = vrcp.pop %v1479
        %v1484 = vrcp.pop %v1482
        %v1485 = vpack.c.bf16 %v1476, %v1474
        %v1487 = vsel %vm1041, %v1485, 0
        %1489 = vmatprep.subr.bf16.mxu0 0
        %1490 = vmatpush1.bf16.msra.mxu0 0
        %1491 = vmatprep.subr.bf16.mxu0 0
        %1492 = vmatpush1.bf16.msra.mxu0 0
        %1493 = vmatprep.subr.bf16.mxu0 0
        %1494 = vmatpush1.bf16.msra.mxu0 0
        %1495 = vmatprep.subr.bf16.mxu0 0
        %1496 = vmatpush1.bf16.msra.mxu0 0
        %1497 = vmatprep.subr.bf16.mxu0 0
        %1498 = vmatpush1.bf16.msra.mxu0 0
        %1499 = vmatprep.subr.bf16.mxu0 0
        %1500 = vmatpush1.bf16.msra.mxu0 0
        %1501 = vmatprep.subr.bf16.mxu0 0
        %1502 = vmatpush1.bf16.msra.mxu0 %v1072
        %1503 = vmatprep.subr.bf16.mxu0 0
        %1504 = vmatpush1.bf16.msra.mxu0 %v1071
        %1505 = vmatprep.subr.bf16.mxu0 0
        %1506 = vmatpush2.bf16.msra.mxu0 0
        %1507 = vmatprep.subr.bf16.mxu0 0
        %1508 = vmatpush2.bf16.msra.mxu0 0
        %1509 = vmatprep.subr.bf16.mxu0 0
        %1510 = vmatpush2.bf16.msra.mxu0 0
        %1511 = vmatprep.subr.bf16.mxu0 0
        %1512 = vmatpush2.bf16.msra.mxu0 0
        %1513 = vmatprep.subr.bf16.mxu0 0
        %1514 = vmatpush2.bf16.msra.mxu0 0
        %1515 = vmatprep.subr.bf16.mxu0 0
        %1516 = vmatpush2.bf16.msra.mxu0 0
        %1517 = vmatprep.subr.bf16.mxu0 0
        %1518 = vmatpush2.bf16.msra.mxu0 0
        %1519 = vmatprep.subr.bf16.mxu0 0
        %1520 = vmatpush2.bf16.msra.mxu0 0
        %1521 = vmatprep.mubr.bf16.mxu0 0
        %1522 = vmatmul.mubr.bf16.gmra.mxu0 %v1487
        %v1523 = vpop.f32.mrf.mxu0
        %v1524 = vadd.f32 0.0, %v1523
        %v1525 = vpop.f32.mrf.mxu0
        %v1526 = vpop.f32.mrf.mxu0
        %v1527 = vadd.f32 0.0, %v1526
        %v1528 = vpop.f32.mrf.mxu0
        %1529 = vdwg.mxu0
        %s1530 = scalar_lea.vmem %s9, 3
        %v1531 = vld [vmem:[%s1530] sm:$0x1]
        %v1533 = vlaneseq
        %v1534 = vshrl.u32 %v1533, 7
        %v1535 = vsub.s32 0, %v1534
        %v1536 = vrot.slane %v1531, %v1535
        %v1538 = vmul.f32 %v1483, %v1536
        %v1539 = vmul.f32 %v1484, %v1536
        %v1540 = vmul.f32 %v1524, %v1538
        %v1541 = vmul.f32 %v1527, %v1539
        %v1542 = vadd.f32 %v1408, %v1540
        %v1543 = vadd.f32 %v1409, %v1541
        %1544 = vst.msk [vmem:[#allocation5] sm:$0xff] %vm918, %v1542
        %1545 = vst.msk [vmem:[#allocation5 + $0x8] sm:$0xff] %vm918, %v1543
        %v1546 = vld [vmem:[#allocation5] sm:$0xff]
        %v1547 = vld [vmem:[#allocation5 + $0x8] sm:$0xff]
        %s1548 = scalar_lea.vmem %s8, 4
        %v1549 = vld [vmem:[%s1548] sm:$0x1]
        %v1551 = vlaneseq
        %v1552 = vshrl.u32 %v1551, 7
        %v1553 = vsub.s32 0, %v1552
        %v1554 = vrot.slane %v1549, %v1553
        %v1556 = vmul.f32 %v957, %v1554
        %v1557 = vmul.f32 %v960, %v1554
        %v1558 = vpack.c.bf16 %v1557, %v1556
        %v1560 = vsel %vm918, %v1558, 0
        %1562 = vmatprep.subr.bf16.mxu0 0
        %1563 = vmatpush1.bf16.xpose.msra.mxu0 0
        %1564 = vmatprep.subr.bf16.mxu0 0
        %1565 = vmatpush1.bf16.xpose.msra.mxu0 0
        %1566 = vmatprep.subr.bf16.mxu0 0
        %1567 = vmatpush1.bf16.xpose.msra.mxu0 0
        %1568 = vmatprep.subr.bf16.mxu0 0
        %1569 = vmatpush1.bf16.xpose.msra.mxu0 0
        %1570 = vmatprep.subr.bf16.mxu0 0
        %1571 = vmatpush1.bf16.xpose.msra.mxu0 0
        %1572 = vmatprep.subr.bf16.mxu0 0
        %1573 = vmatpush1.bf16.xpose.msra.mxu0 0
        %1574 = vmatprep.subr.bf16.mxu0 0
        %1575 = vmatpush1.bf16.xpose.msra.mxu0 %v998
        %1576 = vmatprep.subr.bf16.mxu0 0
        %1577 = vmatpush1.bf16.xpose.msra.mxu0 %v995
        %1578 = vmatprep.subr.bf16.mxu0 0
        %1579 = vmatpush2.bf16.xpose.msra.mxu0 0
        %1580 = vmatprep.subr.bf16.mxu0 0
        %1581 = vmatpush2.bf16.xpose.msra.mxu0 0
        %1582 = vmatprep.subr.bf16.mxu0 0
        %1583 = vmatpush2.bf16.xpose.msra.mxu0 0
        %1584 = vmatprep.subr.bf16.mxu0 0
        %1585 = vmatpush2.bf16.xpose.msra.mxu0 0
        %1586 = vmatprep.subr.bf16.mxu0 0
        %1587 = vmatpush2.bf16.xpose.msra.mxu0 0
        %1588 = vmatprep.subr.bf16.mxu0 0
        %1589 = vmatpush2.bf16.xpose.msra.mxu0 0
        %1590 = vmatprep.subr.bf16.mxu0 0
        %1591 = vmatpush2.bf16.xpose.msra.mxu0 0
        %1592 = vmatprep.subr.bf16.mxu0 0
        %1593 = vmatpush2.bf16.xpose.msra.mxu0 0
        %1594 = vmatprep.mubr.bf16.mxu0 0
        %1595 = vmatmul.mubr.bf16.gmra.mxu0 %v1560
        %v1596 = vpop.f32.mrf.mxu0
        %v1597 = vadd.f32 0.0, %v1596
        %v1598 = vpop.f32.mrf.mxu0
        %v1599 = vpop.f32.mrf.mxu0
        %v1600 = vadd.f32 0.0, %v1599
        %v1601 = vpop.f32.mrf.mxu0
        %1602 = vdwg.mxu0
        %v1603 = vsel %vm1041, %v1597, -inf
        %1604 = vmax.xlane.f32.xlu0 %v1603
        %v1605 = vpop.xlane.xlu0 %1604
        %v1606 = vsel %vm1041, %v1600, -inf
        %1607 = vmax.xlane.f32.xlu0 %v1606
        %v1608 = vpop.xlane.xlu0 %1607
        %v1609 = vsub.f32 %v1597, %v1605
        %v1610 = vsub.f32 %v1600, %v1608
        %v1611 = vmul.f32 %v1609, 1.442695
        %v1612 = vpow.pop %v1611
        %v1613 = vmul.f32 %v1610, 1.442695
        %v1614 = vpow.pop %v1613
        %v1615 = vsel %vm1041, %v1612, 0.0
        %1616 = vadd.xlane.f32.xlu0 %v1615
        %v1617 = vpop.xlane.xlu0 %1616
        %v1618 = vsel %vm1041, %v1614, 0.0
        %1619 = vadd.xlane.f32.xlu0 %v1618
        %v1620 = vpop.xlane.xlu0 %1619
        %v1621 = vrcp.pop %v1617
        %v1622 = vrcp.pop %v1620
        %v1623 = vpack.c.bf16 %v1614, %v1612
        %v1625 = vsel %vm1041, %v1623, 0
        %1627 = vmatprep.subr.bf16.mxu0 0
        %1628 = vmatpush1.bf16.msra.mxu0 0
        %1629 = vmatprep.subr.bf16.mxu0 0
        %1630 = vmatpush1.bf16.msra.mxu0 0
        %1631 = vmatprep.subr.bf16.mxu0 0
        %1632 = vmatpush1.bf16.msra.mxu0 0
        %1633 = vmatprep.subr.bf16.mxu0 0
        %1634 = vmatpush1.bf16.msra.mxu0 0
        %1635 = vmatprep.subr.bf16.mxu0 0
        %1636 = vmatpush1.bf16.msra.mxu0 0
        %1637 = vmatprep.subr.bf16.mxu0 0
        %1638 = vmatpush1.bf16.msra.mxu0 0
        %1639 = vmatprep.subr.bf16.mxu0 0
        %1640 = vmatpush1.bf16.msra.mxu0 %v1072
        %1641 = vmatprep.subr.bf16.mxu0 0
        %1642 = vmatpush1.bf16.msra.mxu0 %v1071
        %1643 = vmatprep.subr.bf16.mxu0 0
        %1644 = vmatpush2.bf16.msra.mxu0 0
        %1645 = vmatprep.subr.bf16.mxu0 0
        %1646 = vmatpush2.bf16.msra.mxu0 0
        %1647 = vmatprep.subr.bf16.mxu0 0
        %1648 = vmatpush2.bf16.msra.mxu0 0
        %1649 = vmatprep.subr.bf16.mxu0 0
        %1650 = vmatpush2.bf16.msra.mxu0 0
        %1651 = vmatprep.subr.bf16.mxu0 0
        %1652 = vmatpush2.bf16.msra.mxu0 0
        %1653 = vmatprep.subr.bf16.mxu0 0
        %1654 = vmatpush2.bf16.msra.mxu0 0
        %1655 = vmatprep.subr.bf16.mxu0 0
        %1656 = vmatpush2.bf16.msra.mxu0 0
        %1657 = vmatprep.subr.bf16.mxu0 0
        %1658 = vmatpush2.bf16.msra.mxu0 0
        %1659 = vmatprep.mubr.bf16.mxu0 0
        %1660 = vmatmul.mubr.bf16.gmra.mxu0 %v1625
        %v1661 = vpop.f32.mrf.mxu0
        %v1662 = vadd.f32 0.0, %v1661
        %v1663 = vpop.f32.mrf.mxu0
        %v1664 = vpop.f32.mrf.mxu0
        %v1665 = vadd.f32 0.0, %v1664
        %v1666 = vpop.f32.mrf.mxu0
        %1667 = vdwg.mxu0
        %s1668 = scalar_lea.vmem %s9, 4
        %v1669 = vld [vmem:[%s1668] sm:$0x1]
        %v1671 = vlaneseq
        %v1672 = vshrl.u32 %v1671, 7
        %v1673 = vsub.s32 0, %v1672
        %v1674 = vrot.slane %v1669, %v1673
        %v1676 = vmul.f32 %v1621, %v1674
        %v1677 = vmul.f32 %v1622, %v1674
        %v1678 = vmul.f32 %v1662, %v1676
        %v1679 = vmul.f32 %v1665, %v1677
        %v1680 = vadd.f32 %v1546, %v1678
        %v1681 = vadd.f32 %v1547, %v1679
        %1682 = vst.msk [vmem:[#allocation5] sm:$0xff] %vm918, %v1680
        %1683 = vst.msk [vmem:[#allocation5 + $0x8] sm:$0xff] %vm918, %v1681
        %v1684 = vld [vmem:[#allocation5] sm:$0xff]
        %v1685 = vld [vmem:[#allocation5 + $0x8] sm:$0xff]
        %s1686 = scalar_lea.vmem %s8, 5
        %v1687 = vld [vmem:[%s1686] sm:$0x1]
        %v1689 = vlaneseq
        %v1690 = vshrl.u32 %v1689, 7
        %v1691 = vsub.s32 0, %v1690
        %v1692 = vrot.slane %v1687, %v1691
        %v1694 = vmul.f32 %v957, %v1692
        %v1695 = vmul.f32 %v960, %v1692
        %v1696 = vpack.c.bf16 %v1695, %v1694
        %v1698 = vsel %vm918, %v1696, 0
        %1700 = vmatprep.subr.bf16.mxu0 0
        %1701 = vmatpush1.bf16.xpose.msra.mxu0 0
        %1702 = vmatprep.subr.bf16.mxu0 0
        %1703 = vmatpush1.bf16.xpose.msra.mxu0 0
        %1704 = vmatprep.subr.bf16.mxu0 0
        %1705 = vmatpush1.bf16.xpose.msra.mxu0 0
        %1706 = vmatprep.subr.bf16.mxu0 0
        %1707 = vmatpush1.bf16.xpose.msra.mxu0 0
        %1708 = vmatprep.subr.bf16.mxu0 0
        %1709 = vmatpush1.bf16.xpose.msra.mxu0 0
        %1710 = vmatprep.subr.bf16.mxu0 0
        %1711 = vmatpush1.bf16.xpose.msra.mxu0 0
        %1712 = vmatprep.subr.bf16.mxu0 0
        %1713 = vmatpush1.bf16.xpose.msra.mxu0 %v998
        %1714 = vmatprep.subr.bf16.mxu0 0
        %1715 = vmatpush1.bf16.xpose.msra.mxu0 %v995
        %1716 = vmatprep.subr.bf16.mxu0 0
        %1717 = vmatpush2.bf16.xpose.msra.mxu0 0
        %1718 = vmatprep.subr.bf16.mxu0 0
        %1719 = vmatpush2.bf16.xpose.msra.mxu0 0
        %1720 = vmatprep.subr.bf16.mxu0 0
        %1721 = vmatpush2.bf16.xpose.msra.mxu0 0
        %1722 = vmatprep.subr.bf16.mxu0 0
        %1723 = vmatpush2.bf16.xpose.msra.mxu0 0
        %1724 = vmatprep.subr.bf16.mxu0 0
        %1725 = vmatpush2.bf16.xpose.msra.mxu0 0
        %1726 = vmatprep.subr.bf16.mxu0 0
        %1727 = vmatpush2.bf16.xpose.msra.mxu0 0
        %1728 = vmatprep.subr.bf16.mxu0 0
        %1729 = vmatpush2.bf16.xpose.msra.mxu0 0
        %1730 = vmatprep.subr.bf16.mxu0 0
        %1731 = vmatpush2.bf16.xpose.msra.mxu0 0
        %1732 = vmatprep.mubr.bf16.mxu0 0
        %1733 = vmatmul.mubr.bf16.gmra.mxu0 %v1698
        %v1734 = vpop.f32.mrf.mxu0
        %v1735 = vadd.f32 0.0, %v1734
        %v1736 = vpop.f32.mrf.mxu0
        %v1737 = vpop.f32.mrf.mxu0
        %v1738 = vadd.f32 0.0, %v1737
        %v1739 = vpop.f32.mrf.mxu0
        %1740 = vdwg.mxu0
        %v1741 = vsel %vm1041, %v1735, -inf
        %1742 = vmax.xlane.f32.xlu0 %v1741
        %v1743 = vpop.xlane.xlu0 %1742
        %v1744 = vsel %vm1041, %v1738, -inf
        %1745 = vmax.xlane.f32.xlu0 %v1744
        %v1746 = vpop.xlane.xlu0 %1745
        %v1747 = vsub.f32 %v1735, %v1743
        %v1748 = vsub.f32 %v1738, %v1746
        %v1749 = vmul.f32 %v1747, 1.442695
        %v1750 = vpow.pop %v1749
        %v1751 = vmul.f32 %v1748, 1.442695
        %v1752 = vpow.pop %v1751
        %v1753 = vsel %vm1041, %v1750, 0.0
        %1754 = vadd.xlane.f32.xlu0 %v1753
        %v1755 = vpop.xlane.xlu0 %1754
        %v1756 = vsel %vm1041, %v1752, 0.0
        %1757 = vadd.xlane.f32.xlu0 %v1756
        %v1758 = vpop.xlane.xlu0 %1757
        %v1759 = vrcp.pop %v1755
        %v1760 = vrcp.pop %v1758
        %v1761 = vpack.c.bf16 %v1752, %v1750
        %v1763 = vsel %vm1041, %v1761, 0
        %1765 = vmatprep.subr.bf16.mxu0 0
        %1766 = vmatpush1.bf16.msra.mxu0 0
        %1767 = vmatprep.subr.bf16.mxu0 0
        %1768 = vmatpush1.bf16.msra.mxu0 0
        %1769 = vmatprep.subr.bf16.mxu0 0
        %1770 = vmatpush1.bf16.msra.mxu0 0
        %1771 = vmatprep.subr.bf16.mxu0 0
        %1772 = vmatpush1.bf16.msra.mxu0 0
        %1773 = vmatprep.subr.bf16.mxu0 0
        %1774 = vmatpush1.bf16.msra.mxu0 0
        %1775 = vmatprep.subr.bf16.mxu0 0
        %1776 = vmatpush1.bf16.msra.mxu0 0
        %1777 = vmatprep.subr.bf16.mxu0 0
        %1778 = vmatpush1.bf16.msra.mxu0 %v1072
        %1779 = vmatprep.subr.bf16.mxu0 0
        %1780 = vmatpush1.bf16.msra.mxu0 %v1071
        %1781 = vmatprep.subr.bf16.mxu0 0
        %1782 = vmatpush2.bf16.msra.mxu0 0
        %1783 = vmatprep.subr.bf16.mxu0 0
        %1784 = vmatpush2.bf16.msra.mxu0 0
        %1785 = vmatprep.subr.bf16.mxu0 0
        %1786 = vmatpush2.bf16.msra.mxu0 0
        %1787 = vmatprep.subr.bf16.mxu0 0
        %1788 = vmatpush2.bf16.msra.mxu0 0
        %1789 = vmatprep.subr.bf16.mxu0 0
        %1790 = vmatpush2.bf16.msra.mxu0 0
        %1791 = vmatprep.subr.bf16.mxu0 0
        %1792 = vmatpush2.bf16.msra.mxu0 0
        %1793 = vmatprep.subr.bf16.mxu0 0
        %1794 = vmatpush2.bf16.msra.mxu0 0
        %1795 = vmatprep.subr.bf16.mxu0 0
        %1796 = vmatpush2.bf16.msra.mxu0 0
        %1797 = vmatprep.mubr.bf16.mxu0 0
        %1798 = vmatmul.mubr.bf16.gmra.mxu0 %v1763
        %v1799 = vpop.f32.mrf.mxu0
        %v1800 = vadd.f32 0.0, %v1799
        %v1801 = vpop.f32.mrf.mxu0
        %v1802 = vpop.f32.mrf.mxu0
        %v1803 = vadd.f32 0.0, %v1802
        %v1804 = vpop.f32.mrf.mxu0
        %1805 = vdwg.mxu0
        %s1806 = scalar_lea.vmem %s9, 5
        %v1807 = vld [vmem:[%s1806] sm:$0x1]
        %v1809 = vlaneseq
        %v1810 = vshrl.u32 %v1809, 7
        %v1811 = vsub.s32 0, %v1810
        %v1812 = vrot.slane %v1807, %v1811
        %v1814 = vmul.f32 %v1759, %v1812
        %v1815 = vmul.f32 %v1760, %v1812
        %v1816 = vmul.f32 %v1800, %v1814
        %v1817 = vmul.f32 %v1803, %v1815
        %v1818 = vadd.f32 %v1684, %v1816
        %v1819 = vadd.f32 %v1685, %v1817
        %1820 = vst.msk [vmem:[#allocation5] sm:$0xff] %vm918, %v1818
        %1821 = vst.msk [vmem:[#allocation5 + $0x8] sm:$0xff] %vm918, %v1819
        %v1822 = vld [vmem:[#allocation5] sm:$0xff]
        %v1823 = vld [vmem:[#allocation5 + $0x8] sm:$0xff]
        %s1824 = scalar_lea.vmem %s8, 6
        %v1825 = vld [vmem:[%s1824] sm:$0x1]
        %v1827 = vlaneseq
        %v1828 = vshrl.u32 %v1827, 7
        %v1829 = vsub.s32 0, %v1828
        %v1830 = vrot.slane %v1825, %v1829
        %v1832 = vmul.f32 %v957, %v1830
        %v1833 = vmul.f32 %v960, %v1830
        %v1834 = vpack.c.bf16 %v1833, %v1832
        %v1836 = vsel %vm918, %v1834, 0
        %1838 = vmatprep.subr.bf16.mxu0 0
        %1839 = vmatpush1.bf16.xpose.msra.mxu0 0
        %1840 = vmatprep.subr.bf16.mxu0 0
        %1841 = vmatpush1.bf16.xpose.msra.mxu0 0
        %1842 = vmatprep.subr.bf16.mxu0 0
        %1843 = vmatpush1.bf16.xpose.msra.mxu0 0
        %1844 = vmatprep.subr.bf16.mxu0 0
        %1845 = vmatpush1.bf16.xpose.msra.mxu0 0
        %1846 = vmatprep.subr.bf16.mxu0 0
        %1847 = vmatpush1.bf16.xpose.msra.mxu0 0
        %1848 = vmatprep.subr.bf16.mxu0 0
        %1849 = vmatpush1.bf16.xpose.msra.mxu0 0
        %1850 = vmatprep.subr.bf16.mxu0 0
        %1851 = vmatpush1.bf16.xpose.msra.mxu0 %v998
        %1852 = vmatprep.subr.bf16.mxu0 0
        %1853 = vmatpush1.bf16.xpose.msra.mxu0 %v995
        %1854 = vmatprep.subr.bf16.mxu0 0
        %1855 = vmatpush2.bf16.xpose.msra.mxu0 0
        %1856 = vmatprep.subr.bf16.mxu0 0
        %1857 = vmatpush2.bf16.xpose.msra.mxu0 0
        %1858 = vmatprep.subr.bf16.mxu0 0
        %1859 = vmatpush2.bf16.xpose.msra.mxu0 0
        %1860 = vmatprep.subr.bf16.mxu0 0
        %1861 = vmatpush2.bf16.xpose.msra.mxu0 0
        %1862 = vmatprep.subr.bf16.mxu0 0
        %1863 = vmatpush2.bf16.xpose.msra.mxu0 0
        %1864 = vmatprep.subr.bf16.mxu0 0
        %1865 = vmatpush2.bf16.xpose.msra.mxu0 0
        %1866 = vmatprep.subr.bf16.mxu0 0
        %1867 = vmatpush2.bf16.xpose.msra.mxu0 0
        %1868 = vmatprep.subr.bf16.mxu0 0
        %1869 = vmatpush2.bf16.xpose.msra.mxu0 0
        %1870 = vmatprep.mubr.bf16.mxu0 0
        %1871 = vmatmul.mubr.bf16.gmra.mxu0 %v1836
        %v1872 = vpop.f32.mrf.mxu0
        %v1873 = vadd.f32 0.0, %v1872
        %v1874 = vpop.f32.mrf.mxu0
        %v1875 = vpop.f32.mrf.mxu0
        %v1876 = vadd.f32 0.0, %v1875
        %v1877 = vpop.f32.mrf.mxu0
        %1878 = vdwg.mxu0
        %v1879 = vsel %vm1041, %v1873, -inf
        %1880 = vmax.xlane.f32.xlu0 %v1879
        %v1881 = vpop.xlane.xlu0 %1880
        %v1882 = vsel %vm1041, %v1876, -inf
        %1883 = vmax.xlane.f32.xlu0 %v1882
        %v1884 = vpop.xlane.xlu0 %1883
        %v1885 = vsub.f32 %v1873, %v1881
        %v1886 = vsub.f32 %v1876, %v1884
        %v1887 = vmul.f32 %v1885, 1.442695
        %v1888 = vpow.pop %v1887
        %v1889 = vmul.f32 %v1886, 1.442695
        %v1890 = vpow.pop %v1889
        %v1891 = vsel %vm1041, %v1888, 0.0
        %1892 = vadd.xlane.f32.xlu0 %v1891
        %v1893 = vpop.xlane.xlu0 %1892
        %v1894 = vsel %vm1041, %v1890, 0.0
        %1895 = vadd.xlane.f32.xlu0 %v1894
        %v1896 = vpop.xlane.xlu0 %1895
        %v1897 = vrcp.pop %v1893
        %v1898 = vrcp.pop %v1896
        %v1899 = vpack.c.bf16 %v1890, %v1888
        %v1901 = vsel %vm1041, %v1899, 0
        %1903 = vmatprep.subr.bf16.mxu0 0
        %1904 = vmatpush1.bf16.msra.mxu0 0
        %1905 = vmatprep.subr.bf16.mxu0 0
        %1906 = vmatpush1.bf16.msra.mxu0 0
        %1907 = vmatprep.subr.bf16.mxu0 0
        %1908 = vmatpush1.bf16.msra.mxu0 0
        %1909 = vmatprep.subr.bf16.mxu0 0
        %1910 = vmatpush1.bf16.msra.mxu0 0
        %1911 = vmatprep.subr.bf16.mxu0 0
        %1912 = vmatpush1.bf16.msra.mxu0 0
        %1913 = vmatprep.subr.bf16.mxu0 0
        %1914 = vmatpush1.bf16.msra.mxu0 0
        %1915 = vmatprep.subr.bf16.mxu0 0
        %1916 = vmatpush1.bf16.msra.mxu0 %v1072
        %1917 = vmatprep.subr.bf16.mxu0 0
        %1918 = vmatpush1.bf16.msra.mxu0 %v1071
        %1919 = vmatprep.subr.bf16.mxu0 0
        %1920 = vmatpush2.bf16.msra.mxu0 0
        %1921 = vmatprep.subr.bf16.mxu0 0
        %1922 = vmatpush2.bf16.msra.mxu0 0
        %1923 = vmatprep.subr.bf16.mxu0 0
        %1924 = vmatpush2.bf16.msra.mxu0 0
        %1925 = vmatprep.subr.bf16.mxu0 0
        %1926 = vmatpush2.bf16.msra.mxu0 0
        %1927 = vmatprep.subr.bf16.mxu0 0
        %1928 = vmatpush2.bf16.msra.mxu0 0
        %1929 = vmatprep.subr.bf16.mxu0 0
        %1930 = vmatpush2.bf16.msra.mxu0 0
        %1931 = vmatprep.subr.bf16.mxu0 0
        %1932 = vmatpush2.bf16.msra.mxu0 0
        %1933 = vmatprep.subr.bf16.mxu0 0
        %1934 = vmatpush2.bf16.msra.mxu0 0
        %1935 = vmatprep.mubr.bf16.mxu0 0
        %1936 = vmatmul.mubr.bf16.gmra.mxu0 %v1901
        %v1937 = vpop.f32.mrf.mxu0
        %v1938 = vadd.f32 0.0, %v1937
        %v1939 = vpop.f32.mrf.mxu0
        %v1940 = vpop.f32.mrf.mxu0
        %v1941 = vadd.f32 0.0, %v1940
        %v1942 = vpop.f32.mrf.mxu0
        %1943 = vdwg.mxu0
        %s1944 = scalar_lea.vmem %s9, 6
        %v1945 = vld [vmem:[%s1944] sm:$0x1]
        %v1947 = vlaneseq
        %v1948 = vshrl.u32 %v1947, 7
        %v1949 = vsub.s32 0, %v1948
        %v1950 = vrot.slane %v1945, %v1949
        %v1952 = vmul.f32 %v1897, %v1950
        %v1953 = vmul.f32 %v1898, %v1950
        %v1954 = vmul.f32 %v1938, %v1952
        %v1955 = vmul.f32 %v1941, %v1953
        %v1956 = vadd.f32 %v1822, %v1954
        %v1957 = vadd.f32 %v1823, %v1955
        %1958 = vst.msk [vmem:[#allocation5] sm:$0xff] %vm918, %v1956
        %1959 = vst.msk [vmem:[#allocation5 + $0x8] sm:$0xff] %vm918, %v1957
        %v1960 = vld [vmem:[#allocation5] sm:$0xff]
        %v1961 = vld [vmem:[#allocation5 + $0x8] sm:$0xff]
        %s1962 = scalar_lea.vmem %s8, 7
        %v1963 = vld [vmem:[%s1962] sm:$0x1]
        %v1965 = vlaneseq
        %v1966 = vshrl.u32 %v1965, 7
        %v1967 = vsub.s32 0, %v1966
        %v1968 = vrot.slane %v1963, %v1967
        %v1970 = vmul.f32 %v957, %v1968
        %v1971 = vmul.f32 %v960, %v1968
        %v1972 = vpack.c.bf16 %v1971, %v1970
        %v1974 = vsel %vm918, %v1972, 0
        %1976 = vmatprep.subr.bf16.mxu0 0
        %1977 = vmatpush1.bf16.xpose.msra.mxu0 0
        %1978 = vmatprep.subr.bf16.mxu0 0
        %1979 = vmatpush1.bf16.xpose.msra.mxu0 0
        %1980 = vmatprep.subr.bf16.mxu0 0
        %1981 = vmatpush1.bf16.xpose.msra.mxu0 0
        %1982 = vmatprep.subr.bf16.mxu0 0
        %1983 = vmatpush1.bf16.xpose.msra.mxu0 0
        %1984 = vmatprep.subr.bf16.mxu0 0
        %1985 = vmatpush1.bf16.xpose.msra.mxu0 0
        %1986 = vmatprep.subr.bf16.mxu0 0
        %1987 = vmatpush1.bf16.xpose.msra.mxu0 0
        %1988 = vmatprep.subr.bf16.mxu0 0
        %1989 = vmatpush1.bf16.xpose.msra.mxu0 %v998
        %1990 = vmatprep.subr.bf16.mxu0 0
        %1991 = vmatpush1.bf16.xpose.msra.mxu0 %v995
        %1992 = vmatprep.subr.bf16.mxu0 0
        %1993 = vmatpush2.bf16.xpose.msra.mxu0 0
        %1994 = vmatprep.subr.bf16.mxu0 0
        %1995 = vmatpush2.bf16.xpose.msra.mxu0 0
        %1996 = vmatprep.subr.bf16.mxu0 0
        %1997 = vmatpush2.bf16.xpose.msra.mxu0 0
        %1998 = vmatprep.subr.bf16.mxu0 0
        %1999 = vmatpush2.bf16.xpose.msra.mxu0 0
        %2000 = vmatprep.subr.bf16.mxu0 0
        %2001 = vmatpush2.bf16.xpose.msra.mxu0 0
        %2002 = vmatprep.subr.bf16.mxu0 0
        %2003 = vmatpush2.bf16.xpose.msra.mxu0 0
        %2004 = vmatprep.subr.bf16.mxu0 0
        %2005 = vmatpush2.bf16.xpose.msra.mxu0 0
        %2006 = vmatprep.subr.bf16.mxu0 0
        %2007 = vmatpush2.bf16.xpose.msra.mxu0 0
        %2008 = vmatprep.mubr.bf16.mxu0 0
        %2009 = vmatmul.mubr.bf16.gmra.mxu0 %v1974
        %v2010 = vpop.f32.mrf.mxu0
        %v2011 = vadd.f32 0.0, %v2010
        %v2012 = vpop.f32.mrf.mxu0
        %v2013 = vpop.f32.mrf.mxu0
        %v2014 = vadd.f32 0.0, %v2013
        %v2015 = vpop.f32.mrf.mxu0
        %2016 = vdwg.mxu0
        %v2017 = vsel %vm1041, %v2011, -inf
        %2018 = vmax.xlane.f32.xlu0 %v2017
        %v2019 = vpop.xlane.xlu0 %2018
        %v2020 = vsel %vm1041, %v2014, -inf
        %2021 = vmax.xlane.f32.xlu0 %v2020
        %v2022 = vpop.xlane.xlu0 %2021
        %v2023 = vsub.f32 %v2011, %v2019
        %v2024 = vsub.f32 %v2014, %v2022
        %v2025 = vmul.f32 %v2023, 1.442695
        %v2026 = vpow.pop %v2025
        %v2027 = vmul.f32 %v2024, 1.442695
        %v2028 = vpow.pop %v2027
        %v2029 = vsel %vm1041, %v2026, 0.0
        %2030 = vadd.xlane.f32.xlu0 %v2029
        %v2031 = vpop.xlane.xlu0 %2030
        %v2032 = vsel %vm1041, %v2028, 0.0
        %2033 = vadd.xlane.f32.xlu0 %v2032
        %v2034 = vpop.xlane.xlu0 %2033
        %v2035 = vrcp.pop %v2031
        %v2036 = vrcp.pop %v2034
        %v2037 = vpack.c.bf16 %v2028, %v2026
        %v2039 = vsel %vm1041, %v2037, 0
        %2041 = vmatprep.subr.bf16.mxu0 0
        %2042 = vmatpush1.bf16.msra.mxu0 0
        %2043 = vmatprep.subr.bf16.mxu0 0
        %2044 = vmatpush1.bf16.msra.mxu0 0
        %2045 = vmatprep.subr.bf16.mxu0 0
        %2046 = vmatpush1.bf16.msra.mxu0 0
        %2047 = vmatprep.subr.bf16.mxu0 0
        %2048 = vmatpush1.bf16.msra.mxu0 0
        %2049 = vmatprep.subr.bf16.mxu0 0
        %2050 = vmatpush1.bf16.msra.mxu0 0
        %2051 = vmatprep.subr.bf16.mxu0 0
        %2052 = vmatpush1.bf16.msra.mxu0 0
        %2053 = vmatprep.subr.bf16.mxu0 0
        %2054 = vmatpush1.bf16.msra.mxu0 %v1072
        %2055 = vmatprep.subr.bf16.mxu0 0
        %2056 = vmatpush1.bf16.msra.mxu0 %v1071
        %2057 = vmatprep.subr.bf16.mxu0 0
        %2058 = vmatpush2.bf16.msra.mxu0 0
        %2059 = vmatprep.subr.bf16.mxu0 0
        %2060 = vmatpush2.bf16.msra.mxu0 0
        %2061 = vmatprep.subr.bf16.mxu0 0
        %2062 = vmatpush2.bf16.msra.mxu0 0
        %2063 = vmatprep.subr.bf16.mxu0 0
        %2064 = vmatpush2.bf16.msra.mxu0 0
        %2065 = vmatprep.subr.bf16.mxu0 0
        %2066 = vmatpush2.bf16.msra.mxu0 0
        %2067 = vmatprep.subr.bf16.mxu0 0
        %2068 = vmatpush2.bf16.msra.mxu0 0
        %2069 = vmatprep.subr.bf16.mxu0 0
        %2070 = vmatpush2.bf16.msra.mxu0 0
        %2071 = vmatprep.subr.bf16.mxu0 0
        %2072 = vmatpush2.bf16.msra.mxu0 0
        %2073 = vmatprep.mubr.bf16.mxu0 0
        %2074 = vmatmul.mubr.bf16.gmra.mxu0 %v2039
        %v2075 = vpop.f32.mrf.mxu0
        %v2076 = vadd.f32 0.0, %v2075
        %v2077 = vpop.f32.mrf.mxu0
        %v2078 = vpop.f32.mrf.mxu0
        %v2079 = vadd.f32 0.0, %v2078
        %v2080 = vpop.f32.mrf.mxu0
        %2081 = vdwg.mxu0
        %s2082 = scalar_lea.vmem %s9, 7
        %v2083 = vld [vmem:[%s2082] sm:$0x1]
        %v2085 = vlaneseq
        %v2086 = vshrl.u32 %v2085, 7
        %v2087 = vsub.s32 0, %v2086
        %v2088 = vrot.slane %v2083, %v2087
        %v2090 = vmul.f32 %v2035, %v2088
        %v2091 = vmul.f32 %v2036, %v2088
        %v2092 = vmul.f32 %v2076, %v2090
        %v2093 = vmul.f32 %v2079, %v2091
        %v2094 = vadd.f32 %v1960, %v2092
        %v2095 = vadd.f32 %v1961, %v2093
        %2096 = vst.msk [vmem:[#allocation5] sm:$0xff] %vm918, %v2094
        %2097 = vst.msk [vmem:[#allocation5 + $0x8] sm:$0xff] %vm918, %v2095
        %v2098 = vld [vmem:[#allocation5] sm:$0xff]
        %v2099 = vld [vmem:[#allocation5 + $0x8] sm:$0xff]
        %v2100 = vld [vmem:[%s10] sm:$0x1]
        %v2101 = vld [vmem:[#allocation4] sm:$0x1]
        %v2102 = vmul.f32 %v2100, %v2101
        %v2104 = vlaneseq
        %v2105 = vshrl.u32 %v2104, 7
        %v2106 = vsub.s32 0, %v2105
        %v2107 = vrot.slane %v2102, %v2106
        %v2109 = vadd.f32 %v2098, %v2107
        %v2110 = vadd.f32 %v2099, %v2107
        %v2111 = vpack.c.bf16 %v2110, %v2109
        %v2112 = vld [vmem:[#allocation20] sm:$0xf]
        %v2113 = vld [vmem:[#allocation20 + $0x4] sm:$0xf]
        %v2114 = vld [vmem:[#allocation20 + $0x8] sm:$0xf]
        %v2115 = vld [vmem:[#allocation20 + $0xc] sm:$0xf]
        %v2116 = vld [vmem:[#allocation20 + $0x10] sm:$0xf]
        %v2117 = vld [vmem:[#allocation20 + $0x14] sm:$0xf]
        %v2118 = vld [vmem:[#allocation20 + $0x18] sm:$0xf]
        %v2119 = vld [vmem:[#allocation20 + $0x1c] sm:$0xf]
        %v2120 = vld [vmem:[%s12] sm:$0x1]
        %v2122 = vlaneseq
        %v2123 = vshrl.u32 %v2122, 7
        %v2124 = vsub.s32 0, %v2123
        %v2125 = vrot.slane %v2120, %v2124
        %v2135 = vunpack.c.l.b16 %v2112
        %v2136 = vunpack.c.l.b16 %v2113
        %v2137 = vunpack.c.l.b16 %v2114
        %v2138 = vunpack.c.l.b16 %v2115
        %v2139 = vunpack.c.l.b16 %v2116
        %v2140 = vunpack.c.l.b16 %v2117
        %v2141 = vunpack.c.l.b16 %v2118
        %v2142 = vunpack.c.l.b16 %v2119
        %v2143 = vpack.c.b16 %v2136, %v2135
        %v2144 = vpack.c.b16 %v2138, %v2137
        %v2145 = vpack.c.b16 %v2140, %v2139
        %v2146 = vpack.c.b16 %v2142, %v2141
        %v2152 = vsel %vm918, %v2111, 0
        %2154 = vmatprep.subr.bf16.mxu0 0
        %2155 = vmatpush1.bf16.msra.mxu0 0
        %2156 = vmatprep.subr.bf16.mxu0 0
        %2157 = vmatpush1.bf16.msra.mxu0 0
        %2158 = vmatprep.subr.bf16.mxu0 0
        %2159 = vmatpush1.bf16.msra.mxu0 0
        %2160 = vmatprep.subr.bf16.mxu0 0
        %2161 = vmatpush1.bf16.msra.mxu0 0
        %2162 = vmatprep.subr.bf16.mxu0 0
        %2163 = vmatpush1.bf16.msra.mxu0 %v2146
        %2164 = vmatprep.subr.bf16.mxu0 0
        %2165 = vmatpush1.bf16.msra.mxu0 %v2145
        %2166 = vmatprep.subr.bf16.mxu0 0
        %2167 = vmatpush1.bf16.msra.mxu0 %v2144
        %2168 = vmatprep.subr.bf16.mxu0 0
        %2169 = vmatpush1.bf16.msra.mxu0 %v2143
        %2170 = vmatprep.subr.bf16.mxu0 0
        %2171 = vmatpush2.bf16.msra.mxu0 0
        %2172 = vmatprep.subr.bf16.mxu0 0
        %2173 = vmatpush2.bf16.msra.mxu0 0
        %2174 = vmatprep.subr.bf16.mxu0 0
        %2175 = vmatpush2.bf16.msra.mxu0 0
        %2176 = vmatprep.subr.bf16.mxu0 0
        %2177 = vmatpush2.bf16.msra.mxu0 0
        %2178 = vmatprep.subr.bf16.mxu0 0
        %2179 = vmatpush2.bf16.msra.mxu0 0
        %2180 = vmatprep.subr.bf16.mxu0 0
        %2181 = vmatpush2.bf16.msra.mxu0 0
        %2182 = vmatprep.subr.bf16.mxu0 0
        %2183 = vmatpush2.bf16.msra.mxu0 0
        %2184 = vmatprep.subr.bf16.mxu0 0
        %2185 = vmatpush2.bf16.msra.mxu0 0
        %2186 = vmatprep.mubr.bf16.mxu0 0
        %2187 = vmatmul.mubr.bf16.gmra.mxu0 %v2152
        %v2188 = vpop.f32.mrf.mxu0
        %v2189 = vadd.f32 %v2125, %v2188
        %v2190 = vpop.f32.mrf.mxu0
        %v2191 = vpop.f32.mrf.mxu0
        %v2192 = vadd.f32 %v2125, %v2191
        %v2193 = vpop.f32.mrf.mxu0
        %2194 = vdwg.mxu0
        %2195 = vst.msk [vmem:[%s611] sm:$0xff] %vm918, %v2189
        %2196 = vst.msk [vmem:[%s611 + $0x8] sm:$0xff] %vm918, %v2192
        %s2197 = sand.u32 %s343, 1
        %s2198 = scalar_lea.sflag [#allocation8], %s2197
        %s2199 = sand.u32 %s343, 1
        %s2200 = smul.addr %s2199, 16
        %s2201 = scalar_lea.vmem [#allocation21], %s2200
        // Predicated region
        $region113: #{tpu_custom_call.1} parent=71 // pred_check
          %p2202 = pneg %p353
        $region114: #{tpu_custom_call.1} parent=71 // pred_check_branch
          %2204 = sbr.rel (%p2202) target = $region116
        $region115: #{tpu_custom_call.1} parent=71 // pred_region
          %s2205 = smul.u32 2, %s41
          %s2207 = ssub.s32 256, 256
          %2208 = vsyncadd %s2198, %s2207
          %s2209 = smul.addr %s40, 4
          %s2210 = sadd.s32 %s2205, %s2209
          %s2211 = smul.addr %s2210, 128
          %s2212 = scalar_lea.hbm %s13, %s2211
          %s2213 = sshll.u32 %s2201, 4
          %s2214 = int_to_ptr.vmem [resolvable:$true] %s2213
          %2219 = dma.vmem_to_hbm [thread:$0]  %s2214, 256, %s2212, %s2198, 128, 128, 8
        $region116: #{tpu_custom_call.1} parent=71 // pred_fallthru
          _
      $region72: #{tpu_custom_call.1} parent=5 // pred_fallthru
        _
      %p2220 = scmp.le.s32.totalorder 2, %s31
      // Predicated region
      $region117: #{tpu_custom_call.1} parent=5 // pred_check
        %p2221 = pneg %p2220
      $region118: #{tpu_custom_call.1} parent=5 // pred_check_branch
        %2223 = sbr.rel (%p2221) target = $region120
      $region119: #{tpu_custom_call.1} parent=5 // pred_region
        %s2224 = ssub.s32 %s31, 2
        // Predicated region
        $region121: #{tpu_custom_call.1} parent=119 // pred_check
          %p2225 = pneg %p359
        $region122: #{tpu_custom_call.1} parent=119 // pred_check_branch
          %2227 = sbr.rel (%p2225) target = $region124
        $region123: #{tpu_custom_call.1} parent=119 // pred_region
          %s2228 = sand.u32 %s344, 1
          %s2229 = scalar_lea.sflag [#allocation8], %s2228
          %s2230 = sand.u32 %s344, 1
          %s2231 = smul.addr %s2230, 16
          %s2232 = scalar_lea.vmem [#allocation21], %s2231
          %2233 = dma.done %s2229, 256
        $region124: #{tpu_custom_call.1} parent=119 // pred_fallthru
          _
      $region120: #{tpu_custom_call.1} parent=5 // pred_fallthru
        _
    $region6: #{tpu_custom_call.1} parent=1 // loop_footer
      %s35 = sadd.s32 1, %s31
    $region7: #{tpu_custom_call.1} parent=1 // loop_footer_branch
      %30 = sbr.rel target = $region3
    $region8: #{tpu_custom_call.1} parent=1 // loop_exit
      _
    %2234 = vsyncpa [#allocation7], 1
    %s2235 = scalar_lea.sflag [#allocation7], 1
    %2236 = vsyncpa %s2235, 1
    %2237 = vsyncpa [#allocation10], 1
    %s2238 = scalar_lea.sflag [#allocation10], 1
    %2239 = vsyncpa %s2238, 1
    %2240 = vsyncpa [#allocation13], 1
    %2241 = vsyncpa [#allocation16], 1
    %2242 = vsyncpa [#allocation19], 1
    %2243 = vsyncpa [#allocation8], 1
    %s2244 = scalar_lea.sflag [#allocation8], 1
    %2245 = vsyncpa %s2244, 1

// kernel: tpu_custom_call.1
$region0: #{tpu_custom_call.1}
  #allocation0 [shape = 'u32[]', space=smem, size = 0x4, offset = 0x4, fixed_abs, tag = 'smem constant byte address 0x4 - core index']
  #allocation1 [shape = 'u32[144,128]{1,0:T(1,128)}', space=vmem, size = 0x12000, scoped, tag = 'internal scratch']
  #allocation2 [shape = 'bf16[32,64]{1,0:T(8,128)(2,1)}', space=vmem, size = 0x2000, scoped, tag = 'scratch operand']
  #allocation3 [shape = 'bf16[32,64]{1,0:T(8,128)(2,1)}', space=vmem, size = 0x2000, scoped, tag = 'scratch operand']
  #allocation4 [shape = 'f32[1,64]{1,0:T(1,128)}', space=vmem, size = 0x200, scoped, tag = 'scratch operand']
  #allocation5 [shape = 'f32[16,64]{1,0:T(8,128)}', space=vmem, size = 0x2000, scoped, tag = 'scratch operand']
  %s0 = inlined_call_operand.hbm [shape: bf16[2,32,64], index: 0, kind: input, shape index: {}]
  %s1 = inlined_call_operand.hbm [shape: bf16[2,32,64], index: 1, kind: input, shape index: {}]
  %s2 = inlined_call_operand.hbm [shape: bf16[64,64], index: 2, kind: input, shape index: {}]
  %s3 = inlined_call_operand.hbm [shape: f32[1,64], index: 3, kind: input, shape index: {}]
  %s4 = inlined_call_operand.hbm [shape: bf16[64,64], index: 4, kind: input, shape index: {}]
  %s5 = inlined_call_operand.hbm [shape: f32[1,64], index: 5, kind: input, shape index: {}]
  %s6 = inlined_call_operand.hbm [shape: bf16[64,64], index: 6, kind: input, shape index: {}]
  %s7 = inlined_call_operand.hbm [shape: f32[1,64], index: 7, kind: input, shape index: {}]
  %s8 = inlined_call_operand.vmem [shape: f32[8,1,64], index: 8, kind: input, shape index: {}]
  %s9 = inlined_call_operand.vmem [shape: f32[8,1,64], index: 9, kind: input, shape index: {}]
  %s10 = inlined_call_operand.vmem [shape: f32[1,64], index: 10, kind: input, shape index: {}]
  %s11 = inlined_call_operand.hbm [shape: bf16[64,64], index: 11, kind: input, shape index: {}]
  %s12 = inlined_call_operand.vmem [shape: f32[1,64], index: 12, kind: input, shape index: {}]
  %s13 = inlined_call_operand.hbm [shape: f32[2,32,64], index: 13, kind: output, shape index: {}]
  %s14 = sld [smem:[#allocation0]]
  $region125: #{tpu_custom_call.1} parent=0
    _
  %s16 = ssub.s32 1, %s14
  %s17 = scalar_select 0, %s16, %s14
  $region1: #{tpu_custom_call.1} parent=0
    #allocation6 [shape = 'u8[8192]{0}', space=vmem, size = 0x2000, scoped, tag = 'input window, operand 0']
    #allocation7 [shape = 's32[2]{0}', space=sflag, size = 0x8, scoped, tag = 'scoped memory for tpu_custom_call.1']
    #allocation8 [shape = 's32[2]{0}', space=sflag, size = 0x8, scoped, tag = 'scoped memory for tpu_custom_call.1']
    #allocation9 [shape = 'u8[16384]{0}', space=vmem, size = 0x4000, scoped, tag = 'input window, operand 1']
    #allocation10 [shape = 's32[2]{0}', space=sflag, size = 0x8, scoped, tag = 'scoped memory for tpu_custom_call.1']
    #allocation11 [shape = 'u8[16384]{0}', space=vmem, size = 0x4000, scoped, tag = 'input window, operand 2, single buffered']
    #allocation12 [shape = 'u8[512]{0}', space=vmem, size = 0x400, scoped, tag = 'input window, operand 3, single buffered']
    #allocation13 [shape = 's32[1]{0}', space=sflag, size = 0x4, scoped, tag = 'scoped memory for tpu_custom_call.1']
    #allocation14 [shape = 'u8[16384]{0}', space=vmem, size = 0x4000, scoped, tag = 'input window, operand 4, single buffered']
    #allocation15 [shape = 'u8[512]{0}', space=vmem, size = 0x400, scoped, tag = 'input window, operand 5, single buffered']
    #allocation16 [shape = 's32[1]{0}', space=sflag, size = 0x4, scoped, tag = 'scoped memory for tpu_custom_call.1']
    #allocation17 [shape = 'u8[16384]{0}', space=vmem, size = 0x4000, scoped, tag = 'input window, operand 6, single buffered']
    #allocation18 [shape = 'u8[512]{0}', space=vmem, size = 0x400, scoped, tag = 'input window, operand 7, single buffered']
    #allocation19 [shape = 's32[1]{0}', space=sflag, size = 0x4, scoped, tag = 'scoped memory for tpu_custom_call.1']
    #allocation20 [shape = 'u8[16384]{0}', space=vmem, size = 0x4000, scoped, tag = 'input window, operand 11, single buffered']
    #allocation21 [shape = 'u8[16384]{0}', space=vmem, size = 0x4000, scoped, tag = 'output window, operand 0']
    %18 = vsyncpa [#allocation7], 0
    %s19 = scalar_lea.sflag [#allocation7], 1
    %20 = vsyncpa %s19, 0
    %21 = vsyncpa [#allocation10], 0
    %s22 = scalar_lea.sflag [#allocation10], 1
    %23 = vsyncpa %s22, 0
    %24 = vsyncpa [#allocation13], 0
    %25 = vsyncpa [#allocation16], 0
    %26 = vsyncpa [#allocation19], 0
    %27 = vsyncpa [#allocation8], 0
    %s28 = scalar_lea.sflag [#allocation8], 1
    %29 = vsyncpa %s28, 0
    loop: start=0, step=1, limit=6
    $region2: #{tpu_custom_call.1} parent=1 // loop_pre_header
      _
    $region3: #{tpu_custom_call.1} parent=1 // loop_header
      %s31 = sphi 0, %s35
      %p32 = scmp.ge.s32.totalorder %s31, 6
      %s38 = sphi 0, %s50
      %s39 = sphi 0, %s46
      %s40 = sphi 0, %s38
      %s41 = sphi 0, %s39
      %s42 = sphi 0, %s40
      %s43 = sphi 0, %s41
      %s55 = sphi 0, %s57
      %s58 = sphi 0, %s55
      %s59 = sphi 0, %s58
      %s75 = sphi 0, %s59
      %s81 = sphi 0, %s83
      %s84 = sphi 0, %s81
      %s85 = sphi 0, %s84
      %s101 = sphi 0, %s85
      %s105 = sphi 0, %s105
      %s107 = sphi 0, %s105
      %s108 = sphi 0, %s107
      %s122 = sphi 0, %s108
      %s126 = sphi 0, %s126
      %s128 = sphi 0, %s126
      %s129 = sphi 0, %s128
      %s143 = sphi 0, %s129
      %s147 = sphi 0, %s147
      %s149 = sphi 0, %s147
      %s150 = sphi 0, %s149
      %s164 = sphi 0, %s150
      %s168 = sphi 0, %s168
      %s170 = sphi 0, %s168
      %s171 = sphi 0, %s170
      %s185 = sphi 0, %s171
      %s189 = sphi 0, %s189
      %s191 = sphi 0, %s189
      %s192 = sphi 0, %s191
      %s206 = sphi 0, %s192
      %s210 = sphi 0, %s210
      %s212 = sphi 0, %s210
      %s213 = sphi 0, %s212
      %s227 = sphi 0, %s213
      %s231 = sphi 0, %s231
      %s233 = sphi 0, %s231
      %s234 = sphi 0, %s233
      %s248 = sphi 0, %s234
      %s252 = sphi 0, %s252
      %s254 = sphi 0, %s252
      %s255 = sphi 0, %s254
      %s269 = sphi 0, %s255
      %s273 = sphi 0, %s273
      %s275 = sphi 0, %s273
      %s276 = sphi 0, %s275
      %s290 = sphi 0, %s276
      %s294 = sphi 0, %s294
      %s296 = sphi 0, %s294
      %s297 = sphi 0, %s296
      %s311 = sphi 0, %s297
      %s315 = sphi 0, %s315
      %s317 = sphi 0, %s315
      %s318 = sphi 0, %s317
      %s332 = sphi 0, %s318
      %s340 = sphi 0, %s342
      %s343 = sphi 0, %s340
      %s344 = sphi 0, %s343
      %s360 = sphi 0, %s344
    $region4: #{tpu_custom_call.1} parent=1 // loop_header_branch
      %34 = sbr.rel (%p32) target = $region8
    $region5: #{tpu_custom_call.1} parent=1 // loop_body
      %s36 = ssub.s32 %s31, 1
      %s37 = ssub.s32 %s31, 2
      %s44 = sadd.s32 1, %s39
      %p45 = scmp.ge.s32.totalorder %s44, 2
      %s46 = scalar_select %p45, 0, %s44
      %s47 = sadd.s32 1, %s38
      %s48 = scalar_select %p45, %s47, %s38
      %p49 = scmp.ge.s32.totalorder %s48, 2
      %s50 = scalar_select %p49, 0, %s48
      %s51 = ssub.s32 %s38, %s50
      %s52 = ssub.s32 %s39, %s46
      %s53 = sor.u32 %s51, %s52
      %p54 = scmp.eq.s32.totalorder %s53, 0
      %s56 = sadd.s32 %s55, 1
      %s57 = scalar_select %p54, %s55, %s56
      %p60 = pneg %p54
      %p61 = scmp.eq.s32.totalorder %s31, 3
      %p62 = por %p60, %p61
      %p63 = scmp.ne.s32.totalorder %s55, %s58
      %p64 = scmp.eq.s32.totalorder %s31, 0
      %p65 = por %p63, %p64
      %p66 = scmp.ne.s32.totalorder %s55, %s58
      %p67 = scmp.eq.s32.totalorder %s36, 3
      %p68 = por %p66, %p67
      %p69 = scmp.ne.s32.totalorder %s58, %s59
      %p70 = scmp.eq.s32.totalorder %s36, 0
      %p71 = por %p69, %p70
      %p72 = scmp.ne.s32.totalorder %s58, %s59
      %p73 = scmp.eq.s32.totalorder %s37, 3
      %p74 = por %p72, %p73
      %p76 = scmp.ne.s32.totalorder %s59, %s75
      %p77 = scmp.eq.s32.totalorder %s37, 0
      %p78 = por %p76, %p77
      %s79 = ssub.s32 %s38, %s50
      %p80 = scmp.eq.s32.totalorder %s79, 0
      %s82 = sadd.s32 %s81, 1
      %s83 = scalar_select %p80, %s81, %s82
      %p86 = pneg %p80
      %p87 = scmp.eq.s32.totalorder %s31, 3
      %p88 = por %p86, %p87
      %p89 = scmp.ne.s32.totalorder %s81, %s84
      %p90 = scmp.eq.s32.totalorder %s31, 0
      %p91 = por %p89, %p90
      %p92 = scmp.ne.s32.totalorder %s81, %s84
      %p93 = scmp.eq.s32.totalorder %s36, 3
      %p94 = por %p92, %p93
      %p95 = scmp.ne.s32.totalorder %s84, %s85
      %p96 = scmp.eq.s32.totalorder %s36, 0
      %p97 = por %p95, %p96
      %p98 = scmp.ne.s32.totalorder %s84, %s85
      %p99 = scmp.eq.s32.totalorder %s37, 3
      %p100 = por %p98, %p99
      %p102 = scmp.ne.s32.totalorder %s85, %s101
      %p103 = scmp.eq.s32.totalorder %s37, 0
      %p104 = por %p102, %p103
      %s106 = sadd.s32 %s105, 1
      %p109 = scmp.eq.s32.totalorder %s31, 3
      %p110 = scmp.ne.s32.totalorder %s105, %s107
      %p111 = scmp.eq.s32.totalorder %s31, 0
      %p112 = por %p110, %p111
      %p113 = scmp.ne.s32.totalorder %s105, %s107
      %p114 = scmp.eq.s32.totalorder %s36, 3
      %p115 = por %p113, %p114
      %p116 = scmp.ne.s32.totalorder %s107, %s108
      %p117 = scmp.eq.s32.totalorder %s36, 0
      %p118 = por %p116, %p117
      %p119 = scmp.ne.s32.totalorder %s107, %s108
      %p120 = scmp.eq.s32.totalorder %s37, 3
      %p121 = por %p119, %p120
      %p123 = scmp.ne.s32.totalorder %s108, %s122
      %p124 = scmp.eq.s32.totalorder %s37, 0
      %p125 = por %p123, %p124
      %s127 = sadd.s32 %s126, 1
      %p130 = scmp.eq.s32.totalorder %s31, 3
      %p131 = scmp.ne.s32.totalorder %s126, %s128
      %p132 = scmp.eq.s32.totalorder %s31, 0
      %p133 = por %p131, %p132
      %p134 = scmp.ne.s32.totalorder %s126, %s128
      %p135 = scmp.eq.s32.totalorder %s36, 3
      %p136 = por %p134, %p135
      %p137 = scmp.ne.s32.totalorder %s128, %s129
      %p138 = scmp.eq.s32.totalorder %s36, 0
      %p139 = por %p137, %p138
      %p140 = scmp.ne.s32.totalorder %s128, %s129
      %p141 = scmp.eq.s32.totalorder %s37, 3
      %p142 = por %p140, %p141
      %p144 = scmp.ne.s32.totalorder %s129, %s143
      %p145 = scmp.eq.s32.totalorder %s37, 0
      %p146 = por %p144, %p145
      %s148 = sadd.s32 %s147, 1
      %p151 = scmp.eq.s32.totalorder %s31, 3
      %p152 = scmp.ne.s32.totalorder %s147, %s149
      %p153 = scmp.eq.s32.totalorder %s31, 0
      %p154 = por %p152, %p153
      %p155 = scmp.ne.s32.totalorder %s147, %s149
      %p156 = scmp.eq.s32.totalorder %s36, 3
      %p157 = por %p155, %p156
      %p158 = scmp.ne.s32.totalorder %s149, %s150
      %p159 = scmp.eq.s32.totalorder %s36, 0
      %p160 = por %p158, %p159
      %p161 = scmp.ne.s32.totalorder %s149, %s150
      %p162 = scmp.eq.s32.totalorder %s37, 3
      %p163 = por %p161, %p162
      %p165 = scmp.ne.s32.totalorder %s150, %s164
      %p166 = scmp.eq.s32.totalorder %s37, 0
      %p167 = por %p165, %p166
      %s169 = sadd.s32 %s168, 1
      %p172 = scmp.eq.s32.totalorder %s31, 3
      %p173 = scmp.ne.s32.totalorder %s168, %s170
      %p174 = scmp.eq.s32.totalorder %s31, 0
      %p175 = por %p173, %p174
      %p176 = scmp.ne.s32.totalorder %s168, %s170
      %p177 = scmp.eq.s32.totalorder %s36, 3
      %p178 = por %p176, %p177
      %p179 = scmp.ne.s32.totalorder %s170, %s171
      %p180 = scmp.eq.s32.totalorder %s36, 0
      %p181 = por %p179, %p180
      %p182 = scmp.ne.s32.totalorder %s170, %s171
      %p183 = scmp.eq.s32.totalorder %s37, 3
      %p184 = por %p182, %p183
      %p186 = scmp.ne.s32.totalorder %s171, %s185
      %p187 = scmp.eq.s32.totalorder %s37, 0
      %p188 = por %p186, %p187
      %s190 = sadd.s32 %s189, 1
      %p193 = scmp.eq.s32.totalorder %s31, 3
      %p194 = scmp.ne.s32.totalorder %s189, %s191
      %p195 = scmp.eq.s32.totalorder %s31, 0
      %p196 = por %p194, %p195
      %p197 = scmp.ne.s32.totalorder %s189, %s191
      %p198 = scmp.eq.s32.totalorder %s36, 3
      %p199 = por %p197, %p198
      %p200 = scmp.ne.s32.totalorder %s191, %s192
      %p201 = scmp.eq.s32.totalorder %s36, 0
      %p202 = por %p200, %p201
      %p203 = scmp.ne.s32.totalorder %s191, %s192
      %p204 = scmp.eq.s32.totalorder %s37, 3
      %p205 = por %p203, %p204
      %p207 = scmp.ne.s32.totalorder %s192, %s206
      %p208 = scmp.eq.s32.totalorder %s37, 0
      %p209 = por %p207, %p208
      %s211 = sadd.s32 %s210, 1
      %p214 = scmp.eq.s32.totalorder %s31, 3
      %p215 = scmp.ne.s32.totalorder %s210, %s212
      %p216 = scmp.eq.s32.totalorder %s31, 0
      %p217 = por %p215, %p216
      %p218 = scmp.ne.s32.totalorder %s210, %s212
      %p219 = scmp.eq.s32.totalorder %s36, 3
      %p220 = por %p218, %p219
      %p221 = scmp.ne.s32.totalorder %s212, %s213
      %p222 = scmp.eq.s32.totalorder %s36, 0
      %p223 = por %p221, %p222
      %p224 = scmp.ne.s32.totalorder %s212, %s213
      %p225 = scmp.eq.s32.totalorder %s37, 3
      %p226 = por %p224, %p225
      %p228 = scmp.ne.s32.totalorder %s213, %s227
      %p229 = scmp.eq.s32.totalorder %s37, 0
      %p230 = por %p228, %p229
      %s232 = sadd.s32 %s231, 1
      %p235 = scmp.eq.s32.totalorder %s31, 3
      %p236 = scmp.ne.s32.totalorder %s231, %s233
      %p237 = scmp.eq.s32.totalorder %s31, 0
      %p238 = por %p236, %p237
      %p239 = scmp.ne.s32.totalorder %s231, %s233
      %p240 = scmp.eq.s32.totalorder %s36, 3
      %p241 = por %p239, %p240
      %p242 = scmp.ne.s32.totalorder %s233, %s234
      %p243 = scmp.eq.s32.totalorder %s36, 0
      %p244 = por %p242, %p243
      %p245 = scmp.ne.s32.totalorder %s233, %s234
      %p246 = scmp.eq.s32.totalorder %s37, 3
      %p247 = por %p245, %p246
      %p249 = scmp.ne.s32.totalorder %s234, %s248
      %p250 = scmp.eq.s32.totalorder %s37, 0
      %p251 = por %p249, %p250
      %s253 = sadd.s32 %s252, 1
      %p256 = scmp.eq.s32.totalorder %s31, 3
      %p257 = scmp.ne.s32.totalorder %s252, %s254
      %p258 = scmp.eq.s32.totalorder %s31, 0
      %p259 = por %p257, %p258
      %p260 = scmp.ne.s32.totalorder %s252, %s254
      %p261 = scmp.eq.s32.totalorder %s36, 3
      %p262 = por %p260, %p261
      %p263 = scmp.ne.s32.totalorder %s254, %s255
      %p264 = scmp.eq.s32.totalorder %s36, 0
      %p265 = por %p263, %p264
      %p266 = scmp.ne.s32.totalorder %s254, %s255
      %p267 = scmp.eq.s32.totalorder %s37, 3
      %p268 = por %p266, %p267
      %p270 = scmp.ne.s32.totalorder %s255, %s269
      %p271 = scmp.eq.s32.totalorder %s37, 0
      %p272 = por %p270, %p271
      %s274 = sadd.s32 %s273, 1
      %p277 = scmp.eq.s32.totalorder %s31, 3
      %p278 = scmp.ne.s32.totalorder %s273, %s275
      %p279 = scmp.eq.s32.totalorder %s31, 0
      %p280 = por %p278, %p279
      %p281 = scmp.ne.s32.totalorder %s273, %s275
      %p282 = scmp.eq.s32.totalorder %s36, 3
      %p283 = por %p281, %p282
      %p284 = scmp.ne.s32.totalorder %s275, %s276
      %p285 = scmp.eq.s32.totalorder %s36, 0
      %p286 = por %p284, %p285
      %p287 = scmp.ne.s32.totalorder %s275, %s276
      %p288 = scmp.eq.s32.totalorder %s37, 3
      %p289 = por %p287, %p288
      %p291 = scmp.ne.s32.totalorder %s276, %s290
      %p292 = scmp.eq.s32.totalorder %s37, 0
      %p293 = por %p291, %p292
      %s295 = sadd.s32 %s294, 1
      %p298 = scmp.eq.s32.totalorder %s31, 3
      %p299 = scmp.ne.s32.totalorder %s294, %s296
      %p300 = scmp.eq.s32.totalorder %s31, 0
      %p301 = por %p299, %p300
      %p302 = scmp.ne.s32.totalorder %s294, %s296
      %p303 = scmp.eq.s32.totalorder %s36, 3
      %p304 = por %p302, %p303
      %p305 = scmp.ne.s32.totalorder %s296, %s297
      %p306 = scmp.eq.s32.totalorder %s36, 0
      %p307 = por %p305, %p306
      %p308 = scmp.ne.s32.totalorder %s296, %s297
      %p309 = scmp.eq.s32.totalorder %s37, 3
      %p310 = por %p308, %p309
      %p312 = scmp.ne.s32.totalorder %s297, %s311
      %p313 = scmp.eq.s32.totalorder %s37, 0
      %p314 = por %p312, %p313
      %s316 = sadd.s32 %s315, 1
      %p319 = scmp.eq.s32.totalorder %s31, 3
      %p320 = scmp.ne.s32.totalorder %s315, %s317
      %p321 = scmp.eq.s32.totalorder %s31, 0
      %p322 = por %p320, %p321
      %p323 = scmp.ne.s32.totalorder %s315, %s317
      %p324 = scmp.eq.s32.totalorder %s36, 3
      %p325 = por %p323, %p324
      %p326 = scmp.ne.s32.totalorder %s317, %s318
      %p327 = scmp.eq.s32.totalorder %s36, 0
      %p328 = por %p326, %p327
      %p329 = scmp.ne.s32.totalorder %s317, %s318
      %p330 = scmp.eq.s32.totalorder %s37, 3
      %p331 = por %p329, %p330
      %p333 = scmp.ne.s32.totalorder %s318, %s332
      %p334 = scmp.eq.s32.totalorder %s37, 0
      %p335 = por %p333, %p334
      %s336 = ssub.s32 %s38, %s50
      %s337 = ssub.s32 %s39, %s46
      %s338 = sor.u32 %s336, %s337
      %p339 = scmp.eq.s32.totalorder %s338, 0
      %s341 = sadd.s32 %s340, 1
      %s342 = scalar_select %p339, %s340, %s341
      %p345 = pneg %p339
      %p346 = scmp.eq.s32.totalorder %s31, 3
      %p347 = por %p345, %p346
      %p348 = scmp.ne.s32.totalorder %s340, %s343
      %p349 = scmp.eq.s32.totalorder %s31, 0
      %p350 = por %p348, %p349
      %p351 = scmp.ne.s32.totalorder %s340, %s343
      %p352 = scmp.eq.s32.totalorder %s36, 3
      %p353 = por %p351, %p352
      %p354 = scmp.ne.s32.totalorder %s343, %s344
      %p355 = scmp.eq.s32.totalorder %s36, 0
      %p356 = por %p354, %p355
      %p357 = scmp.ne.s32.totalorder %s343, %s344
      %p358 = scmp.eq.s32.totalorder %s37, 3
      %p359 = por %p357, %p358
      %p361 = scmp.ne.s32.totalorder %s344, %s360
      %p362 = scmp.eq.s32.totalorder %s37, 0
      %p363 = por %p361, %p362
      %p364 = scmp.le.s32.totalorder 1, %s31
      %p365 = scmp.lt.s32.totalorder %s31, 5
      %p366 = pnand %p364, %p365
      %p367 = pneg %p366
      // Predicated region
      $region9: #{tpu_custom_call.1} parent=5 // pred_check
        _
      $region10: #{tpu_custom_call.1} parent=5 // pred_check_branch
        %369 = sbr.rel (%p366) target = $region12
      $region11: #{tpu_custom_call.1} parent=5 // pred_region
        %s370 = ssub.s32 %s31, 1
        // Predicated region
        $region13: #{tpu_custom_call.1} parent=11 // pred_check
          %p371 = pneg %p118
        $region14: #{tpu_custom_call.1} parent=11 // pred_check_branch
          %373 = sbr.rel (%p371) target = $region16
        $region15: #{tpu_custom_call.1} parent=11 // pred_region
          %s375 = ssub.s32 512, 512
          %376 = vsyncadd [#allocation10], %s375
          %s377 = sshll.u32 [#allocation11], 4
          %s378 = int_to_ptr.vmem [resolvable:$true] %s377
          %383 = dma.hbm_to_vmem [thread:$0]  %s2, 512, %s378, [#allocation10], 64, 64, 4
        $region16: #{tpu_custom_call.1} parent=11 // pred_fallthru
          _
        // Predicated region
        $region17: #{tpu_custom_call.1} parent=11 // pred_check
          %p384 = pneg %p139
        $region18: #{tpu_custom_call.1} parent=11 // pred_check_branch
          %386 = sbr.rel (%p384) target = $region20
        $region19: #{tpu_custom_call.1} parent=11 // pred_region
          %s388 = ssub.s32 16, 16
          %389 = vsyncadd [#allocation13], %s388
          %s391 = sshll.u32 [#allocation12], 4
          %s392 = int_to_ptr.vmem [resolvable:$true] %s391
          %394 = dma.hbm_to_vmem [thread:$0]  %s3, 16, %s392, [#allocation13]
        $region20: #{tpu_custom_call.1} parent=11 // pred_fallthru
          _
        // Predicated region
        $region21: #{tpu_custom_call.1} parent=11 // pred_check
          %p395 = pneg %p160
        $region22: #{tpu_custom_call.1} parent=11 // pred_check_branch
          %397 = sbr.rel (%p395) target = $region24
        $region23: #{tpu_custom_call.1} parent=11 // pred_region
          %s399 = ssub.s32 512, 512
          %400 = vsyncadd [#allocation13], %s399
          %s401 = sshll.u32 [#allocation14], 4
          %s402 = int_to_ptr.vmem [resolvable:$true] %s401
          %407 = dma.hbm_to_vmem [thread:$0]  %s4, 512, %s402, [#allocation13], 64, 64, 4
        $region24: #{tpu_custom_call.1} parent=11 // pred_fallthru
          _
        // Predicated region
        $region25: #{tpu_custom_call.1} parent=11 // pred_check
          %p408 = pneg %p181
        $region26: #{tpu_custom_call.1} parent=11 // pred_check_branch
          %410 = sbr.rel (%p408) target = $region28
        $region27: #{tpu_custom_call.1} parent=11 // pred_region
          %s412 = ssub.s32 16, 16
          %413 = vsyncadd [#allocation16], %s412
          %s415 = sshll.u32 [#allocation15], 4
          %s416 = int_to_ptr.vmem [resolvable:$true] %s415
          %418 = dma.hbm_to_vmem [thread:$0]  %s5, 16, %s416, [#allocation16]
        $region28: #{tpu_custom_call.1} parent=11 // pred_fallthru
          _
        // Predicated region
        $region29: #{tpu_custom_call.1} parent=11 // pred_check
          %p419 = pneg %p202
        $region30: #{tpu_custom_call.1} parent=11 // pred_check_branch
          %421 = sbr.rel (%p419) target = $region32
        $region31: #{tpu_custom_call.1} parent=11 // pred_region
          %s423 = ssub.s32 512, 512
          %424 = vsyncadd [#allocation16], %s423
          %s425 = sshll.u32 [#allocation17], 4
          %s426 = int_to_ptr.vmem [resolvable:$true] %s425
          %431 = dma.hbm_to_vmem [thread:$0]  %s6, 512, %s426, [#allocation16], 64, 64, 4
        $region32: #{tpu_custom_call.1} parent=11 // pred_fallthru
          _
        // Predicated region
        $region33: #{tpu_custom_call.1} parent=11 // pred_check
          %p432 = pneg %p223
        $region34: #{tpu_custom_call.1} parent=11 // pred_check_branch
          %434 = sbr.rel (%p432) target = $region36
        $region35: #{tpu_custom_call.1} parent=11 // pred_region
          %s436 = ssub.s32 16, 16
          %437 = vsyncadd [#allocation19], %s436
          %s439 = sshll.u32 [#allocation18], 4
          %s440 = int_to_ptr.vmem [resolvable:$true] %s439
          %442 = dma.hbm_to_vmem [thread:$0]  %s7, 16, %s440, [#allocation19]
        $region36: #{tpu_custom_call.1} parent=11 // pred_fallthru
          _
        // Predicated region
        $region37: #{tpu_custom_call.1} parent=11 // pred_check
          %p443 = pneg %p244
        $region38: #{tpu_custom_call.1} parent=11 // pred_check_branch
          %445 = sbr.rel (%p443) target = $region40
        $region39: #{tpu_custom_call.1} parent=11 // pred_region
          _
        $region40: #{tpu_custom_call.1} parent=11 // pred_fallthru
          _
        // Predicated region
        $region41: #{tpu_custom_call.1} parent=11 // pred_check
          %p446 = pneg %p265
        $region42: #{tpu_custom_call.1} parent=11 // pred_check_branch
          %448 = sbr.rel (%p446) target = $region44
        $region43: #{tpu_custom_call.1} parent=11 // pred_region
          _
        $region44: #{tpu_custom_call.1} parent=11 // pred_fallthru
          _
        // Predicated region
        $region45: #{tpu_custom_call.1} parent=11 // pred_check
          %p449 = pneg %p286
        $region46: #{tpu_custom_call.1} parent=11 // pred_check_branch
          %451 = sbr.rel (%p449) target = $region48
        $region47: #{tpu_custom_call.1} parent=11 // pred_region
          _
        $region48: #{tpu_custom_call.1} parent=11 // pred_fallthru
          _
        // Predicated region
        $region49: #{tpu_custom_call.1} parent=11 // pred_check
          %p452 = pneg %p307
        $region50: #{tpu_custom_call.1} parent=11 // pred_check_branch
          %454 = sbr.rel (%p452) target = $region52
        $region51: #{tpu_custom_call.1} parent=11 // pred_region
          %s456 = ssub.s32 512, 512
          %457 = vsyncadd [#allocation19], %s456
          %s458 = sshll.u32 [#allocation20], 4
          %s459 = int_to_ptr.vmem [resolvable:$true] %s458
          %464 = dma.hbm_to_vmem [thread:$0]  %s11, 512, %s459, [#allocation19], 64, 64, 4
        $region52: #{tpu_custom_call.1} parent=11 // pred_fallthru
          _
        // Predicated region
        $region53: #{tpu_custom_call.1} parent=11 // pred_check
          %p465 = pneg %p328
        $region54: #{tpu_custom_call.1} parent=11 // pred_check_branch
          %467 = sbr.rel (%p465) target = $region56
        $region55: #{tpu_custom_call.1} parent=11 // pred_region
          _
        $region56: #{tpu_custom_call.1} parent=11 // pred_fallthru
          _
      $region12: #{tpu_custom_call.1} parent=5 // pred_fallthru
        _
      %p468 = scmp.lt.s32.totalorder %s31, 4
      // Predicated region
      $region57: #{tpu_custom_call.1} parent=5 // pred_check
        %p469 = pneg %p468
      $region58: #{tpu_custom_call.1} parent=5 // pred_check_branch
        %471 = sbr.rel (%p469) target = $region60
      $region59: #{tpu_custom_call.1} parent=5 // pred_region
        // Predicated region
        $region61: #{tpu_custom_call.1} parent=59 // pred_check
          %p472 = pneg %p65
        $region62: #{tpu_custom_call.1} parent=59 // pred_check_branch
          %474 = sbr.rel (%p472) target = $region64
        $region63: #{tpu_custom_call.1} parent=59 // pred_region
          %s475 = sand.u32 %s55, 1
          %s476 = scalar_lea.sflag [#allocation7], %s475
          %s477 = sand.u32 %s55, 1
          %s478 = smul.addr %s477, 8
          %s479 = scalar_lea.vmem [#allocation6], %s478
          %s480 = smul.u32 2, %s39
          %s482 = ssub.s32 128, 128
          %483 = vsyncadd %s476, %s482
          %s484 = smul.addr %s38, 4
          %s485 = sadd.s32 %s480, %s484
          %s486 = smul.addr %s485, 64
          %s487 = scalar_lea.hbm %s0, %s486
          %s488 = sshll.u32 %s479, 4
          %s489 = int_to_ptr.vmem [resolvable:$true] %s488
          %494 = dma.hbm_to_vmem [thread:$0]  %s487, 128, %s489, %s476, 64, 64, 4
        $region64: #{tpu_custom_call.1} parent=59 // pred_fallthru
          _
        // Predicated region
        $region65: #{tpu_custom_call.1} parent=59 // pred_check
          %p495 = pneg %p91
        $region66: #{tpu_custom_call.1} parent=59 // pred_check_branch
          %497 = sbr.rel (%p495) target = $region68
        $region67: #{tpu_custom_call.1} parent=59 // pred_region
          %s498 = sand.u32 %s31, 1
          %s499 = scalar_lea.sflag [#allocation10], %s498
          %s500 = sand.u32 %s81, 1
          %s501 = smul.addr %s500, 16
          %s502 = scalar_lea.vmem [#allocation9], %s501
          %s504 = ssub.s32 256, 256
          %505 = vsyncadd %s499, %s504
          %s506 = smul.addr %s38, 4
          %s507 = smul.addr %s506, 64
          %s508 = scalar_lea.hbm %s1, %s507
          %s509 = sshll.u32 %s502, 4
          %s510 = int_to_ptr.vmem [resolvable:$true] %s509
          %515 = dma.hbm_to_vmem [thread:$0]  %s508, 256, %s510, %s499, 64, 64, 4
        $region68: #{tpu_custom_call.1} parent=59 // pred_fallthru
          _
      $region60: #{tpu_custom_call.1} parent=5 // pred_fallthru
        _
      %p516 = scmp.le.s32.totalorder 1, %s31
      %p517 = scmp.lt.s32.totalorder %s31, 5
      %p518 = pnand %p516, %p517
      %p519 = pneg %p518
      // Predicated region
      $region69: #{tpu_custom_call.1} parent=5 // pred_check
        _
      $region70: #{tpu_custom_call.1} parent=5 // pred_check_branch
        %521 = sbr.rel (%p518) target = $region72
      $region71: #{tpu_custom_call.1} parent=5 // pred_region
        %s522 = ssub.s32 %s31, 1
        %s523 = sand.u32 %s58, 1
        %s524 = scalar_lea.sflag [#allocation7], %s523
        %s525 = sand.u32 %s58, 1
        %s526 = smul.addr %s525, 8
        %s527 = scalar_lea.vmem [#allocation6], %s526
        // Predicated region
        $region73: #{tpu_custom_call.1} parent=71 // pred_check
          %p528 = pneg %p71
        $region74: #{tpu_custom_call.1} parent=71 // pred_check_branch
          %530 = sbr.rel (%p528) target = $region76
        $region75: #{tpu_custom_call.1} parent=71 // pred_region
          %531 = dma.done %s524, 128
        $region76: #{tpu_custom_call.1} parent=71 // pred_fallthru
          _
        %s532 = sand.u32 %s36, 1
        %s533 = scalar_lea.sflag [#allocation10], %s532
        %s534 = sand.u32 %s84, 1
        %s535 = smul.addr %s534, 16
        %s536 = scalar_lea.vmem [#allocation9], %s535
        // Predicated region
        $region77: #{tpu_custom_call.1} parent=71 // pred_check
          %p537 = pneg %p97
        $region78: #{tpu_custom_call.1} parent=71 // pred_check_branch
          %539 = sbr.rel (%p537) target = $region80
        $region79: #{tpu_custom_call.1} parent=71 // pred_region
          %540 = dma.done %s533, 256
        $region80: #{tpu_custom_call.1} parent=71 // pred_fallthru
          _
        // Predicated region
        $region81: #{tpu_custom_call.1} parent=71 // pred_check
          %p541 = pneg %p118
        $region82: #{tpu_custom_call.1} parent=71 // pred_check_branch
          %543 = sbr.rel (%p541) target = $region84
        $region83: #{tpu_custom_call.1} parent=71 // pred_region
          %544 = dma.done [#allocation10], 512
        $region84: #{tpu_custom_call.1} parent=71 // pred_fallthru
          _
        // Predicated region
        $region85: #{tpu_custom_call.1} parent=71 // pred_check
          %p545 = pneg %p139
        $region86: #{tpu_custom_call.1} parent=71 // pred_check_branch
          %547 = sbr.rel (%p545) target = $region88
        $region87: #{tpu_custom_call.1} parent=71 // pred_region
          %548 = dma.done [#allocation13], 16
        $region88: #{tpu_custom_call.1} parent=71 // pred_fallthru
          _
        // Predicated region
        $region89: #{tpu_custom_call.1} parent=71 // pred_check
          %p549 = pneg %p160
        $region90: #{tpu_custom_call.1} parent=71 // pred_check_branch
          %551 = sbr.rel (%p549) target = $region92
        $region91: #{tpu_custom_call.1} parent=71 // pred_region
          %552 = dma.done [#allocation13], 512
        $region92: #{tpu_custom_call.1} parent=71 // pred_fallthru
          _
        // Predicated region
        $region93: #{tpu_custom_call.1} parent=71 // pred_check
          %p553 = pneg %p181
        $region94: #{tpu_custom_call.1} parent=71 // pred_check_branch
          %555 = sbr.rel (%p553) target = $region96
        $region95: #{tpu_custom_call.1} parent=71 // pred_region
          %556 = dma.done [#allocation16], 16
        $region96: #{tpu_custom_call.1} parent=71 // pred_fallthru
          _
        // Predicated region
        $region97: #{tpu_custom_call.1} parent=71 // pred_check
          %p557 = pneg %p202
        $region98: #{tpu_custom_call.1} parent=71 // pred_check_branch
          %559 = sbr.rel (%p557) target = $region100
        $region99: #{tpu_custom_call.1} parent=71 // pred_region
          %560 = dma.done [#allocation16], 512
        $region100: #{tpu_custom_call.1} parent=71 // pred_fallthru
          _
        // Predicated region
        $region101: #{tpu_custom_call.1} parent=71 // pred_check
          %p561 = pneg %p223
        $region102: #{tpu_custom_call.1} parent=71 // pred_check_branch
          %563 = sbr.rel (%p561) target = $region104
        $region103: #{tpu_custom_call.1} parent=71 // pred_region
          %564 = dma.done [#allocation19], 16
        $region104: #{tpu_custom_call.1} parent=71 // pred_fallthru
          _
        // Predicated region
        $region105: #{tpu_custom_call.1} parent=71 // pred_check
          %p565 = pneg %p307
        $region106: #{tpu_custom_call.1} parent=71 // pred_check_branch
          %567 = sbr.rel (%p565) target = $region108
        $region107: #{tpu_custom_call.1} parent=71 // pred_region
          %568 = dma.done [#allocation19], 512
        $region108: #{tpu_custom_call.1} parent=71 // pred_fallthru
          _
        %s569 = sand.u32 %s58, 1
        %s570 = scalar_lea.sflag [#allocation7], %s569
        %s571 = sand.u32 %s58, 1
        %s572 = smul.addr %s571, 8
        %s573 = scalar_lea.vmem [#allocation6], %s572
        %p574 = pneg %p71
        %p575 = pneg %p68
        %s576 = sand.u32 %s36, 1
        %s577 = scalar_lea.sflag [#allocation10], %s576
        %s578 = sand.u32 %s84, 1
        %s579 = smul.addr %s578, 16
        %s580 = scalar_lea.vmem [#allocation9], %s579
        %p581 = pneg %p97
        %p582 = pneg %p94
        %p583 = pneg %p118
        %p584 = pneg %p115
        %p585 = pneg %p139
        %p586 = pneg %p136
        %p587 = pneg %p160
        %p588 = pneg %p157
        %p589 = pneg %p181
        %p590 = pneg %p178
        %p591 = pneg %p202
        %p592 = pneg %p199
        %p593 = pneg %p223
        %p594 = pneg %p220
        %p595 = pneg %p244
        %p596 = pneg %p241
        %p597 = pneg %p265
        %p598 = pneg %p262
        %p599 = pneg %p286
        %p600 = pneg %p283
        %p601 = pneg %p307
        %p602 = pneg %p304
        %p603 = pneg %p328
        %p604 = pneg %p325
        %p605 = pneg %p356
        %p606 = pneg %p353
        %s607 = sand.u32 %s343, 1
        %s608 = scalar_lea.sflag [#allocation8], %s607
        %s609 = sand.u32 %s343, 1
        %s610 = smul.addr %s609, 16
        %s611 = scalar_lea.vmem [#allocation21], %s610
        %s612 = smul.u32 2, %s41
        %s613 = smul.u32 2, %s41
        %p615 = scmp.eq.s32.totalorder %s41, 0
        // Predicated region
        $region109: #{tpu_custom_call.1} parent=71 // pred_check
          %p616 = pneg %p615
        $region110: #{tpu_custom_call.1} parent=71 // pred_check_branch
          %618 = sbr.rel (%p616) target = $region112
        $region111: #{tpu_custom_call.1} parent=71 // pred_region
          %v619 = vld [vmem:[%s536] sm:$0xf]
          %v620 = vld [vmem:[%s536 + $0x4] sm:$0xf]
          %v621 = vld [vmem:[%s536 + $0x8] sm:$0xf]
          %v622 = vld [vmem:[%s536 + $0xc] sm:$0xf]
          %v623 = vld [vmem:[#allocation14] sm:$0xf]
          %v624 = vld [vmem:[#allocation14 + $0x4] sm:$0xf]
          %v625 = vld [vmem:[#allocation14 + $0x8] sm:$0xf]
          %v626 = vld [vmem:[#allocation14 + $0xc] sm:$0xf]
          %v627 = vld [vmem:[#allocation14 + $0x10] sm:$0xf]
          %v628 = vld [vmem:[#allocation14 + $0x14] sm:$0xf]
          %v629 = vld [vmem:[#allocation14 + $0x18] sm:$0xf]
          %v630 = vld [vmem:[#allocation14 + $0x1c] sm:$0xf]
          %v631 = vld [vmem:[#allocation15] sm:$0x1]
          %v633 = vlaneseq
          %v634 = vshrl.u32 %v633, 7
          %v635 = vsub.s32 0, %v634
          %v636 = vrot.slane %v631, %v635
          %v642 = vunpack.c.l.b16 %v619
          %v643 = vunpack.c.l.b16 %v620
          %v644 = vunpack.c.l.b16 %v621
          %v645 = vunpack.c.l.b16 %v622
          %v646 = vpack.c.b16 %v643, %v642
          %v647 = vpack.c.b16 %v645, %v644
          %v656 = vunpack.c.l.b16 %v623
          %v657 = vunpack.c.l.b16 %v624
          %v658 = vunpack.c.l.b16 %v625
          %v659 = vunpack.c.l.b16 %v626
          %v660 = vunpack.c.l.b16 %v627
          %v661 = vunpack.c.l.b16 %v628
          %v662 = vunpack.c.l.b16 %v629
          %v663 = vunpack.c.l.b16 %v630
          %v664 = vpack.c.b16 %v657, %v656
          %v665 = vpack.c.b16 %v659, %v658
          %v666 = vpack.c.b16 %v661, %v660
          %v667 = vpack.c.b16 %v663, %v662
          %vm672 = vcmask 523264
          %v674 = vsel %vm672, %v646, 0
          %v677 = vsel %vm672, %v647, 0
          %679 = vmatprep.subr.bf16.mxu0 0
          %680 = vmatpush1.bf16.msra.mxu0 0
          %681 = vmatprep.subr.bf16.mxu0 0
          %682 = vmatpush1.bf16.msra.mxu0 0
          %683 = vmatprep.subr.bf16.mxu0 0
          %684 = vmatpush1.bf16.msra.mxu0 0
          %685 = vmatprep.subr.bf16.mxu0 0
          %686 = vmatpush1.bf16.msra.mxu0 0
          %687 = vmatprep.subr.bf16.mxu0 0
          %688 = vmatpush1.bf16.msra.mxu0 %v667
          %689 = vmatprep.subr.bf16.mxu0 0
          %690 = vmatpush1.bf16.msra.mxu0 %v666
          %691 = vmatprep.subr.bf16.mxu0 0
          %692 = vmatpush1.bf16.msra.mxu0 %v665
          %693 = vmatprep.subr.bf16.mxu0 0
          %694 = vmatpush1.bf16.msra.mxu0 %v664
          %695 = vmatprep.subr.bf16.mxu0 0
          %696 = vmatpush2.bf16.msra.mxu0 0
          %697 = vmatprep.subr.bf16.mxu0 0
          %698 = vmatpush2.bf16.msra.mxu0 0
          %699 = vmatprep.subr.bf16.mxu0 0
          %700 = vmatpush2.bf16.msra.mxu0 0
          %701 = vmatprep.subr.bf16.mxu0 0
          %702 = vmatpush2.bf16.msra.mxu0 0
          %703 = vmatprep.subr.bf16.mxu0 0
          %704 = vmatpush2.bf16.msra.mxu0 0
          %705 = vmatprep.subr.bf16.mxu0 0
          %706 = vmatpush2.bf16.msra.mxu0 0
          %707 = vmatprep.subr.bf16.mxu0 0
          %708 = vmatpush2.bf16.msra.mxu0 0
          %709 = vmatprep.subr.bf16.mxu0 0
          %710 = vmatpush2.bf16.msra.mxu0 0
          %711 = vmatprep.mubr.bf16.mxu0 0
          %712 = vmatmul.mubr.bf16.gmra.mxu0 %v674
          %v713 = vpop.f32.mrf.mxu0
          %v714 = vadd.f32 %v636, %v713
          %v715 = vpop.f32.mrf.mxu0
          %v716 = vpop.f32.mrf.mxu0
          %v717 = vadd.f32 %v636, %v716
          %v718 = vpop.f32.mrf.mxu0
          %719 = vmatprep.mubr.bf16.mxu0 0
          %720 = vmatmul.mubr.bf16.gmra.mxu0 %v677
          %v721 = vpop.f32.mrf.mxu0
          %v722 = vadd.f32 %v636, %v721
          %v723 = vpop.f32.mrf.mxu0
          %v724 = vpop.f32.mrf.mxu0
          %v725 = vadd.f32 %v636, %v724
          %v726 = vpop.f32.mrf.mxu0
          %727 = vdwg.mxu0
          %v728 = vld [vmem:[#allocation17] sm:$0xf]
          %v729 = vld [vmem:[#allocation17 + $0x4] sm:$0xf]
          %v730 = vld [vmem:[#allocation17 + $0x8] sm:$0xf]
          %v731 = vld [vmem:[#allocation17 + $0xc] sm:$0xf]
          %v732 = vld [vmem:[#allocation17 + $0x10] sm:$0xf]
          %v733 = vld [vmem:[#allocation17 + $0x14] sm:$0xf]
          %v734 = vld [vmem:[#allocation17 + $0x18] sm:$0xf]
          %v735 = vld [vmem:[#allocation17 + $0x1c] sm:$0xf]
          %v736 = vld [vmem:[#allocation18] sm:$0x1]
          %v738 = vlaneseq
          %v739 = vshrl.u32 %v738, 7
          %v740 = vsub.s32 0, %v739
          %v741 = vrot.slane %v736, %v740
          %v751 = vunpack.c.l.b16 %v728
          %v752 = vunpack.c.l.b16 %v729
          %v753 = vunpack.c.l.b16 %v730
          %v754 = vunpack.c.l.b16 %v731
          %v755 = vunpack.c.l.b16 %v732
          %v756 = vunpack.c.l.b16 %v733
          %v757 = vunpack.c.l.b16 %v734
          %v758 = vunpack.c.l.b16 %v735
          %v759 = vpack.c.b16 %v752, %v751
          %v760 = vpack.c.b16 %v754, %v753
          %v761 = vpack.c.b16 %v756, %v755
          %v762 = vpack.c.b16 %v758, %v757
          %767 = vmatprep.subr.bf16.mxu0 0
          %768 = vmatpush1.bf16.msra.mxu0 0
          %769 = vmatprep.subr.bf16.mxu0 0
          %770 = vmatpush1.bf16.msra.mxu0 0
          %771 = vmatprep.subr.bf16.mxu0 0
          %772 = vmatpush1.bf16.msra.mxu0 0
          %773 = vmatprep.subr.bf16.mxu0 0
          %774 = vmatpush1.bf16.msra.mxu0 0
          %775 = vmatprep.subr.bf16.mxu0 0
          %776 = vmatpush1.bf16.msra.mxu0 %v762
          %777 = vmatprep.subr.bf16.mxu0 0
          %778 = vmatpush1.bf16.msra.mxu0 %v761
          %779 = vmatprep.subr.bf16.mxu0 0
          %780 = vmatpush1.bf16.msra.mxu0 %v760
          %781 = vmatprep.subr.bf16.mxu0 0
          %782 = vmatpush1.bf16.msra.mxu0 %v759
          %783 = vmatprep.subr.bf16.mxu0 0
          %784 = vmatpush2.bf16.msra.mxu0 0
          %785 = vmatprep.subr.bf16.mxu0 0
          %786 = vmatpush2.bf16.msra.mxu0 0
          %787 = vmatprep.subr.bf16.mxu0 0
          %788 = vmatpush2.bf16.msra.mxu0 0
          %789 = vmatprep.subr.bf16.mxu0 0
          %790 = vmatpush2.bf16.msra.mxu0 0
          %791 = vmatprep.subr.bf16.mxu0 0
          %792 = vmatpush2.bf16.msra.mxu0 0
          %793 = vmatprep.subr.bf16.mxu0 0
          %794 = vmatpush2.bf16.msra.mxu0 0
          %795 = vmatprep.subr.bf16.mxu0 0
          %796 = vmatpush2.bf16.msra.mxu0 0
          %797 = vmatprep.subr.bf16.mxu0 0
          %798 = vmatpush2.bf16.msra.mxu0 0
          %799 = vmatprep.mubr.bf16.mxu0 0
          %800 = vmatmul.mubr.bf16.gmra.mxu0 %v674
          %v801 = vpop.f32.mrf.mxu0
          %v802 = vadd.f32 %v741, %v801
          %v803 = vpop.f32.mrf.mxu0
          %v804 = vpop.f32.mrf.mxu0
          %v805 = vadd.f32 %v741, %v804
          %v806 = vpop.f32.mrf.mxu0
          %807 = vmatprep.mubr.bf16.mxu0 0
          %808 = vmatmul.mubr.bf16.gmra.mxu0 %v677
          %v809 = vpop.f32.mrf.mxu0
          %v810 = vadd.f32 %v741, %v809
          %v811 = vpop.f32.mrf.mxu0
          %v812 = vpop.f32.mrf.mxu0
          %v813 = vadd.f32 %v741, %v812
          %v814 = vpop.f32.mrf.mxu0
          %815 = vdwg.mxu0
          %v816 = vpack.c.bf16 %v717, %v714
          %v817 = vpack.c.bf16 %v725, %v722
          %v820 = vunpack.c.l.b16 %v816
          %v821 = vunpack.c.h.b16 %v816
          %v822 = vunpack.c.l.b16 %v817
          %v823 = vunpack.c.h.b16 %v817
          %v824 = vpack.c.b16 %v820, %v820
          %v825 = vpack.c.b16 %v821, %v821
          %v826 = vpack.c.b16 %v822, %v822
          %v827 = vpack.c.b16 %v823, %v823
          %vm832 = vcmask 519168
          %833 = vst.msk [vmem:[#allocation2] sm:$0xf] %vm832, %v824
          %834 = vst.msk [vmem:[#allocation2 + $0x4] sm:$0xf] %vm832, %v825
          %835 = vst.msk [vmem:[#allocation2 + $0x8] sm:$0xf] %vm832, %v826
          %836 = vst.msk [vmem:[#allocation2 + $0xc] sm:$0xf] %vm832, %v827
          %v837 = vsel %vm672, %v802, 0.0
          %v838 = vsel %vm672, %v805, 0.0
          %v839 = vadd.f32 %v837, %v838
          %v840 = vsel %vm672, %v810, 0.0
          %v841 = vadd.f32 %v839, %v840
          %v842 = vsel %vm672, %v813, 0.0
          %v843 = vadd.f32 %v841, %v842
          %v844 = vrot.slane %v843, 4
          %v845 = vadd.f32 %v843, %v844
          %v846 = vrot.slane %v845, 2
          %v847 = vadd.f32 %v845, %v846
          %v848 = vrot.slane %v847, 1
          %v849 = vadd.f32 %v847, %v848
          %vm850 = vcmask 516096
          %851 = vst.msk [vmem:[#allocation4] sm:$0x1] %vm850, %v849
          %v852 = vpack.c.bf16 %v805, %v802
          %v853 = vpack.c.bf16 %v813, %v810
          %v856 = vunpack.c.l.b16 %v852
          %v857 = vunpack.c.h.b16 %v852
          %v858 = vunpack.c.l.b16 %v853
          %v859 = vunpack.c.h.b16 %v853
          %v860 = vpack.c.b16 %v856, %v856
          %v861 = vpack.c.b16 %v857, %v857
          %v862 = vpack.c.b16 %v858, %v858
          %v863 = vpack.c.b16 %v859, %v859
          %868 = vst.msk [vmem:[#allocation3] sm:$0xf] %vm832, %v860
          %869 = vst.msk [vmem:[#allocation3 + $0x4] sm:$0xf] %vm832, %v861
          %870 = vst.msk [vmem:[#allocation3 + $0x8] sm:$0xf] %vm832, %v862
          %871 = vst.msk [vmem:[#allocation3 + $0xc] sm:$0xf] %vm832, %v863
        $region112: #{tpu_custom_call.1} parent=71 // pred_fallthru
          _
        %v872 = vld [vmem:[%s527] sm:$0xf]
        %v873 = vld [vmem:[%s527 + $0x4] sm:$0xf]
        %v874 = vld [vmem:[#allocation11] sm:$0xf]
        %v875 = vld [vmem:[#allocation11 + $0x4] sm:$0xf]
        %v876 = vld [vmem:[#allocation11 + $0x8] sm:$0xf]
        %v877 = vld [vmem:[#allocation11 + $0xc] sm:$0xf]
        %v878 = vld [vmem:[#allocation11 + $0x10] sm:$0xf]
        %v879 = vld [vmem:[#allocation11 + $0x14] sm:$0xf]
        %v880 = vld [vmem:[#allocation11 + $0x18] sm:$0xf]
        %v881 = vld [vmem:[#allocation11 + $0x1c] sm:$0xf]
        %v882 = vld [vmem:[#allocation12] sm:$0x1]
        %v884 = vlaneseq
        %v885 = vshrl.u32 %v884, 7
        %v886 = vsub.s32 0, %v885
        %v887 = vrot.slane %v882, %v886
        %v891 = vunpack.c.l.b16 %v872
        %v892 = vunpack.c.l.b16 %v873
        %v893 = vpack.c.b16 %v892, %v891
        %v902 = vunpack.c.l.b16 %v874
        %v903 = vunpack.c.l.b16 %v875
        %v904 = vunpack.c.l.b16 %v876
        %v905 = vunpack.c.l.b16 %v877
        %v906 = vunpack.c.l.b16 %v878
        %v907 = vunpack.c.l.b16 %v879
        %v908 = vunpack.c.l.b16 %v880
        %v909 = vunpack.c.l.b16 %v881
        %v910 = vpack.c.b16 %v903, %v902
        %v911 = vpack.c.b16 %v905, %v904
        %v912 = vpack.c.b16 %v907, %v906
        %v913 = vpack.c.b16 %v909, %v908
        %vm918 = vcmask 523264
        %v920 = vsel %vm918, %v893, 0
        %922 = vmatprep.subr.bf16.mxu0 0
        %923 = vmatpush1.bf16.msra.mxu0 0
        %924 = vmatprep.subr.bf16.mxu0 0
        %925 = vmatpush1.bf16.msra.mxu0 0
        %926 = vmatprep.subr.bf16.mxu0 0
        %927 = vmatpush1.bf16.msra.mxu0 0
        %928 = vmatprep.subr.bf16.mxu0 0
        %929 = vmatpush1.bf16.msra.mxu0 0
        %930 = vmatprep.subr.bf16.mxu0 0
        %931 = vmatpush1.bf16.msra.mxu0 %v913
        %932 = vmatprep.subr.bf16.mxu0 0
        %933 = vmatpush1.bf16.msra.mxu0 %v912
        %934 = vmatprep.subr.bf16.mxu0 0
        %935 = vmatpush1.bf16.msra.mxu0 %v911
        %936 = vmatprep.subr.bf16.mxu0 0
        %937 = vmatpush1.bf16.msra.mxu0 %v910
        %938 = vmatprep.subr.bf16.mxu0 0
        %939 = vmatpush2.bf16.msra.mxu0 0
        %940 = vmatprep.subr.bf16.mxu0 0
        %941 = vmatpush2.bf16.msra.mxu0 0
        %942 = vmatprep.subr.bf16.mxu0 0
        %943 = vmatpush2.bf16.msra.mxu0 0
        %944 = vmatprep.subr.bf16.mxu0 0
        %945 = vmatpush2.bf16.msra.mxu0 0
        %946 = vmatprep.subr.bf16.mxu0 0
        %947 = vmatpush2.bf16.msra.mxu0 0
        %948 = vmatprep.subr.bf16.mxu0 0
        %949 = vmatpush2.bf16.msra.mxu0 0
        %950 = vmatprep.subr.bf16.mxu0 0
        %951 = vmatpush2.bf16.msra.mxu0 0
        %952 = vmatprep.subr.bf16.mxu0 0
        %953 = vmatpush2.bf16.msra.mxu0 0
        %954 = vmatprep.mubr.bf16.mxu0 0
        %955 = vmatmul.mubr.bf16.gmra.mxu0 %v920
        %v956 = vpop.f32.mrf.mxu0
        %v957 = vadd.f32 %v887, %v956
        %v958 = vpop.f32.mrf.mxu0
        %v959 = vpop.f32.mrf.mxu0
        %v960 = vadd.f32 %v887, %v959
        %v961 = vpop.f32.mrf.mxu0
        %962 = vdwg.mxu0
        %v963 = vld [vmem:[#allocation2] sm:$0xf]
        %v964 = vld [vmem:[#allocation2 + $0x4] sm:$0xf]
        %v965 = vld [vmem:[#allocation2 + $0x8] sm:$0xf]
        %v966 = vld [vmem:[#allocation2 + $0xc] sm:$0xf]
        %v967 = vld [vmem:[#allocation3] sm:$0xf]
        %v968 = vld [vmem:[#allocation3 + $0x4] sm:$0xf]
        %v969 = vld [vmem:[#allocation3 + $0x8] sm:$0xf]
        %v970 = vld [vmem:[#allocation3 + $0xc] sm:$0xf]
        %v971 = vld [vmem:[%s8] sm:$0x1]
        %v973 = vlaneseq
        %v974 = vshrl.u32 %v973, 7
        %v975 = vsub.s32 0, %v974
        %v976 = vrot.slane %v971, %v975
        %v978 = vmul.f32 %v957, %v976
        %v979 = vmul.f32 %v960, %v976
        %v980 = vpack.c.bf16 %v979, %v978
        %v985 = vunpack.c.l.b16 %v963
        %v986 = vunpack.c.l.b16 %v964
        %v987 = vunpack.c.l.b16 %v965
        %v988 = vunpack.c.l.b16 %v966
        %v989 = vpack.c.b16 %v986, %v985
        %v990 = vpack.c.b16 %v988, %v987
        %v992 = vsel %vm918, %v980, 0
        %v995 = vsel %vm918, %v989, 0
        %v998 = vsel %vm918, %v990, 0
        %1000 = vmatprep.subr.bf16.mxu0 0
        %1001 = vmatpush1.bf16.xpose.msra.mxu0 0
        %1002 = vmatprep.subr.bf16.mxu0 0
        %1003 = vmatpush1.bf16.xpose.msra.mxu0 0
        %1004 = vmatprep.subr.bf16.mxu0 0
        %1005 = vmatpush1.bf16.xpose.msra.mxu0 0
        %1006 = vmatprep.subr.bf16.mxu0 0
        %1007 = vmatpush1.bf16.xpose.msra.mxu0 0
        %1008 = vmatprep.subr.bf16.mxu0 0
        %1009 = vmatpush1.bf16.xpose.msra.mxu0 0
        %1010 = vmatprep.subr.bf16.mxu0 0
        %1011 = vmatpush1.bf16.xpose.msra.mxu0 0
        %1012 = vmatprep.subr.bf16.mxu0 0
        %1013 = vmatpush1.bf16.xpose.msra.mxu0 %v998
        %1014 = vmatprep.subr.bf16.mxu0 0
        %1015 = vmatpush1.bf16.xpose.msra.mxu0 %v995
        %1016 = vmatprep.subr.bf16.mxu0 0
        %1017 = vmatpush2.bf16.xpose.msra.mxu0 0
        %1018 = vmatprep.subr.bf16.mxu0 0
        %1019 = vmatpush2.bf16.xpose.msra.mxu0 0
        %1020 = vmatprep.subr.bf16.mxu0 0
        %1021 = vmatpush2.bf16.xpose.msra.mxu0 0
        %1022 = vmatprep.subr.bf16.mxu0 0
        %1023 = vmatpush2.bf16.xpose.msra.mxu0 0
        %1024 = vmatprep.subr.bf16.mxu0 0
        %1025 = vmatpush2.bf16.xpose.msra.mxu0 0
        %1026 = vmatprep.subr.bf16.mxu0 0
        %1027 = vmatpush2.bf16.xpose.msra.mxu0 0
        %1028 = vmatprep.subr.bf16.mxu0 0
        %1029 = vmatpush2.bf16.xpose.msra.mxu0 0
        %1030 = vmatprep.subr.bf16.mxu0 0
        %1031 = vmatpush2.bf16.xpose.msra.mxu0 0
        %1032 = vmatprep.mubr.bf16.mxu0 0
        %1033 = vmatmul.mubr.bf16.gmra.mxu0 %v992
        %v1034 = vpop.f32.mrf.mxu0
        %v1035 = vadd.f32 0.0, %v1034
        %v1036 = vpop.f32.mrf.mxu0
        %v1037 = vpop.f32.mrf.mxu0
        %v1038 = vadd.f32 0.0, %v1037
        %v1039 = vpop.f32.mrf.mxu0
        %1040 = vdwg.mxu0
        %vm1041 = vcmask 261120
        %v1042 = vsel %vm1041, %v1035, -inf
        %1043 = vmax.xlane.f32.xlu0 %v1042
        %v1044 = vpop.xlane.xlu0 %1043
        %v1045 = vsel %vm1041, %v1038, -inf
        %1046 = vmax.xlane.f32.xlu0 %v1045
        %v1047 = vpop.xlane.xlu0 %1046
        %v1048 = vsub.f32 %v1035, %v1044
        %v1049 = vsub.f32 %v1038, %v1047
        %v1050 = vmul.f32 %v1048, 1.442695
        %v1051 = vpow.pop %v1050
        %v1052 = vmul.f32 %v1049, 1.442695
        %v1053 = vpow.pop %v1052
        %v1054 = vsel %vm1041, %v1051, 0.0
        %1055 = vadd.xlane.f32.xlu0 %v1054
        %v1056 = vpop.xlane.xlu0 %1055
        %v1057 = vsel %vm1041, %v1053, 0.0
        %1058 = vadd.xlane.f32.xlu0 %v1057
        %v1059 = vpop.xlane.xlu0 %1058
        %v1060 = vrcp.pop %v1056
        %v1061 = vrcp.pop %v1059
        %v1062 = vpack.c.bf16 %v1053, %v1051
        %v1067 = vunpack.c.l.b16 %v967
        %v1068 = vunpack.c.l.b16 %v968
        %v1069 = vunpack.c.l.b16 %v969
        %v1070 = vunpack.c.l.b16 %v970
        %v1071 = vpack.c.b16 %v1068, %v1067
        %v1072 = vpack.c.b16 %v1070, %v1069
        %v1076 = vsel %vm1041, %v1062, 0
        %1078 = vmatprep.subr.bf16.mxu0 0
        %1079 = vmatpush1.bf16.msra.mxu0 0
        %1080 = vmatprep.subr.bf16.mxu0 0
        %1081 = vmatpush1.bf16.msra.mxu0 0
        %1082 = vmatprep.subr.bf16.mxu0 0
        %1083 = vmatpush1.bf16.msra.mxu0 0
        %1084 = vmatprep.subr.bf16.mxu0 0
        %1085 = vmatpush1.bf16.msra.mxu0 0
        %1086 = vmatprep.subr.bf16.mxu0 0
        %1087 = vmatpush1.bf16.msra.mxu0 0
        %1088 = vmatprep.subr.bf16.mxu0 0
        %1089 = vmatpush1.bf16.msra.mxu0 0
        %1090 = vmatprep.subr.bf16.mxu0 0
        %1091 = vmatpush1.bf16.msra.mxu0 %v1072
        %1092 = vmatprep.subr.bf16.mxu0 0
        %1093 = vmatpush1.bf16.msra.mxu0 %v1071
        %1094 = vmatprep.subr.bf16.mxu0 0
        %1095 = vmatpush2.bf16.msra.mxu0 0
        %1096 = vmatprep.subr.bf16.mxu0 0
        %1097 = vmatpush2.bf16.msra.mxu0 0
        %1098 = vmatprep.subr.bf16.mxu0 0
        %1099 = vmatpush2.bf16.msra.mxu0 0
        %1100 = vmatprep.subr.bf16.mxu0 0
        %1101 = vmatpush2.bf16.msra.mxu0 0
        %1102 = vmatprep.subr.bf16.mxu0 0
        %1103 = vmatpush2.bf16.msra.mxu0 0
        %1104 = vmatprep.subr.bf16.mxu0 0
        %1105 = vmatpush2.bf16.msra.mxu0 0
        %1106 = vmatprep.subr.bf16.mxu0 0
        %1107 = vmatpush2.bf16.msra.mxu0 0
        %1108 = vmatprep.subr.bf16.mxu0 0
        %1109 = vmatpush2.bf16.msra.mxu0 0
        %1110 = vmatprep.mubr.bf16.mxu0 0
        %1111 = vmatmul.mubr.bf16.gmra.mxu0 %v1076
        %v1112 = vpop.f32.mrf.mxu0
        %v1113 = vadd.f32 0.0, %v1112
        %v1114 = vpop.f32.mrf.mxu0
        %v1115 = vpop.f32.mrf.mxu0
        %v1116 = vadd.f32 0.0, %v1115
        %v1117 = vpop.f32.mrf.mxu0
        %1118 = vdwg.mxu0
        %v1119 = vld [vmem:[%s9] sm:$0x1]
        %v1121 = vlaneseq
        %v1122 = vshrl.u32 %v1121, 7
        %v1123 = vsub.s32 0, %v1122
        %v1124 = vrot.slane %v1119, %v1123
        %v1126 = vmul.f32 %v1060, %v1124
        %v1127 = vmul.f32 %v1061, %v1124
        %v1128 = vmul.f32 %v1113, %v1126
        %v1129 = vmul.f32 %v1116, %v1127
        %1130 = vst.msk [vmem:[#allocation5] sm:$0xff] %vm918, %v1128
        %1131 = vst.msk [vmem:[#allocation5 + $0x8] sm:$0xff] %vm918, %v1129
        %v1132 = vld [vmem:[#allocation5] sm:$0xff]
        %v1133 = vld [vmem:[#allocation5 + $0x8] sm:$0xff]
        %s1134 = scalar_lea.vmem %s8, 1
        %v1135 = vld [vmem:[%s1134] sm:$0x1]
        %v1137 = vlaneseq
        %v1138 = vshrl.u32 %v1137, 7
        %v1139 = vsub.s32 0, %v1138
        %v1140 = vrot.slane %v1135, %v1139
        %v1142 = vmul.f32 %v957, %v1140
        %v1143 = vmul.f32 %v960, %v1140
        %v1144 = vpack.c.bf16 %v1143, %v1142
        %v1146 = vsel %vm918, %v1144, 0
        %1148 = vmatprep.subr.bf16.mxu0 0
        %1149 = vmatpush1.bf16.xpose.msra.mxu0 0
        %1150 = vmatprep.subr.bf16.mxu0 0
        %1151 = vmatpush1.bf16.xpose.msra.mxu0 0
        %1152 = vmatprep.subr.bf16.mxu0 0
        %1153 = vmatpush1.bf16.xpose.msra.mxu0 0
        %1154 = vmatprep.subr.bf16.mxu0 0
        %1155 = vmatpush1.bf16.xpose.msra.mxu0 0
        %1156 = vmatprep.subr.bf16.mxu0 0
        %1157 = vmatpush1.bf16.xpose.msra.mxu0 0
        %1158 = vmatprep.subr.bf16.mxu0 0
        %1159 = vmatpush1.bf16.xpose.msra.mxu0 0
        %1160 = vmatprep.subr.bf16.mxu0 0
        %1161 = vmatpush1.bf16.xpose.msra.mxu0 %v998
        %1162 = vmatprep.subr.bf16.mxu0 0
        %1163 = vmatpush1.bf16.xpose.msra.mxu0 %v995
        %1164 = vmatprep.subr.bf16.mxu0 0
        %1165 = vmatpush2.bf16.xpose.msra.mxu0 0
        %1166 = vmatprep.subr.bf16.mxu0 0
        %1167 = vmatpush2.bf16.xpose.msra.mxu0 0
        %1168 = vmatprep.subr.bf16.mxu0 0
        %1169 = vmatpush2.bf16.xpose.msra.mxu0 0
        %1170 = vmatprep.subr.bf16.mxu0 0
        %1171 = vmatpush2.bf16.xpose.msra.mxu0 0
        %1172 = vmatprep.subr.bf16.mxu0 0
        %1173 = vmatpush2.bf16.xpose.msra.mxu0 0
        %1174 = vmatprep.subr.bf16.mxu0 0
        %1175 = vmatpush2.bf16.xpose.msra.mxu0 0
        %1176 = vmatprep.subr.bf16.mxu0 0
        %1177 = vmatpush2.bf16.xpose.msra.mxu0 0
        %1178 = vmatprep.subr.bf16.mxu0 0
        %1179 = vmatpush2.bf16.xpose.msra.mxu0 0
        %1180 = vmatprep.mubr.bf16.mxu0 0
        %1181 = vmatmul.mubr.bf16.gmra.mxu0 %v1146
        %v1182 = vpop.f32.mrf.mxu0
        %v1183 = vadd.f32 0.0, %v1182
        %v1184 = vpop.f32.mrf.mxu0
        %v1185 = vpop.f32.mrf.mxu0
        %v1186 = vadd.f32 0.0, %v1185
        %v1187 = vpop.f32.mrf.mxu0
        %1188 = vdwg.mxu0
        %v1189 = vsel %vm1041, %v1183, -inf
        %1190 = vmax.xlane.f32.xlu0 %v1189
        %v1191 = vpop.xlane.xlu0 %1190
        %v1192 = vsel %vm1041, %v1186, -inf
        %1193 = vmax.xlane.f32.xlu0 %v1192
        %v1194 = vpop.xlane.xlu0 %1193
        %v1195 = vsub.f32 %v1183, %v1191
        %v1196 = vsub.f32 %v1186, %v1194
        %v1197 = vmul.f32 %v1195, 1.442695
        %v1198 = vpow.pop %v1197
        %v1199 = vmul.f32 %v1196, 1.442695
        %v1200 = vpow.pop %v1199
        %v1201 = vsel %vm1041, %v1198, 0.0
        %1202 = vadd.xlane.f32.xlu0 %v1201
        %v1203 = vpop.xlane.xlu0 %1202
        %v1204 = vsel %vm1041, %v1200, 0.0
        %1205 = vadd.xlane.f32.xlu0 %v1204
        %v1206 = vpop.xlane.xlu0 %1205
        %v1207 = vrcp.pop %v1203
        %v1208 = vrcp.pop %v1206
        %v1209 = vpack.c.bf16 %v1200, %v1198
        %v1211 = vsel %vm1041, %v1209, 0
        %1213 = vmatprep.subr.bf16.mxu0 0
        %1214 = vmatpush1.bf16.msra.mxu0 0
        %1215 = vmatprep.subr.bf16.mxu0 0
        %1216 = vmatpush1.bf16.msra.mxu0 0
        %1217 = vmatprep.subr.bf16.mxu0 0
        %1218 = vmatpush1.bf16.msra.mxu0 0
        %1219 = vmatprep.subr.bf16.mxu0 0
        %1220 = vmatpush1.bf16.msra.mxu0 0
        %1221 = vmatprep.subr.bf16.mxu0 0
        %1222 = vmatpush1.bf16.msra.mxu0 0
        %1223 = vmatprep.subr.bf16.mxu0 0
        %1224 = vmatpush1.bf16.msra.mxu0 0
        %1225 = vmatprep.subr.bf16.mxu0 0
        %1226 = vmatpush1.bf16.msra.mxu0 %v1072
        %1227 = vmatprep.subr.bf16.mxu0 0
        %1228 = vmatpush1.bf16.msra.mxu0 %v1071
        %1229 = vmatprep.subr.bf16.mxu0 0
        %1230 = vmatpush2.bf16.msra.mxu0 0
        %1231 = vmatprep.subr.bf16.mxu0 0
        %1232 = vmatpush2.bf16.msra.mxu0 0
        %1233 = vmatprep.subr.bf16.mxu0 0
        %1234 = vmatpush2.bf16.msra.mxu0 0
        %1235 = vmatprep.subr.bf16.mxu0 0
        %1236 = vmatpush2.bf16.msra.mxu0 0
        %1237 = vmatprep.subr.bf16.mxu0 0
        %1238 = vmatpush2.bf16.msra.mxu0 0
        %1239 = vmatprep.subr.bf16.mxu0 0
        %1240 = vmatpush2.bf16.msra.mxu0 0
        %1241 = vmatprep.subr.bf16.mxu0 0
        %1242 = vmatpush2.bf16.msra.mxu0 0
        %1243 = vmatprep.subr.bf16.mxu0 0
        %1244 = vmatpush2.bf16.msra.mxu0 0
        %1245 = vmatprep.mubr.bf16.mxu0 0
        %1246 = vmatmul.mubr.bf16.gmra.mxu0 %v1211
        %v1247 = vpop.f32.mrf.mxu0
        %v1248 = vadd.f32 0.0, %v1247
        %v1249 = vpop.f32.mrf.mxu0
        %v1250 = vpop.f32.mrf.mxu0
        %v1251 = vadd.f32 0.0, %v1250
        %v1252 = vpop.f32.mrf.mxu0
        %1253 = vdwg.mxu0
        %s1254 = scalar_lea.vmem %s9, 1
        %v1255 = vld [vmem:[%s1254] sm:$0x1]
        %v1257 = vlaneseq
        %v1258 = vshrl.u32 %v1257, 7
        %v1259 = vsub.s32 0, %v1258
        %v1260 = vrot.slane %v1255, %v1259
        %v1262 = vmul.f32 %v1207, %v1260
        %v1263 = vmul.f32 %v1208, %v1260
        %v1264 = vmul.f32 %v1248, %v1262
        %v1265 = vmul.f32 %v1251, %v1263
        %v1266 = vadd.f32 %v1132, %v1264
        %v1267 = vadd.f32 %v1133, %v1265
        %1268 = vst.msk [vmem:[#allocation5] sm:$0xff] %vm918, %v1266
        %1269 = vst.msk [vmem:[#allocation5 + $0x8] sm:$0xff] %vm918, %v1267
        %v1270 = vld [vmem:[#allocation5] sm:$0xff]
        %v1271 = vld [vmem:[#allocation5 + $0x8] sm:$0xff]
        %s1272 = scalar_lea.vmem %s8, 2
        %v1273 = vld [vmem:[%s1272] sm:$0x1]
        %v1275 = vlaneseq
        %v1276 = vshrl.u32 %v1275, 7
        %v1277 = vsub.s32 0, %v1276
        %v1278 = vrot.slane %v1273, %v1277
        %v1280 = vmul.f32 %v957, %v1278
        %v1281 = vmul.f32 %v960, %v1278
        %v1282 = vpack.c.bf16 %v1281, %v1280
        %v1284 = vsel %vm918, %v1282, 0
        %1286 = vmatprep.subr.bf16.mxu0 0
        %1287 = vmatpush1.bf16.xpose.msra.mxu0 0
        %1288 = vmatprep.subr.bf16.mxu0 0
        %1289 = vmatpush1.bf16.xpose.msra.mxu0 0
        %1290 = vmatprep.subr.bf16.mxu0 0
        %1291 = vmatpush1.bf16.xpose.msra.mxu0 0
        %1292 = vmatprep.subr.bf16.mxu0 0
        %1293 = vmatpush1.bf16.xpose.msra.mxu0 0
        %1294 = vmatprep.subr.bf16.mxu0 0
        %1295 = vmatpush1.bf16.xpose.msra.mxu0 0
        %1296 = vmatprep.subr.bf16.mxu0 0
        %1297 = vmatpush1.bf16.xpose.msra.mxu0 0
        %1298 = vmatprep.subr.bf16.mxu0 0
        %1299 = vmatpush1.bf16.xpose.msra.mxu0 %v998
        %1300 = vmatprep.subr.bf16.mxu0 0
        %1301 = vmatpush1.bf16.xpose.msra.mxu0 %v995
        %1302 = vmatprep.subr.bf16.mxu0 0
        %1303 = vmatpush2.bf16.xpose.msra.mxu0 0
        %1304 = vmatprep.subr.bf16.mxu0 0
        %1305 = vmatpush2.bf16.xpose.msra.mxu0 0
        %1306 = vmatprep.subr.bf16.mxu0 0
        %1307 = vmatpush2.bf16.xpose.msra.mxu0 0
        %1308 = vmatprep.subr.bf16.mxu0 0
        %1309 = vmatpush2.bf16.xpose.msra.mxu0 0
        %1310 = vmatprep.subr.bf16.mxu0 0
        %1311 = vmatpush2.bf16.xpose.msra.mxu0 0
        %1312 = vmatprep.subr.bf16.mxu0 0
        %1313 = vmatpush2.bf16.xpose.msra.mxu0 0
        %1314 = vmatprep.subr.bf16.mxu0 0
        %1315 = vmatpush2.bf16.xpose.msra.mxu0 0
        %1316 = vmatprep.subr.bf16.mxu0 0
        %1317 = vmatpush2.bf16.xpose.msra.mxu0 0
        %1318 = vmatprep.mubr.bf16.mxu0 0
        %1319 = vmatmul.mubr.bf16.gmra.mxu0 %v1284
        %v1320 = vpop.f32.mrf.mxu0
        %v1321 = vadd.f32 0.0, %v1320
        %v1322 = vpop.f32.mrf.mxu0
        %v1323 = vpop.f32.mrf.mxu0
        %v1324 = vadd.f32 0.0, %v1323
        %v1325 = vpop.f32.mrf.mxu0
        %1326 = vdwg.mxu0
        %v1327 = vsel %vm1041, %v1321, -inf
        %1328 = vmax.xlane.f32.xlu0 %v1327
        %v1329 = vpop.xlane.xlu0 %1328
        %v1330 = vsel %vm1041, %v1324, -inf
        %1331 = vmax.xlane.f32.xlu0 %v1330
        %v1332 = vpop.xlane.xlu0 %1331
        %v1333 = vsub.f32 %v1321, %v1329
        %v1334 = vsub.f32 %v1324, %v1332
        %v1335 = vmul.f32 %v1333, 1.442695
        %v1336 = vpow.pop %v1335
        %v1337 = vmul.f32 %v1334, 1.442695
        %v1338 = vpow.pop %v1337
        %v1339 = vsel %vm1041, %v1336, 0.0
        %1340 = vadd.xlane.f32.xlu0 %v1339
        %v1341 = vpop.xlane.xlu0 %1340
        %v1342 = vsel %vm1041, %v1338, 0.0
        %1343 = vadd.xlane.f32.xlu0 %v1342
        %v1344 = vpop.xlane.xlu0 %1343
        %v1345 = vrcp.pop %v1341
        %v1346 = vrcp.pop %v1344
        %v1347 = vpack.c.bf16 %v1338, %v1336
        %v1349 = vsel %vm1041, %v1347, 0
        %1351 = vmatprep.subr.bf16.mxu0 0
        %1352 = vmatpush1.bf16.msra.mxu0 0
        %1353 = vmatprep.subr.bf16.mxu0 0
        %1354 = vmatpush1.bf16.msra.mxu0 0
        %1355 = vmatprep.subr.bf16.mxu0 0
        %1356 = vmatpush1.bf16.msra.mxu0 0
        %1357 = vmatprep.subr.bf16.mxu0 0
        %1358 = vmatpush1.bf16.msra.mxu0 0
        %1359 = vmatprep.subr.bf16.mxu0 0
        %1360 = vmatpush1.bf16.msra.mxu0 0
        %1361 = vmatprep.subr.bf16.mxu0 0
        %1362 = vmatpush1.bf16.msra.mxu0 0
        %1363 = vmatprep.subr.bf16.mxu0 0
        %1364 = vmatpush1.bf16.msra.mxu0 %v1072
        %1365 = vmatprep.subr.bf16.mxu0 0
        %1366 = vmatpush1.bf16.msra.mxu0 %v1071
        %1367 = vmatprep.subr.bf16.mxu0 0
        %1368 = vmatpush2.bf16.msra.mxu0 0
        %1369 = vmatprep.subr.bf16.mxu0 0
        %1370 = vmatpush2.bf16.msra.mxu0 0
        %1371 = vmatprep.subr.bf16.mxu0 0
        %1372 = vmatpush2.bf16.msra.mxu0 0
        %1373 = vmatprep.subr.bf16.mxu0 0
        %1374 = vmatpush2.bf16.msra.mxu0 0
        %1375 = vmatprep.subr.bf16.mxu0 0
        %1376 = vmatpush2.bf16.msra.mxu0 0
        %1377 = vmatprep.subr.bf16.mxu0 0
        %1378 = vmatpush2.bf16.msra.mxu0 0
        %1379 = vmatprep.subr.bf16.mxu0 0
        %1380 = vmatpush2.bf16.msra.mxu0 0
        %1381 = vmatprep.subr.bf16.mxu0 0
        %1382 = vmatpush2.bf16.msra.mxu0 0
        %1383 = vmatprep.mubr.bf16.mxu0 0
        %1384 = vmatmul.mubr.bf16.gmra.mxu0 %v1349
        %v1385 = vpop.f32.mrf.mxu0
        %v1386 = vadd.f32 0.0, %v1385
        %v1387 = vpop.f32.mrf.mxu0
        %v1388 = vpop.f32.mrf.mxu0
        %v1389 = vadd.f32 0.0, %v1388
        %v1390 = vpop.f32.mrf.mxu0
        %1391 = vdwg.mxu0
        %s1392 = scalar_lea.vmem %s9, 2
        %v1393 = vld [vmem:[%s1392] sm:$0x1]
        %v1395 = vlaneseq
        %v1396 = vshrl.u32 %v1395, 7
        %v1397 = vsub.s32 0, %v1396
        %v1398 = vrot.slane %v1393, %v1397
        %v1400 = vmul.f32 %v1345, %v1398
        %v1401 = vmul.f32 %v1346, %v1398
        %v1402 = vmul.f32 %v1386, %v1400
        %v1403 = vmul.f32 %v1389, %v1401
        %v1404 = vadd.f32 %v1270, %v1402
        %v1405 = vadd.f32 %v1271, %v1403
        %1406 = vst.msk [vmem:[#allocation5] sm:$0xff] %vm918, %v1404
        %1407 = vst.msk [vmem:[#allocation5 + $0x8] sm:$0xff] %vm918, %v1405
        %v1408 = vld [vmem:[#allocation5] sm:$0xff]
        %v1409 = vld [vmem:[#allocation5 + $0x8] sm:$0xff]
        %s1410 = scalar_lea.vmem %s8, 3
        %v1411 = vld [vmem:[%s1410] sm:$0x1]
        %v1413 = vlaneseq
        %v1414 = vshrl.u32 %v1413, 7
        %v1415 = vsub.s32 0, %v1414
        %v1416 = vrot.slane %v1411, %v1415
        %v1418 = vmul.f32 %v957, %v1416
        %v1419 = vmul.f32 %v960, %v1416
        %v1420 = vpack.c.bf16 %v1419, %v1418
        %v1422 = vsel %vm918, %v1420, 0
        %1424 = vmatprep.subr.bf16.mxu0 0
        %1425 = vmatpush1.bf16.xpose.msra.mxu0 0
        %1426 = vmatprep.subr.bf16.mxu0 0
        %1427 = vmatpush1.bf16.xpose.msra.mxu0 0
        %1428 = vmatprep.subr.bf16.mxu0 0
        %1429 = vmatpush1.bf16.xpose.msra.mxu0 0
        %1430 = vmatprep.subr.bf16.mxu0 0
        %1431 = vmatpush1.bf16.xpose.msra.mxu0 0
        %1432 = vmatprep.subr.bf16.mxu0 0
        %1433 = vmatpush1.bf16.xpose.msra.mxu0 0
        %1434 = vmatprep.subr.bf16.mxu0 0
        %1435 = vmatpush1.bf16.xpose.msra.mxu0 0
        %1436 = vmatprep.subr.bf16.mxu0 0
        %1437 = vmatpush1.bf16.xpose.msra.mxu0 %v998
        %1438 = vmatprep.subr.bf16.mxu0 0
        %1439 = vmatpush1.bf16.xpose.msra.mxu0 %v995
        %1440 = vmatprep.subr.bf16.mxu0 0
        %1441 = vmatpush2.bf16.xpose.msra.mxu0 0
        %1442 = vmatprep.subr.bf16.mxu0 0
        %1443 = vmatpush2.bf16.xpose.msra.mxu0 0
        %1444 = vmatprep.subr.bf16.mxu0 0
        %1445 = vmatpush2.bf16.xpose.msra.mxu0 0
        %1446 = vmatprep.subr.bf16.mxu0 0
        %1447 = vmatpush2.bf16.xpose.msra.mxu0 0
        %1448 = vmatprep.subr.bf16.mxu0 0
        %1449 = vmatpush2.bf16.xpose.msra.mxu0 0
        %1450 = vmatprep.subr.bf16.mxu0 0
        %1451 = vmatpush2.bf16.xpose.msra.mxu0 0
        %1452 = vmatprep.subr.bf16.mxu0 0
        %1453 = vmatpush2.bf16.xpose.msra.mxu0 0
        %1454 = vmatprep.subr.bf16.mxu0 0
        %1455 = vmatpush2.bf16.xpose.msra.mxu0 0
        %1456 = vmatprep.mubr.bf16.mxu0 0
        %1457 = vmatmul.mubr.bf16.gmra.mxu0 %v1422
        %v1458 = vpop.f32.mrf.mxu0
        %v1459 = vadd.f32 0.0, %v1458
        %v1460 = vpop.f32.mrf.mxu0
        %v1461 = vpop.f32.mrf.mxu0
        %v1462 = vadd.f32 0.0, %v1461
        %v1463 = vpop.f32.mrf.mxu0
        %1464 = vdwg.mxu0
        %v1465 = vsel %vm1041, %v1459, -inf
        %1466 = vmax.xlane.f32.xlu0 %v1465
        %v1467 = vpop.xlane.xlu0 %1466
        %v1468 = vsel %vm1041, %v1462, -inf
        %1469 = vmax.xlane.f32.xlu0 %v1468
        %v1470 = vpop.xlane.xlu0 %1469
        %v1471 = vsub.f32 %v1459, %v1467
        %v1472 = vsub.f32 %v1462, %v1470
        %v1473 = vmul.f32 %v1471, 1.442695
        %v1474 = vpow.pop %v1473
        %v1475 = vmul.f32 %v1472, 1.442695
        %v1476 = vpow.pop %v1475
        %v1477 = vsel %vm1041, %v1474, 0.0
        %1478 = vadd.xlane.f32.xlu0 %v1477
        %v1479 = vpop.xlane.xlu0 %1478
        %v1480 = vsel %vm1041, %v1476, 0.0
        %1481 = vadd.xlane.f32.xlu0 %v1480
        %v1482 = vpop.xlane.xlu0 %1481
        %v1483 = vrcp.pop %v1479
        %v1484 = vrcp.pop %v1482
        %v1485 = vpack.c.bf16 %v1476, %v1474
        %v1487 = vsel %vm1041, %v1485, 0
        %1489 = vmatprep.subr.bf16.mxu0 0
        %1490 = vmatpush1.bf16.msra.mxu0 0
        %1491 = vmatprep.subr.bf16.mxu0 0
        %1492 = vmatpush1.bf16.msra.mxu0 0
        %1493 = vmatprep.subr.bf16.mxu0 0
        %1494 = vmatpush1.bf16.msra.mxu0 0
        %1495 = vmatprep.subr.bf16.mxu0 0
        %1496 = vmatpush1.bf16.msra.mxu0 0
        %1497 = vmatprep.subr.bf16.mxu0 0
        %1498 = vmatpush1.bf16.msra.mxu0 0
        %1499 = vmatprep.subr.bf16.mxu0 0
        %1500 = vmatpush1.bf16.msra.mxu0 0
        %1501 = vmatprep.subr.bf16.mxu0 0
        %1502 = vmatpush1.bf16.msra.mxu0 %v1072
        %1503 = vmatprep.subr.bf16.mxu0 0
        %1504 = vmatpush1.bf16.msra.mxu0 %v1071
        %1505 = vmatprep.subr.bf16.mxu0 0
        %1506 = vmatpush2.bf16.msra.mxu0 0
        %1507 = vmatprep.subr.bf16.mxu0 0
        %1508 = vmatpush2.bf16.msra.mxu0 0
        %1509 = vmatprep.subr.bf16.mxu0 0
        %1510 = vmatpush2.bf16.msra.mxu0 0
        %1511 = vmatprep.subr.bf16.mxu0 0
        %1512 = vmatpush2.bf16.msra.mxu0 0
        %1513 = vmatprep.subr.bf16.mxu0 0
        %1514 = vmatpush2.bf16.msra.mxu0 0
        %1515 = vmatprep.subr.bf16.mxu0 0
        %1516 = vmatpush2.bf16.msra.mxu0 0
        %1517 = vmatprep.subr.bf16.mxu0 0
        %1518 = vmatpush2.bf16.msra.mxu0 0
        %1519 = vmatprep.subr.bf16.mxu0 0
        %1520 = vmatpush2.bf16.msra.mxu0 0
        %1521 = vmatprep.mubr.bf16.mxu0 0
        %1522 = vmatmul.mubr.bf16.gmra.mxu0 %v1487
        %v1523 = vpop.f32.mrf.mxu0
        %v1524 = vadd.f32 0.0, %v1523
        %v1525 = vpop.f32.mrf.mxu0
        %v1526 = vpop.f32.mrf.mxu0
        %v1527 = vadd.f32 0.0, %v1526
        %v1528 = vpop.f32.mrf.mxu0
        %1529 = vdwg.mxu0
        %s1530 = scalar_lea.vmem %s9, 3
        %v1531 = vld [vmem:[%s1530] sm:$0x1]
        %v1533 = vlaneseq
        %v1534 = vshrl.u32 %v1533, 7
        %v1535 = vsub.s32 0, %v1534
        %v1536 = vrot.slane %v1531, %v1535
        %v1538 = vmul.f32 %v1483, %v1536
        %v1539 = vmul.f32 %v1484, %v1536
        %v1540 = vmul.f32 %v1524, %v1538
        %v1541 = vmul.f32 %v1527, %v1539
        %v1542 = vadd.f32 %v1408, %v1540
        %v1543 = vadd.f32 %v1409, %v1541
        %1544 = vst.msk [vmem:[#allocation5] sm:$0xff] %vm918, %v1542
        %1545 = vst.msk [vmem:[#allocation5 + $0x8] sm:$0xff] %vm918, %v1543
        %v1546 = vld [vmem:[#allocation5] sm:$0xff]
        %v1547 = vld [vmem:[#allocation5 + $0x8] sm:$0xff]
        %s1548 = scalar_lea.vmem %s8, 4
        %v1549 = vld [vmem:[%s1548] sm:$0x1]
        %v1551 = vlaneseq
        %v1552 = vshrl.u32 %v1551, 7
        %v1553 = vsub.s32 0, %v1552
        %v1554 = vrot.slane %v1549, %v1553
        %v1556 = vmul.f32 %v957, %v1554
        %v1557 = vmul.f32 %v960, %v1554
        %v1558 = vpack.c.bf16 %v1557, %v1556
        %v1560 = vsel %vm918, %v1558, 0
        %1562 = vmatprep.subr.bf16.mxu0 0
        %1563 = vmatpush1.bf16.xpose.msra.mxu0 0
        %1564 = vmatprep.subr.bf16.mxu0 0
        %1565 = vmatpush1.bf16.xpose.msra.mxu0 0
        %1566 = vmatprep.subr.bf16.mxu0 0
        %1567 = vmatpush1.bf16.xpose.msra.mxu0 0
        %1568 = vmatprep.subr.bf16.mxu0 0
        %1569 = vmatpush1.bf16.xpose.msra.mxu0 0
        %1570 = vmatprep.subr.bf16.mxu0 0
        %1571 = vmatpush1.bf16.xpose.msra.mxu0 0
        %1572 = vmatprep.subr.bf16.mxu0 0
        %1573 = vmatpush1.bf16.xpose.msra.mxu0 0
        %1574 = vmatprep.subr.bf16.mxu0 0
        %1575 = vmatpush1.bf16.xpose.msra.mxu0 %v998
        %1576 = vmatprep.subr.bf16.mxu0 0
        %1577 = vmatpush1.bf16.xpose.msra.mxu0 %v995
        %1578 = vmatprep.subr.bf16.mxu0 0
        %1579 = vmatpush2.bf16.xpose.msra.mxu0 0
        %1580 = vmatprep.subr.bf16.mxu0 0
        %1581 = vmatpush2.bf16.xpose.msra.mxu0 0
        %1582 = vmatprep.subr.bf16.mxu0 0
        %1583 = vmatpush2.bf16.xpose.msra.mxu0 0
        %1584 = vmatprep.subr.bf16.mxu0 0
        %1585 = vmatpush2.bf16.xpose.msra.mxu0 0
        %1586 = vmatprep.subr.bf16.mxu0 0
        %1587 = vmatpush2.bf16.xpose.msra.mxu0 0
        %1588 = vmatprep.subr.bf16.mxu0 0
        %1589 = vmatpush2.bf16.xpose.msra.mxu0 0
        %1590 = vmatprep.subr.bf16.mxu0 0
        %1591 = vmatpush2.bf16.xpose.msra.mxu0 0
        %1592 = vmatprep.subr.bf16.mxu0 0
        %1593 = vmatpush2.bf16.xpose.msra.mxu0 0
        %1594 = vmatprep.mubr.bf16.mxu0 0
        %1595 = vmatmul.mubr.bf16.gmra.mxu0 %v1560
        %v1596 = vpop.f32.mrf.mxu0
        %v1597 = vadd.f32 0.0, %v1596
        %v1598 = vpop.f32.mrf.mxu0
        %v1599 = vpop.f32.mrf.mxu0
        %v1600 = vadd.f32 0.0, %v1599
        %v1601 = vpop.f32.mrf.mxu0
        %1602 = vdwg.mxu0
        %v1603 = vsel %vm1041, %v1597, -inf
        %1604 = vmax.xlane.f32.xlu0 %v1603
        %v1605 = vpop.xlane.xlu0 %1604
        %v1606 = vsel %vm1041, %v1600, -inf
        %1607 = vmax.xlane.f32.xlu0 %v1606
        %v1608 = vpop.xlane.xlu0 %1607
        %v1609 = vsub.f32 %v1597, %v1605
        %v1610 = vsub.f32 %v1600, %v1608
        %v1611 = vmul.f32 %v1609, 1.442695
        %v1612 = vpow.pop %v1611
        %v1613 = vmul.f32 %v1610, 1.442695
        %v1614 = vpow.pop %v1613
        %v1615 = vsel %vm1041, %v1612, 0.0
        %1616 = vadd.xlane.f32.xlu0 %v1615
        %v1617 = vpop.xlane.xlu0 %1616
        %v1618 = vsel %vm1041, %v1614, 0.0
        %1619 = vadd.xlane.f32.xlu0 %v1618
        %v1620 = vpop.xlane.xlu0 %1619
        %v1621 = vrcp.pop %v1617
        %v1622 = vrcp.pop %v1620
        %v1623 = vpack.c.bf16 %v1614, %v1612
        %v1625 = vsel %vm1041, %v1623, 0
        %1627 = vmatprep.subr.bf16.mxu0 0
        %1628 = vmatpush1.bf16.msra.mxu0 0
        %1629 = vmatprep.subr.bf16.mxu0 0
        %1630 = vmatpush1.bf16.msra.mxu0 0
        %1631 = vmatprep.subr.bf16.mxu0 0
        %1632 = vmatpush1.bf16.msra.mxu0 0
        %1633 = vmatprep.subr.bf16.mxu0 0
        %1634 = vmatpush1.bf16.msra.mxu0 0
        %1635 = vmatprep.subr.bf16.mxu0 0
        %1636 = vmatpush1.bf16.msra.mxu0 0
        %1637 = vmatprep.subr.bf16.mxu0 0
        %1638 = vmatpush1.bf16.msra.mxu0 0
        %1639 = vmatprep.subr.bf16.mxu0 0
        %1640 = vmatpush1.bf16.msra.mxu0 %v1072
        %1641 = vmatprep.subr.bf16.mxu0 0
        %1642 = vmatpush1.bf16.msra.mxu0 %v1071
        %1643 = vmatprep.subr.bf16.mxu0 0
        %1644 = vmatpush2.bf16.msra.mxu0 0
        %1645 = vmatprep.subr.bf16.mxu0 0
        %1646 = vmatpush2.bf16.msra.mxu0 0
        %1647 = vmatprep.subr.bf16.mxu0 0
        %1648 = vmatpush2.bf16.msra.mxu0 0
        %1649 = vmatprep.subr.bf16.mxu0 0
        %1650 = vmatpush2.bf16.msra.mxu0 0
        %1651 = vmatprep.subr.bf16.mxu0 0
        %1652 = vmatpush2.bf16.msra.mxu0 0
        %1653 = vmatprep.subr.bf16.mxu0 0
        %1654 = vmatpush2.bf16.msra.mxu0 0
        %1655 = vmatprep.subr.bf16.mxu0 0
        %1656 = vmatpush2.bf16.msra.mxu0 0
        %1657 = vmatprep.subr.bf16.mxu0 0
        %1658 = vmatpush2.bf16.msra.mxu0 0
        %1659 = vmatprep.mubr.bf16.mxu0 0
        %1660 = vmatmul.mubr.bf16.gmra.mxu0 %v1625
        %v1661 = vpop.f32.mrf.mxu0
        %v1662 = vadd.f32 0.0, %v1661
        %v1663 = vpop.f32.mrf.mxu0
        %v1664 = vpop.f32.mrf.mxu0
        %v1665 = vadd.f32 0.0, %v1664
        %v1666 = vpop.f32.mrf.mxu0
        %1667 = vdwg.mxu0
        %s1668 = scalar_lea.vmem %s9, 4
        %v1669 = vld [vmem:[%s1668] sm:$0x1]
        %v1671 = vlaneseq
        %v1672 = vshrl.u32 %v1671, 7
        %v1673 = vsub.s32 0, %v1672
        %v1674 = vrot.slane %v1669, %v1673
        %v1676 = vmul.f32 %v1621, %v1674
        %v1677 = vmul.f32 %v1622, %v1674
        %v1678 = vmul.f32 %v1662, %v1676
        %v1679 = vmul.f32 %v1665, %v1677
        %v1680 = vadd.f32 %v1546, %v1678
        %v1681 = vadd.f32 %v1547, %v1679
        %1682 = vst.msk [vmem:[#allocation5] sm:$0xff] %vm918, %v1680
        %1683 = vst.msk [vmem:[#allocation5 + $0x8] sm:$0xff] %vm918, %v1681
        %v1684 = vld [vmem:[#allocation5] sm:$0xff]
        %v1685 = vld [vmem:[#allocation5 + $0x8] sm:$0xff]
        %s1686 = scalar_lea.vmem %s8, 5
        %v1687 = vld [vmem:[%s1686] sm:$0x1]
        %v1689 = vlaneseq
        %v1690 = vshrl.u32 %v1689, 7
        %v1691 = vsub.s32 0, %v1690
        %v1692 = vrot.slane %v1687, %v1691
        %v1694 = vmul.f32 %v957, %v1692
        %v1695 = vmul.f32 %v960, %v1692
        %v1696 = vpack.c.bf16 %v1695, %v1694
        %v1698 = vsel %vm918, %v1696, 0
        %1700 = vmatprep.subr.bf16.mxu0 0
        %1701 = vmatpush1.bf16.xpose.msra.mxu0 0
        %1702 = vmatprep.subr.bf16.mxu0 0
        %1703 = vmatpush1.bf16.xpose.msra.mxu0 0
        %1704 = vmatprep.subr.bf16.mxu0 0
        %1705 = vmatpush1.bf16.xpose.msra.mxu0 0
        %1706 = vmatprep.subr.bf16.mxu0 0
        %1707 = vmatpush1.bf16.xpose.msra.mxu0 0
        %1708 = vmatprep.subr.bf16.mxu0 0
        %1709 = vmatpush1.bf16.xpose.msra.mxu0 0
        %1710 = vmatprep.subr.bf16.mxu0 0
        %1711 = vmatpush1.bf16.xpose.msra.mxu0 0
        %1712 = vmatprep.subr.bf16.mxu0 0
        %1713 = vmatpush1.bf16.xpose.msra.mxu0 %v998
        %1714 = vmatprep.subr.bf16.mxu0 0
        %1715 = vmatpush1.bf16.xpose.msra.mxu0 %v995
        %1716 = vmatprep.subr.bf16.mxu0 0
        %1717 = vmatpush2.bf16.xpose.msra.mxu0 0
        %1718 = vmatprep.subr.bf16.mxu0 0
        %1719 = vmatpush2.bf16.xpose.msra.mxu0 0
        %1720 = vmatprep.subr.bf16.mxu0 0
        %1721 = vmatpush2.bf16.xpose.msra.mxu0 0
        %1722 = vmatprep.subr.bf16.mxu0 0
        %1723 = vmatpush2.bf16.xpose.msra.mxu0 0
        %1724 = vmatprep.subr.bf16.mxu0 0
        %1725 = vmatpush2.bf16.xpose.msra.mxu0 0
        %1726 = vmatprep.subr.bf16.mxu0 0
        %1727 = vmatpush2.bf16.xpose.msra.mxu0 0
        %1728 = vmatprep.subr.bf16.mxu0 0
        %1729 = vmatpush2.bf16.xpose.msra.mxu0 0
        %1730 = vmatprep.subr.bf16.mxu0 0
        %1731 = vmatpush2.bf16.xpose.msra.mxu0 0
        %1732 = vmatprep.mubr.bf16.mxu0 0
        %1733 = vmatmul.mubr.bf16.gmra.mxu0 %v1698
        %v1734 = vpop.f32.mrf.mxu0
        %v1735 = vadd.f32 0.0, %v1734
        %v1736 = vpop.f32.mrf.mxu0
        %v1737 = vpop.f32.mrf.mxu0
        %v1738 = vadd.f32 0.0, %v1737
        %v1739 = vpop.f32.mrf.mxu0
        %1740 = vdwg.mxu0
        %v1741 = vsel %vm1041, %v1735, -inf
        %1742 = vmax.xlane.f32.xlu0 %v1741
        %v1743 = vpop.xlane.xlu0 %1742
        %v1744 = vsel %vm1041, %v1738, -inf
        %1745 = vmax.xlane.f32.xlu0 %v1744
        %v1746 = vpop.xlane.xlu0 %1745
        %v1747 = vsub.f32 %v1735, %v1743
        %v1748 = vsub.f32 %v1738, %v1746
        %v1749 = vmul.f32 %v1747, 1.442695
        %v1750 = vpow.pop %v1749
        %v1751 = vmul.f32 %v1748, 1.442695
        %v1752 = vpow.pop %v1751
        %v1753 = vsel %vm1041, %v1750, 0.0
        %1754 = vadd.xlane.f32.xlu0 %v1753
        %v1755 = vpop.xlane.xlu0 %1754
        %v1756 = vsel %vm1041, %v1752, 0.0
        %1757 = vadd.xlane.f32.xlu0 %v1756
        %v1758 = vpop.xlane.xlu0 %1757
        %v1759 = vrcp.pop %v1755
        %v1760 = vrcp.pop %v1758
        %v1761 = vpack.c.bf16 %v1752, %v1750
        %v1763 = vsel %vm1041, %v1761, 0
        %1765 = vmatprep.subr.bf16.mxu0 0
        %1766 = vmatpush1.bf16.msra.mxu0 0
        %1767 = vmatprep.subr.bf16.mxu0 0
        %1768 = vmatpush1.bf16.msra.mxu0 0
        %1769 = vmatprep.subr.bf16.mxu0 0
        %1770 = vmatpush1.bf16.msra.mxu0 0
        %1771 = vmatprep.subr.bf16.mxu0 0
        %1772 = vmatpush1.bf16.msra.mxu0 0
        %1773 = vmatprep.subr.bf16.mxu0 0
        %1774 = vmatpush1.bf16.msra.mxu0 0
        %1775 = vmatprep.subr.bf16.mxu0 0
        %1776 = vmatpush1.bf16.msra.mxu0 0
        %1777 = vmatprep.subr.bf16.mxu0 0
        %1778 = vmatpush1.bf16.msra.mxu0 %v1072
        %1779 = vmatprep.subr.bf16.mxu0 0
        %1780 = vmatpush1.bf16.msra.mxu0 %v1071
        %1781 = vmatprep.subr.bf16.mxu0 0
        %1782 = vmatpush2.bf16.msra.mxu0 0
        %1783 = vmatprep.subr.bf16.mxu0 0
        %1784 = vmatpush2.bf16.msra.mxu0 0
        %1785 = vmatprep.subr.bf16.mxu0 0
        %1786 = vmatpush2.bf16.msra.mxu0 0
        %1787 = vmatprep.subr.bf16.mxu0 0
        %1788 = vmatpush2.bf16.msra.mxu0 0
        %1789 = vmatprep.subr.bf16.mxu0 0
        %1790 = vmatpush2.bf16.msra.mxu0 0
        %1791 = vmatprep.subr.bf16.mxu0 0
        %1792 = vmatpush2.bf16.msra.mxu0 0
        %1793 = vmatprep.subr.bf16.mxu0 0
        %1794 = vmatpush2.bf16.msra.mxu0 0
        %1795 = vmatprep.subr.bf16.mxu0 0
        %1796 = vmatpush2.bf16.msra.mxu0 0
        %1797 = vmatprep.mubr.bf16.mxu0 0
        %1798 = vmatmul.mubr.bf16.gmra.mxu0 %v1763
        %v1799 = vpop.f32.mrf.mxu0
        %v1800 = vadd.f32 0.0, %v1799
        %v1801 = vpop.f32.mrf.mxu0
        %v1802 = vpop.f32.mrf.mxu0
        %v1803 = vadd.f32 0.0, %v1802
        %v1804 = vpop.f32.mrf.mxu0
        %1805 = vdwg.mxu0
        %s1806 = scalar_lea.vmem %s9, 5
        %v1807 = vld [vmem:[%s1806] sm:$0x1]
        %v1809 = vlaneseq
        %v1810 = vshrl.u32 %v1809, 7
        %v1811 = vsub.s32 0, %v1810
        %v1812 = vrot.slane %v1807, %v1811
        %v1814 = vmul.f32 %v1759, %v1812
        %v1815 = vmul.f32 %v1760, %v1812
        %v1816 = vmul.f32 %v1800, %v1814
        %v1817 = vmul.f32 %v1803, %v1815
        %v1818 = vadd.f32 %v1684, %v1816
        %v1819 = vadd.f32 %v1685, %v1817
        %1820 = vst.msk [vmem:[#allocation5] sm:$0xff] %vm918, %v1818
        %1821 = vst.msk [vmem:[#allocation5 + $0x8] sm:$0xff] %vm918, %v1819
        %v1822 = vld [vmem:[#allocation5] sm:$0xff]
        %v1823 = vld [vmem:[#allocation5 + $0x8] sm:$0xff]
        %s1824 = scalar_lea.vmem %s8, 6
        %v1825 = vld [vmem:[%s1824] sm:$0x1]
        %v1827 = vlaneseq
        %v1828 = vshrl.u32 %v1827, 7
        %v1829 = vsub.s32 0, %v1828
        %v1830 = vrot.slane %v1825, %v1829
        %v1832 = vmul.f32 %v957, %v1830
        %v1833 = vmul.f32 %v960, %v1830
        %v1834 = vpack.c.bf16 %v1833, %v1832
        %v1836 = vsel %vm918, %v1834, 0
        %1838 = vmatprep.subr.bf16.mxu0 0
        %1839 = vmatpush1.bf16.xpose.msra.mxu0 0
        %1840 = vmatprep.subr.bf16.mxu0 0
        %1841 = vmatpush1.bf16.xpose.msra.mxu0 0
        %1842 = vmatprep.subr.bf16.mxu0 0
        %1843 = vmatpush1.bf16.xpose.msra.mxu0 0
        %1844 = vmatprep.subr.bf16.mxu0 0
        %1845 = vmatpush1.bf16.xpose.msra.mxu0 0
        %1846 = vmatprep.subr.bf16.mxu0 0
        %1847 = vmatpush1.bf16.xpose.msra.mxu0 0
        %1848 = vmatprep.subr.bf16.mxu0 0
        %1849 = vmatpush1.bf16.xpose.msra.mxu0 0
        %1850 = vmatprep.subr.bf16.mxu0 0
        %1851 = vmatpush1.bf16.xpose.msra.mxu0 %v998
        %1852 = vmatprep.subr.bf16.mxu0 0
        %1853 = vmatpush1.bf16.xpose.msra.mxu0 %v995
        %1854 = vmatprep.subr.bf16.mxu0 0
        %1855 = vmatpush2.bf16.xpose.msra.mxu0 0
        %1856 = vmatprep.subr.bf16.mxu0 0
        %1857 = vmatpush2.bf16.xpose.msra.mxu0 0
        %1858 = vmatprep.subr.bf16.mxu0 0
        %1859 = vmatpush2.bf16.xpose.msra.mxu0 0
        %1860 = vmatprep.subr.bf16.mxu0 0
        %1861 = vmatpush2.bf16.xpose.msra.mxu0 0
        %1862 = vmatprep.subr.bf16.mxu0 0
        %1863 = vmatpush2.bf16.xpose.msra.mxu0 0
        %1864 = vmatprep.subr.bf16.mxu0 0
        %1865 = vmatpush2.bf16.xpose.msra.mxu0 0
        %1866 = vmatprep.subr.bf16.mxu0 0
        %1867 = vmatpush2.bf16.xpose.msra.mxu0 0
        %1868 = vmatprep.subr.bf16.mxu0 0
        %1869 = vmatpush2.bf16.xpose.msra.mxu0 0
        %1870 = vmatprep.mubr.bf16.mxu0 0
        %1871 = vmatmul.mubr.bf16.gmra.mxu0 %v1836
        %v1872 = vpop.f32.mrf.mxu0
        %v1873 = vadd.f32 0.0, %v1872
        %v1874 = vpop.f32.mrf.mxu0
        %v1875 = vpop.f32.mrf.mxu0
        %v1876 = vadd.f32 0.0, %v1875
        %v1877 = vpop.f32.mrf.mxu0
        %1878 = vdwg.mxu0
        %v1879 = vsel %vm1041, %v1873, -inf
        %1880 = vmax.xlane.f32.xlu0 %v1879
        %v1881 = vpop.xlane.xlu0 %1880
        %v1882 = vsel %vm1041, %v1876, -inf
        %1883 = vmax.xlane.f32.xlu0 %v1882
        %v1884 = vpop.xlane.xlu0 %1883
        %v1885 = vsub.f32 %v1873, %v1881
        %v1886 = vsub.f32 %v1876, %v1884
        %v1887 = vmul.f32 %v1885, 1.442695
        %v1888 = vpow.pop %v1887
        %v1889 = vmul.f32 %v1886, 1.442695
        %v1890 = vpow.pop %v1889
        %v1891 = vsel %vm1041, %v1888, 0.0
        %1892 = vadd.xlane.f32.xlu0 %v1891
        %v1893 = vpop.xlane.xlu0 %1892
        %v1894 = vsel %vm1041, %v1890, 0.0
        %1895 = vadd.xlane.f32.xlu0 %v1894
        %v1896 = vpop.xlane.xlu0 %1895
        %v1897 = vrcp.pop %v1893
        %v1898 = vrcp.pop %v1896
        %v1899 = vpack.c.bf16 %v1890, %v1888
        %v1901 = vsel %vm1041, %v1899, 0
        %1903 = vmatprep.subr.bf16.mxu0 0
        %1904 = vmatpush1.bf16.msra.mxu0 0
        %1905 = vmatprep.subr.bf16.mxu0 0
        %1906 = vmatpush1.bf16.msra.mxu0 0
        %1907 = vmatprep.subr.bf16.mxu0 0
        %1908 = vmatpush1.bf16.msra.mxu0 0
        %1909 = vmatprep.subr.bf16.mxu0 0
        %1910 = vmatpush1.bf16.msra.mxu0 0
        %1911 = vmatprep.subr.bf16.mxu0 0
        %1912 = vmatpush1.bf16.msra.mxu0 0
        %1913 = vmatprep.subr.bf16.mxu0 0
        %1914 = vmatpush1.bf16.msra.mxu0 0
        %1915 = vmatprep.subr.bf16.mxu0 0
        %1916 = vmatpush1.bf16.msra.mxu0 %v1072
        %1917 = vmatprep.subr.bf16.mxu0 0
        %1918 = vmatpush1.bf16.msra.mxu0 %v1071
        %1919 = vmatprep.subr.bf16.mxu0 0
        %1920 = vmatpush2.bf16.msra.mxu0 0
        %1921 = vmatprep.subr.bf16.mxu0 0
        %1922 = vmatpush2.bf16.msra.mxu0 0
        %1923 = vmatprep.subr.bf16.mxu0 0
        %1924 = vmatpush2.bf16.msra.mxu0 0
        %1925 = vmatprep.subr.bf16.mxu0 0
        %1926 = vmatpush2.bf16.msra.mxu0 0
        %1927 = vmatprep.subr.bf16.mxu0 0
        %1928 = vmatpush2.bf16.msra.mxu0 0
        %1929 = vmatprep.subr.bf16.mxu0 0
        %1930 = vmatpush2.bf16.msra.mxu0 0
        %1931 = vmatprep.subr.bf16.mxu0 0
        %1932 = vmatpush2.bf16.msra.mxu0 0
        %1933 = vmatprep.subr.bf16.mxu0 0
        %1934 = vmatpush2.bf16.msra.mxu0 0
        %1935 = vmatprep.mubr.bf16.mxu0 0
        %1936 = vmatmul.mubr.bf16.gmra.mxu0 %v1901
        %v1937 = vpop.f32.mrf.mxu0
        %v1938 = vadd.f32 0.0, %v1937
        %v1939 = vpop.f32.mrf.mxu0
        %v1940 = vpop.f32.mrf.mxu0
        %v1941 = vadd.f32 0.0, %v1940
        %v1942 = vpop.f32.mrf.mxu0
        %1943 = vdwg.mxu0
        %s1944 = scalar_lea.vmem %s9, 6
        %v1945 = vld [vmem:[%s1944] sm:$0x1]
        %v1947 = vlaneseq
        %v1948 = vshrl.u32 %v1947, 7
        %v1949 = vsub.s32 0, %v1948
        %v1950 = vrot.slane %v1945, %v1949
        %v1952 = vmul.f32 %v1897, %v1950
        %v1953 = vmul.f32 %v1898, %v1950
        %v1954 = vmul.f32 %v1938, %v1952
        %v1955 = vmul.f32 %v1941, %v1953
        %v1956 = vadd.f32 %v1822, %v1954
        %v1957 = vadd.f32 %v1823, %v1955
        %1958 = vst.msk [vmem:[#allocation5] sm:$0xff] %vm918, %v1956
        %1959 = vst.msk [vmem:[#allocation5 + $0x8] sm:$0xff] %vm918, %v1957
        %v1960 = vld [vmem:[#allocation5] sm:$0xff]
        %v1961 = vld [vmem:[#allocation5 + $0x8] sm:$0xff]
        %s1962 = scalar_lea.vmem %s8, 7
        %v1963 = vld [vmem:[%s1962] sm:$0x1]
        %v1965 = vlaneseq
        %v1966 = vshrl.u32 %v1965, 7
        %v1967 = vsub.s32 0, %v1966
        %v1968 = vrot.slane %v1963, %v1967
        %v1970 = vmul.f32 %v957, %v1968
        %v1971 = vmul.f32 %v960, %v1968
        %v1972 = vpack.c.bf16 %v1971, %v1970
        %v1974 = vsel %vm918, %v1972, 0
        %1976 = vmatprep.subr.bf16.mxu0 0
        %1977 = vmatpush1.bf16.xpose.msra.mxu0 0
        %1978 = vmatprep.subr.bf16.mxu0 0
        %1979 = vmatpush1.bf16.xpose.msra.mxu0 0
        %1980 = vmatprep.subr.bf16.mxu0 0
        %1981 = vmatpush1.bf16.xpose.msra.mxu0 0
        %1982 = vmatprep.subr.bf16.mxu0 0
        %1983 = vmatpush1.bf16.xpose.msra.mxu0 0
        %1984 = vmatprep.subr.bf16.mxu0 0
        %1985 = vmatpush1.bf16.xpose.msra.mxu0 0
        %1986 = vmatprep.subr.bf16.mxu0 0
        %1987 = vmatpush1.bf16.xpose.msra.mxu0 0
        %1988 = vmatprep.subr.bf16.mxu0 0
        %1989 = vmatpush1.bf16.xpose.msra.mxu0 %v998
        %1990 = vmatprep.subr.bf16.mxu0 0
        %1991 = vmatpush1.bf16.xpose.msra.mxu0 %v995
        %1992 = vmatprep.subr.bf16.mxu0 0
        %1993 = vmatpush2.bf16.xpose.msra.mxu0 0
        %1994 = vmatprep.subr.bf16.mxu0 0
        %1995 = vmatpush2.bf16.xpose.msra.mxu0 0
        %1996 = vmatprep.subr.bf16.mxu0 0
        %1997 = vmatpush2.bf16.xpose.msra.mxu0 0
        %1998 = vmatprep.subr.bf16.mxu0 0
        %1999 = vmatpush2.bf16.xpose.msra.mxu0 0
        %2000 = vmatprep.subr.bf16.mxu0 0
        %2001 = vmatpush2.bf16.xpose.msra.mxu0 0
        %2002 = vmatprep.subr.bf16.mxu0 0
        %2003 = vmatpush2.bf16.xpose.msra.mxu0 0
        %2004 = vmatprep.subr.bf16.mxu0 0
        %2005 = vmatpush2.bf16.xpose.msra.mxu0 0
        %2006 = vmatprep.subr.bf16.mxu0 0
        %2007 = vmatpush2.bf16.xpose.msra.mxu0 0
        %2008 = vmatprep.mubr.bf16.mxu0 0
        %2009 = vmatmul.mubr.bf16.gmra.mxu0 %v1974
        %v2010 = vpop.f32.mrf.mxu0
        %v2011 = vadd.f32 0.0, %v2010
        %v2012 = vpop.f32.mrf.mxu0
        %v2013 = vpop.f32.mrf.mxu0
        %v2014 = vadd.f32 0.0, %v2013
        %v2015 = vpop.f32.mrf.mxu0
        %2016 = vdwg.mxu0
        %v2017 = vsel %vm1041, %v2011, -inf
        %2018 = vmax.xlane.f32.xlu0 %v2017
        %v2019 = vpop.xlane.xlu0 %2018
        %v2020 = vsel %vm1041, %v2014, -inf
        %2021 = vmax.xlane.f32.xlu0 %v2020
        %v2022 = vpop.xlane.xlu0 %2021
        %v2023 = vsub.f32 %v2011, %v2019
        %v2024 = vsub.f32 %v2014, %v2022
        %v2025 = vmul.f32 %v2023, 1.442695
        %v2026 = vpow.pop %v2025
        %v2027 = vmul.f32 %v2024, 1.442695
        %v2028 = vpow.pop %v2027
        %v2029 = vsel %vm1041, %v2026, 0.0
        %2030 = vadd.xlane.f32.xlu0 %v2029
        %v2031 = vpop.xlane.xlu0 %2030
        %v2032 = vsel %vm1041, %v2028, 0.0
        %2033 = vadd.xlane.f32.xlu0 %v2032
        %v2034 = vpop.xlane.xlu0 %2033
        %v2035 = vrcp.pop %v2031
        %v2036 = vrcp.pop %v2034
        %v2037 = vpack.c.bf16 %v2028, %v2026
        %v2039 = vsel %vm1041, %v2037, 0
        %2041 = vmatprep.subr.bf16.mxu0 0
        %2042 = vmatpush1.bf16.msra.mxu0 0
        %2043 = vmatprep.subr.bf16.mxu0 0
        %2044 = vmatpush1.bf16.msra.mxu0 0
        %2045 = vmatprep.subr.bf16.mxu0 0
        %2046 = vmatpush1.bf16.msra.mxu0 0
        %2047 = vmatprep.subr.bf16.mxu0 0
        %2048 = vmatpush1.bf16.msra.mxu0 0
        %2049 = vmatprep.subr.bf16.mxu0 0
        %2050 = vmatpush1.bf16.msra.mxu0 0
        %2051 = vmatprep.subr.bf16.mxu0 0
        %2052 = vmatpush1.bf16.msra.mxu0 0
        %2053 = vmatprep.subr.bf16.mxu0 0
        %2054 = vmatpush1.bf16.msra.mxu0 %v1072
        %2055 = vmatprep.subr.bf16.mxu0 0
        %2056 = vmatpush1.bf16.msra.mxu0 %v1071
        %2057 = vmatprep.subr.bf16.mxu0 0
        %2058 = vmatpush2.bf16.msra.mxu0 0
        %2059 = vmatprep.subr.bf16.mxu0 0
        %2060 = vmatpush2.bf16.msra.mxu0 0
        %2061 = vmatprep.subr.bf16.mxu0 0
        %2062 = vmatpush2.bf16.msra.mxu0 0
        %2063 = vmatprep.subr.bf16.mxu0 0
        %2064 = vmatpush2.bf16.msra.mxu0 0
        %2065 = vmatprep.subr.bf16.mxu0 0
        %2066 = vmatpush2.bf16.msra.mxu0 0
        %2067 = vmatprep.subr.bf16.mxu0 0
        %2068 = vmatpush2.bf16.msra.mxu0 0
        %2069 = vmatprep.subr.bf16.mxu0 0
        %2070 = vmatpush2.bf16.msra.mxu0 0
        %2071 = vmatprep.subr.bf16.mxu0 0
        %2072 = vmatpush2.bf16.msra.mxu0 0
        %2073 = vmatprep.mubr.bf16.mxu0 0
        %2074 = vmatmul.mubr.bf16.gmra.mxu0 %v2039
        %v2075 = vpop.f32.mrf.mxu0
        %v2076 = vadd.f32 0.0, %v2075
        %v2077 = vpop.f32.mrf.mxu0
        %v2078 = vpop.f32.mrf.mxu0
        %v2079 = vadd.f32 0.0, %v2078
        %v2080 = vpop.f32.mrf.mxu0
        %2081 = vdwg.mxu0
        %s2082 = scalar_lea.vmem %s9, 7
        %v2083 = vld [vmem:[%s2082] sm:$0x1]
        %v2085 = vlaneseq
        %v2086 = vshrl.u32 %v2085, 7
        %v2087 = vsub.s32 0, %v2086
        %v2088 = vrot.slane %v2083, %v2087
        %v2090 = vmul.f32 %v2035, %v2088
        %v2091 = vmul.f32 %v2036, %v2088
        %v2092 = vmul.f32 %v2076, %v2090
        %v2093 = vmul.f32 %v2079, %v2091
        %v2094 = vadd.f32 %v1960, %v2092
        %v2095 = vadd.f32 %v1961, %v2093
        %2096 = vst.msk [vmem:[#allocation5] sm:$0xff] %vm918, %v2094
        %2097 = vst.msk [vmem:[#allocation5 + $0x8] sm:$0xff] %vm918, %v2095
        %v2098 = vld [vmem:[#allocation5] sm:$0xff]
        %v2099 = vld [vmem:[#allocation5 + $0x8] sm:$0xff]
        %v2100 = vld [vmem:[%s10] sm:$0x1]
        %v2101 = vld [vmem:[#allocation4] sm:$0x1]
        %v2102 = vmul.f32 %v2100, %v2101
        %v2104 = vlaneseq
        %v2105 = vshrl.u32 %v2104, 7
        %v2106 = vsub.s32 0, %v2105
        %v2107 = vrot.slane %v2102, %v2106
        %v2109 = vadd.f32 %v2098, %v2107
        %v2110 = vadd.f32 %v2099, %v2107
        %v2111 = vpack.c.bf16 %v2110, %v2109
        %v2112 = vld [vmem:[#allocation20] sm:$0xf]
        %v2113 = vld [vmem:[#allocation20 + $0x4] sm:$0xf]
        %v2114 = vld [vmem:[#allocation20 + $0x8] sm:$0xf]
        %v2115 = vld [vmem:[#allocation20 + $0xc] sm:$0xf]
        %v2116 = vld [vmem:[#allocation20 + $0x10] sm:$0xf]
        %v2117 = vld [vmem:[#allocation20 + $0x14] sm:$0xf]
        %v2118 = vld [vmem:[#allocation20 + $0x18] sm:$0xf]
        %v2119 = vld [vmem:[#allocation20 + $0x1c] sm:$0xf]
        %v2120 = vld [vmem:[%s12] sm:$0x1]
        %v2122 = vlaneseq
        %v2123 = vshrl.u32 %v2122, 7
        %v2124 = vsub.s32 0, %v2123
        %v2125 = vrot.slane %v2120, %v2124
        %v2135 = vunpack.c.l.b16 %v2112
        %v2136 = vunpack.c.l.b16 %v2113
        %v2137 = vunpack.c.l.b16 %v2114
        %v2138 = vunpack.c.l.b16 %v2115
        %v2139 = vunpack.c.l.b16 %v2116
        %v2140 = vunpack.c.l.b16 %v2117
        %v2141 = vunpack.c.l.b16 %v2118
        %v2142 = vunpack.c.l.b16 %v2119
        %v2143 = vpack.c.b16 %v2136, %v2135
        %v2144 = vpack.c.b16 %v2138, %v2137
        %v2145 = vpack.c.b16 %v2140, %v2139
        %v2146 = vpack.c.b16 %v2142, %v2141
        %v2152 = vsel %vm918, %v2111, 0
        %2154 = vmatprep.subr.bf16.mxu0 0
        %2155 = vmatpush1.bf16.msra.mxu0 0
        %2156 = vmatprep.subr.bf16.mxu0 0
        %2157 = vmatpush1.bf16.msra.mxu0 0
        %2158 = vmatprep.subr.bf16.mxu0 0
        %2159 = vmatpush1.bf16.msra.mxu0 0
        %2160 = vmatprep.subr.bf16.mxu0 0
        %2161 = vmatpush1.bf16.msra.mxu0 0
        %2162 = vmatprep.subr.bf16.mxu0 0
        %2163 = vmatpush1.bf16.msra.mxu0 %v2146
        %2164 = vmatprep.subr.bf16.mxu0 0
        %2165 = vmatpush1.bf16.msra.mxu0 %v2145
        %2166 = vmatprep.subr.bf16.mxu0 0
        %2167 = vmatpush1.bf16.msra.mxu0 %v2144
        %2168 = vmatprep.subr.bf16.mxu0 0
        %2169 = vmatpush1.bf16.msra.mxu0 %v2143
        %2170 = vmatprep.subr.bf16.mxu0 0
        %2171 = vmatpush2.bf16.msra.mxu0 0
        %2172 = vmatprep.subr.bf16.mxu0 0
        %2173 = vmatpush2.bf16.msra.mxu0 0
        %2174 = vmatprep.subr.bf16.mxu0 0
        %2175 = vmatpush2.bf16.msra.mxu0 0
        %2176 = vmatprep.subr.bf16.mxu0 0
        %2177 = vmatpush2.bf16.msra.mxu0 0
        %2178 = vmatprep.subr.bf16.mxu0 0
        %2179 = vmatpush2.bf16.msra.mxu0 0
        %2180 = vmatprep.subr.bf16.mxu0 0
        %2181 = vmatpush2.bf16.msra.mxu0 0
        %2182 = vmatprep.subr.bf16.mxu0 0
        %2183 = vmatpush2.bf16.msra.mxu0 0
        %2184 = vmatprep.subr.bf16.mxu0 0
        %2185 = vmatpush2.bf16.msra.mxu0 0
        %2186 = vmatprep.mubr.bf16.mxu0 0
        %2187 = vmatmul.mubr.bf16.gmra.mxu0 %v2152
        %v2188 = vpop.f32.mrf.mxu0
        %v2189 = vadd.f32 %v2125, %v2188
        %v2190 = vpop.f32.mrf.mxu0
        %v2191 = vpop.f32.mrf.mxu0
        %v2192 = vadd.f32 %v2125, %v2191
        %v2193 = vpop.f32.mrf.mxu0
        %2194 = vdwg.mxu0
        %2195 = vst.msk [vmem:[%s611] sm:$0xff] %vm918, %v2189
        %2196 = vst.msk [vmem:[%s611 + $0x8] sm:$0xff] %vm918, %v2192
        %s2197 = sand.u32 %s343, 1
        %s2198 = scalar_lea.sflag [#allocation8], %s2197
        %s2199 = sand.u32 %s343, 1
        %s2200 = smul.addr %s2199, 16
        %s2201 = scalar_lea.vmem [#allocation21], %s2200
        // Predicated region
        $region113: #{tpu_custom_call.1} parent=71 // pred_check
          %p2202 = pneg %p353
        $region114: #{tpu_custom_call.1} parent=71 // pred_check_branch
          %2204 = sbr.rel (%p2202) target = $region116
        $region115: #{tpu_custom_call.1} parent=71 // pred_region
          %s2205 = smul.u32 2, %s41
          %s2207 = ssub.s32 256, 256
          %2208 = vsyncadd %s2198, %s2207
          %s2209 = smul.addr %s40, 4
          %s2210 = sadd.s32 %s2205, %s2209
          %s2211 = smul.addr %s2210, 128
          %s2212 = scalar_lea.hbm %s13, %s2211
          %s2213 = sshll.u32 %s2201, 4
          %s2214 = int_to_ptr.vmem [resolvable:$true] %s2213
          %2219 = dma.vmem_to_hbm [thread:$0]  %s2214, 256, %s2212, %s2198, 128, 128, 8
        $region116: #{tpu_custom_call.1} parent=71 // pred_fallthru
          _
      $region72: #{tpu_custom_call.1} parent=5 // pred_fallthru
        _
      %p2220 = scmp.le.s32.totalorder 2, %s31
      // Predicated region
      $region117: #{tpu_custom_call.1} parent=5 // pred_check
        %p2221 = pneg %p2220
      $region118: #{tpu_custom_call.1} parent=5 // pred_check_branch
        %2223 = sbr.rel (%p2221) target = $region120
      $region119: #{tpu_custom_call.1} parent=5 // pred_region
        %s2224 = ssub.s32 %s31, 2
        // Predicated region
        $region121: #{tpu_custom_call.1} parent=119 // pred_check
          %p2225 = pneg %p359
        $region122: #{tpu_custom_call.1} parent=119 // pred_check_branch
          %2227 = sbr.rel (%p2225) target = $region124
        $region123: #{tpu_custom_call.1} parent=119 // pred_region
          %s2228 = sand.u32 %s344, 1
          %s2229 = scalar_lea.sflag [#allocation8], %s2228
          %s2230 = sand.u32 %s344, 1
          %s2231 = smul.addr %s2230, 16
          %s2232 = scalar_lea.vmem [#allocation21], %s2231
          %2233 = dma.done %s2229, 256
        $region124: #{tpu_custom_call.1} parent=119 // pred_fallthru
          _
      $region120: #{tpu_custom_call.1} parent=5 // pred_fallthru
        _
    $region6: #{tpu_custom_call.1} parent=1 // loop_footer
      %s35 = sadd.s32 1, %s31
    $region7: #{tpu_custom_call.1} parent=1 // loop_footer_branch
      %30 = sbr.rel target = $region3
    $region8: #{tpu_custom_call.1} parent=1 // loop_exit
      _
    %2234 = vsyncpa [#allocation7], 1
    %s2235 = scalar_lea.sflag [#allocation7], 1
    %2236 = vsyncpa %s2235, 1
    %2237 = vsyncpa [#allocation10], 1
    %s2238 = scalar_lea.sflag [#allocation10], 1
    %2239 = vsyncpa %s2238, 1
    %2240 = vsyncpa [#allocation13], 1
    %2241 = vsyncpa [#allocation16], 1
    %2242 = vsyncpa [#allocation19], 1
    %2243 = vsyncpa [#allocation8], 1
    %s2244 = scalar_lea.sflag [#allocation8], 1
    %2245 = vsyncpa %s2244, 1

</llo_original>
